<compile_context>
chip_gen: v7x
topology: tpu7x:2x2x1
jax: 0.10.0
libtpu: 0.0.40
codegen_flags: <defaults>
</compile_context>

<pallas_src>
import functools

import jax
import jax.numpy as jnp
from jax.experimental import pallas as pl
from jax.experimental.pallas import tpu as pltpu  # noqa: F401  (TPU backend)

# --------------- model hyper-parameters (small, consistent with the module) ---
INPUT_SIZE = 28
HIDDEN_SIZE = 32          # scaled down from 256 for a small, fast self-test
NUM_LAYERS = 2
NUM_CLASSES = 10
BATCH = 2
SEQ = 8


# ------------------------------ fused Pallas kernel ----------------------------
def _blstm_fused_kernel(
    x_ref,        # (T*Bp, D0)   time-major flattened input
    wih0_ref,     # (D0, 8H)     layer-0 [fwd | bwd] input weights, gates (i,f,o,g)
    whh0f_ref,    # (H, 4H)      layer-0 fwd recurrent weights
    whh0b_ref,    # (H, 4H)      layer-0 bwd recurrent weights
    b0_ref,       # (1, 8H)      layer-0 [fwd | bwd] combined bias (b_ih + b_hh)
    wih1_ref,     # (2H, 8H)     layer-1 [fwd | bwd] input weights
    whh1f_ref,    # (H, 4H)
    whh1b_ref,    # (H, 4H)
    b1_ref,       # (1, 8H)
    wfc_ref,      # (2H, C)
    bfc_ref,      # (1, C)
    out_ref,      # (Bp, C)
    *, seq_len, batch, hidden,
):
    T, Bp, H = seq_len, batch, hidden
    G = 4 * H

    def cell(gates, c):
        # gate order (i, f, o, g): one contiguous sigmoid slab + one tanh slab.
        sig = jax.nn.sigmoid(gates[:, :3 * H])
        i, f, o = sig[:, :H], sig[:, H:2 * H], sig[:, 2 * H:]
        g = jnp.tanh(gates[:, 3 * H:])
        c_new = f * c + i * g
        h_new = o * jnp.tanh(c_new)
        return h_new, c_new

    def run_direction(gx, whh, reverse):
        """gx: (T*Bp, 4H) hoisted input gates (bias already added).
        Returns the list of hidden states indexed by sequence position t."""
        h = jnp.zeros((Bp, H), jnp.float32)
        c = jnp.zeros((Bp, H), jnp.float32)
        outs = [None] * T
        steps = range(T - 1, -1, -1) if reverse else range(T)
        for t in steps:                                        # fully unrolled
            gates = gx[t * Bp:(t + 1) * Bp, :] + jnp.dot(
                h, whh, preferred_element_type=jnp.float32)
            h, c = cell(gates, c)
            outs[t] = h
        return outs

    # ---- layer 0: hoisted input projection for both directions at once -------
    x2d = x_ref[...]                                           # (T*Bp, D0)
    gx0 = jnp.dot(x2d, wih0_ref[...],
                  preferred_element_type=jnp.float32) + b0_ref[...]   # (T*Bp, 8H)
    hf0 = run_direction(gx0[:, :G], whh0f_ref[...], reverse=False)
    hb0 = run_direction(gx0[:, G:], whh0b_ref[...], reverse=True)

    # ---- layer 1 --------------------------------------------------------------
    seqf = jnp.concatenate(hf0, axis=0)                        # (T*Bp, H), t-major
    seqb = jnp.concatenate(hb0, axis=0)                        # (T*Bp, H)
    wih1 = wih1_ref[...]                                       # (2H, 8H)
    gx1 = (jnp.dot(seqf, wih1[:H, :], preferred_element_type=jnp.float32)
           + jnp.dot(seqb, wih1[H:, :], preferred_element_type=jnp.float32)
           + b1_ref[...])                                      # (T*Bp, 8H)
    hf1 = run_direction(gx1[:, :G], whh1f_ref[...], reverse=False)
    hb1 = run_direction(gx1[:, G:], whh1b_ref[...], reverse=True)

    # out[:, -1, :] == [fwd hidden at t=T-1 | bwd hidden at t=T-1]
    h_last_f = hf1[T - 1]
    h_last_b = hb1[T - 1]

    # ---- FC head (split weight -> no lane concat of the two H-wide halves) ----
    wfc = wfc_ref[...]                                         # (2H, C)
    out = (jnp.dot(h_last_f, wfc[:H, :], preferred_element_type=jnp.float32)
           + jnp.dot(h_last_b, wfc[H:, :], preferred_element_type=jnp.float32)
           + bfc_ref[...])
    out_ref[...] = out


# ------------------------------ Pallas wrapper ---------------------------------
def blstm_forward(x_btd, params):
    """x_btd: (B, T, input_size) batch_first, like the PyTorch module."""
    B, T, D = x_btd.shape
    H = HIDDEN_SIZE
    Bp = ((B + 7) // 8) * 8                                    # pad batch to a sublane
    x = jnp.transpose(x_btd, (1, 0, 2)).astype(jnp.float32)    # (T, B, D), tiny
    if Bp != B:
        x = jnp.pad(x, ((0, 0), (0, Bp - B), (0, 0)))
    x2d = x.reshape(T * Bp, D)

    kernel = functools.partial(_blstm_fused_kernel,
                               seq_len=T, batch=Bp, hidden=H)
    out_p = pl.pallas_call(
        kernel,
        out_shape=jax.ShapeDtypeStruct((Bp, NUM_CLASSES), jnp.float32),
    )(x2d,
      params["l0"]["w_ih"], params["l0"]["w_hh_f"], params["l0"]["w_hh_b"],
      params["l0"]["b"],
      params["l1"]["w_ih"], params["l1"]["w_hh_f"], params["l1"]["w_hh_b"],
      params["l1"]["b"],
      params["fc"]["w"], params["fc"]["b"])
    return out_p[:B]


# ------------------------------ pure-JAX reference ------------------------------
_HI = jax.lax.Precision.HIGHEST


def _lstm_dir_ref(x_tbd, w_ih, w_hh, b, hidden):
    """x_tbd: (T,B,D); w_ih: (D,4H); w_hh: (H,4H); b: (1,4H); gates (i,f,o,g)."""
    B = x_tbd.shape[1]

    def step(carry, x_t):
        h, c = carry
        gates = jnp.dot(x_t, w_ih, precision=_HI) + jnp.dot(h, w_hh, precision=_HI) + b
        i = jax.nn.sigmoid(gates[:, :hidden])
        f = jax.nn.sigmoid(gates[:, hidden:2 * hidden])
        o = jax.nn.sigmoid(gates[:, 2 * hidden:3 * hidden])
        g = jnp.tanh(gates[:, 3 * hidden:])
        c = f * c + i * g
        h = o * jnp.tanh(c)
        return (h, c), h

    init = (jnp.zeros((B, hidden), jnp.float32),
            jnp.zeros((B, hidden), jnp.float32))
    _, hs = jax.lax.scan(step, init, x_tbd)
    return hs


def _bilstm_layer_ref(x_tbd, p, hidden):
    G = 4 * hidden
    h_f = _lstm_dir_ref(x_tbd, p["w_ih"][:, :G], p["w_hh_f"], p["b"][:, :G], hidden)
    h_b = jnp.flip(
        _lstm_dir_ref(jnp.flip(x_tbd, 0), p["w_ih"][:, G:], p["w_hh_b"],
                      p["b"][:, G:], hidden), 0)
    return jnp.concatenate([h_f, h_b], axis=-1)


def blstm_ref(x_btd, params):
    x = jnp.transpose(x_btd, (1, 0, 2)).astype(jnp.float32)
    x = _bilstm_layer_ref(x, params["l0"], HIDDEN_SIZE)
    x = _bilstm_layer_ref(x, params["l1"], HIDDEN_SIZE)
    return jnp.dot(x[-1], params["fc"]["w"], precision=_HI) + params["fc"]["b"]


# ------------------------------ parameter init ----------------------------------
def init_params(key):
    """Uniform +-1/sqrt(H) init (nn.LSTM / nn.Linear style).  Weights are stored
    pre-transposed, fwd/bwd concatenated along the gate axis, gate columns in
    (i, f, o, g) order, and b = b_ih + b_hh."""
    H = HIDDEN_SIZE
    k = 1.0 / jnp.sqrt(jnp.float32(H))

    def uni(kk, shape, scale):
        return jax.random.uniform(kk, shape, jnp.float32, -scale, scale)

    params = {}
    for layer in range(NUM_LAYERS):
        d_in = INPUT_SIZE if layer == 0 else 2 * H
        key, k1, k2, k3, k4, k5, k6, k7, k8 = jax.random.split(key, 9)
        w_ih_f = uni(k1, (d_in, 4 * H), k)
        w_ih_b = uni(k2, (d_in, 4 * H), k)
        w_hh_f = uni(k3, (H, 4 * H), k)
        w_hh_b = uni(k4, (H, 4 * H), k)
        b_f = uni(k5, (1, 4 * H), k) + uni(k6, (1, 4 * H), k)   # b_ih + b_hh
        b_b = uni(k7, (1, 4 * H), k) + uni(k8, (1, 4 * H), k)
        params[f"l{layer}"] = {
            "w_ih": jnp.concatenate([w_ih_f, w_ih_b], axis=1),  # (d_in, 8H)
            "w_hh_f": w_hh_f,                                   # (H, 4H)
            "w_hh_b": w_hh_b,                                   # (H, 4H)
            "b": jnp.concatenate([b_f, b_b], axis=1),           # (1, 8H)
        }

    key, k1, k2 = jax.random.split(key, 3)
    kf = 1.0 / jnp.sqrt(jnp.float32(2 * H))
    params["fc"] = {"w": uni(k1, (2 * H, NUM_CLASSES), kf),      # (2H, C)
                    "b": uni(k2, (1, NUM_CLASSES), kf)}          # (1, C)
    return params


# ----------------------------------- main ---------------------------------------
if __name__ == "__main__":
    key = jax.random.PRNGKey(0)
    key, kx, kp = jax.random.split(key, 3)

    x = jax.random.normal(kx, (BATCH, SEQ, INPUT_SIZE), jnp.float32)
    params = init_params(kp)

    out = jax.block_until_ready(jax.jit(blstm_forward)(x, params))
    assert out.shape == (BATCH, NUM_CLASSES), out.shape

    ref = jax.block_until_ready(jax.jit(blstm_ref)(x, params))
    assert jnp.allclose(out, ref, atol=5e-4, rtol=5e-4), (out, ref)

    print("KERNEL_OK")
</pallas_src>

<mosaic_0001>
module attributes {stable_mosaic.version = 11 : i64} {
  func.func @_blstm_fused_kernel(%arg0: memref<64x28xf32, #tpu.memory_space<vmem>>, %arg1: memref<28x256xf32, #tpu.memory_space<vmem>>, %arg2: memref<32x128xf32, #tpu.memory_space<vmem>>, %arg3: memref<32x128xf32, #tpu.memory_space<vmem>>, %arg4: memref<1x256xf32, #tpu.memory_space<vmem>>, %arg5: memref<64x256xf32, #tpu.memory_space<vmem>>, %arg6: memref<32x128xf32, #tpu.memory_space<vmem>>, %arg7: memref<32x128xf32, #tpu.memory_space<vmem>>, %arg8: memref<1x256xf32, #tpu.memory_space<vmem>>, %arg9: memref<64x10xf32, #tpu.memory_space<vmem>>, %arg10: memref<1x10xf32, #tpu.memory_space<vmem>>, %arg11: memref<8x10xf32, #tpu.memory_space<vmem>>) attributes {dimension_semantics = [], scalar_prefetch = 0 : i64, scratch_operands = 0 : i64, tpu.core_type = #tpu.core_type<tc>} {
    %c0 = arith.constant 0 : index
    %c0_0 = arith.constant 0 : index
    %0 = vector.load %arg0[%c0, %c0_0] : memref<64x28xf32, #tpu.memory_space<vmem>>, vector<64x28xf32>
    %c0_1 = arith.constant 0 : index
    %c0_2 = arith.constant 0 : index
    %1 = vector.load %arg1[%c0_1, %c0_2] : memref<28x256xf32, #tpu.memory_space<vmem>>, vector<28x256xf32>
    %cst = arith.constant dense<0.000000e+00> : vector<64x256xf32>
    %2 = tpu.matmul %0, %1, %cst {dimension_numbers = #tpu.dot_dimension_numbers<[1], [0], [0], [1], [0, 0, 1, 1], [], []>} : vector<64x28xf32>, vector<28x256xf32>, vector<64x256xf32> -> vector<64x256xf32>
    %c0_3 = arith.constant 0 : index
    %c0_4 = arith.constant 0 : index
    %3 = vector.load %arg4[%c0_3, %c0_4] : memref<1x256xf32, #tpu.memory_space<vmem>>, vector<1x256xf32>
    %4 = vector.broadcast %3 : vector<1x256xf32> to vector<64x256xf32>
    %5 = arith.addf %2, %4 : vector<64x256xf32>
    %6 = vector.extract_strided_slice %5 {offsets = [0, 0], sizes = [64, 128], strides = [1, 1]} : vector<64x256xf32> to vector<64x128xf32>
    %c0_5 = arith.constant 0 : index
    %c0_6 = arith.constant 0 : index
    %7 = vector.load %arg2[%c0_5, %c0_6] : memref<32x128xf32, #tpu.memory_space<vmem>>, vector<32x128xf32>
    %cst_7 = arith.constant 0.000000e+00 : f32
    %8 = vector.broadcast %cst_7 : f32 to vector<8x32xf32>
    %cst_8 = arith.constant 0.000000e+00 : f32
    %9 = vector.broadcast %cst_8 : f32 to vector<8x32xf32>
    %10 = vector.extract_strided_slice %6 {offsets = [0, 0], sizes = [8, 128], strides = [1, 1]} : vector<64x128xf32> to vector<8x128xf32>
    %cst_9 = arith.constant dense<0.000000e+00> : vector<8x128xf32>
    %11 = tpu.matmul %8, %7, %cst_9 {dimension_numbers = #tpu.dot_dimension_numbers<[1], [0], [0], [1], [0, 0, 1, 1], [], []>} : vector<8x32xf32>, vector<32x128xf32>, vector<8x128xf32> -> vector<8x128xf32>
    %12 = arith.addf %10, %11 : vector<8x128xf32>
    %13 = vector.extract_strided_slice %12 {offsets = [0, 0], sizes = [8, 96], strides = [1, 1]} : vector<8x128xf32> to vector<8x96xf32>
    %14 = arith.negf %13 : vector<8x96xf32>
    %15 = math.exp %14 : vector<8x96xf32>
    %cst_10 = arith.constant 1.000000e+00 : f32
    %16 = vector.broadcast %cst_10 : f32 to vector<8x96xf32>
    %17 = arith.addf %16, %15 : vector<8x96xf32>
    %18 = arith.divf %16, %17 : vector<8x96xf32>
    %19 = vector.extract_strided_slice %18 {offsets = [0, 0], sizes = [8, 32], strides = [1, 1]} : vector<8x96xf32> to vector<8x32xf32>
    %20 = vector.extract_strided_slice %18 {offsets = [0, 32], sizes = [8, 32], strides = [1, 1]} : vector<8x96xf32> to vector<8x32xf32>
    %21 = vector.extract_strided_slice %18 {offsets = [0, 64], sizes = [8, 32], strides = [1, 1]} : vector<8x96xf32> to vector<8x32xf32>
    %22 = vector.extract_strided_slice %12 {offsets = [0, 96], sizes = [8, 32], strides = [1, 1]} : vector<8x128xf32> to vector<8x32xf32>
    %23 = math.tanh %22 : vector<8x32xf32>
    %24 = arith.mulf %20, %9 : vector<8x32xf32>
    %25 = arith.mulf %19, %23 : vector<8x32xf32>
    %26 = arith.addf %24, %25 : vector<8x32xf32>
    %27 = math.tanh %26 : vector<8x32xf32>
    %28 = arith.mulf %21, %27 : vector<8x32xf32>
    %29 = vector.extract_strided_slice %6 {offsets = [8, 0], sizes = [8, 128], strides = [1, 1]} : vector<64x128xf32> to vector<8x128xf32>
    %cst_11 = arith.constant dense<0.000000e+00> : vector<8x128xf32>
    %30 = tpu.matmul %28, %7, %cst_11 {dimension_numbers = #tpu.dot_dimension_numbers<[1], [0], [0], [1], [0, 0, 1, 1], [], []>} : vector<8x32xf32>, vector<32x128xf32>, vector<8x128xf32> -> vector<8x128xf32>
    %31 = arith.addf %29, %30 : vector<8x128xf32>
    %32 = vector.extract_strided_slice %31 {offsets = [0, 0], sizes = [8, 96], strides = [1, 1]} : vector<8x128xf32> to vector<8x96xf32>
    %33 = arith.negf %32 : vector<8x96xf32>
    %34 = math.exp %33 : vector<8x96xf32>
    %cst_12 = arith.constant 1.000000e+00 : f32
    %35 = vector.broadcast %cst_12 : f32 to vector<8x96xf32>
    %36 = arith.addf %35, %34 : vector<8x96xf32>
    %37 = arith.divf %35, %36 : vector<8x96xf32>
    %38 = vector.extract_strided_slice %37 {offsets = [0, 0], sizes = [8, 32], strides = [1, 1]} : vector<8x96xf32> to vector<8x32xf32>
    %39 = vector.extract_strided_slice %37 {offsets = [0, 32], sizes = [8, 32], strides = [1, 1]} : vector<8x96xf32> to vector<8x32xf32>
    %40 = vector.extract_strided_slice %37 {offsets = [0, 64], sizes = [8, 32], strides = [1, 1]} : vector<8x96xf32> to vector<8x32xf32>
    %41 = vector.extract_strided_slice %31 {offsets = [0, 96], sizes = [8, 32], strides = [1, 1]} : vector<8x128xf32> to vector<8x32xf32>
    %42 = math.tanh %41 : vector<8x32xf32>
    %43 = arith.mulf %39, %26 : vector<8x32xf32>
    %44 = arith.mulf %38, %42 : vector<8x32xf32>
    %45 = arith.addf %43, %44 : vector<8x32xf32>
    %46 = math.tanh %45 : vector<8x32xf32>
    %47 = arith.mulf %40, %46 : vector<8x32xf32>
    %48 = vector.extract_strided_slice %6 {offsets = [16, 0], sizes = [8, 128], strides = [1, 1]} : vector<64x128xf32> to vector<8x128xf32>
    %cst_13 = arith.constant dense<0.000000e+00> : vector<8x128xf32>
    %49 = tpu.matmul %47, %7, %cst_13 {dimension_numbers = #tpu.dot_dimension_numbers<[1], [0], [0], [1], [0, 0, 1, 1], [], []>} : vector<8x32xf32>, vector<32x128xf32>, vector<8x128xf32> -> vector<8x128xf32>
    %50 = arith.addf %48, %49 : vector<8x128xf32>
    %51 = vector.extract_strided_slice %50 {offsets = [0, 0], sizes = [8, 96], strides = [1, 1]} : vector<8x128xf32> to vector<8x96xf32>
    %52 = arith.negf %51 : vector<8x96xf32>
    %53 = math.exp %52 : vector<8x96xf32>
    %cst_14 = arith.constant 1.000000e+00 : f32
    %54 = vector.broadcast %cst_14 : f32 to vector<8x96xf32>
    %55 = arith.addf %54, %53 : vector<8x96xf32>
    %56 = arith.divf %54, %55 : vector<8x96xf32>
    %57 = vector.extract_strided_slice %56 {offsets = [0, 0], sizes = [8, 32], strides = [1, 1]} : vector<8x96xf32> to vector<8x32xf32>
    %58 = vector.extract_strided_slice %56 {offsets = [0, 32], sizes = [8, 32], strides = [1, 1]} : vector<8x96xf32> to vector<8x32xf32>
    %59 = vector.extract_strided_slice %56 {offsets = [0, 64], sizes = [8, 32], strides = [1, 1]} : vector<8x96xf32> to vector<8x32xf32>
    %60 = vector.extract_strided_slice %50 {offsets = [0, 96], sizes = [8, 32], strides = [1, 1]} : vector<8x128xf32> to vector<8x32xf32>
    %61 = math.tanh %60 : vector<8x32xf32>
    %62 = arith.mulf %58, %45 : vector<8x32xf32>
    %63 = arith.mulf %57, %61 : vector<8x32xf32>
    %64 = arith.addf %62, %63 : vector<8x32xf32>
    %65 = math.tanh %64 : vector<8x32xf32>
    %66 = arith.mulf %59, %65 : vector<8x32xf32>
    %67 = vector.extract_strided_slice %6 {offsets = [24, 0], sizes = [8, 128], strides = [1, 1]} : vector<64x128xf32> to vector<8x128xf32>
    %cst_15 = arith.constant dense<0.000000e+00> : vector<8x128xf32>
    %68 = tpu.matmul %66, %7, %cst_15 {dimension_numbers = #tpu.dot_dimension_numbers<[1], [0], [0], [1], [0, 0, 1, 1], [], []>} : vector<8x32xf32>, vector<32x128xf32>, vector<8x128xf32> -> vector<8x128xf32>
    %69 = arith.addf %67, %68 : vector<8x128xf32>
    %70 = vector.extract_strided_slice %69 {offsets = [0, 0], sizes = [8, 96], strides = [1, 1]} : vector<8x128xf32> to vector<8x96xf32>
    %71 = arith.negf %70 : vector<8x96xf32>
    %72 = math.exp %71 : vector<8x96xf32>
    %cst_16 = arith.constant 1.000000e+00 : f32
    %73 = vector.broadcast %cst_16 : f32 to vector<8x96xf32>
    %74 = arith.addf %73, %72 : vector<8x96xf32>
    %75 = arith.divf %73, %74 : vector<8x96xf32>
    %76 = vector.extract_strided_slice %75 {offsets = [0, 0], sizes = [8, 32], strides = [1, 1]} : vector<8x96xf32> to vector<8x32xf32>
    %77 = vector.extract_strided_slice %75 {offsets = [0, 32], sizes = [8, 32], strides = [1, 1]} : vector<8x96xf32> to vector<8x32xf32>
    %78 = vector.extract_strided_slice %75 {offsets = [0, 64], sizes = [8, 32], strides = [1, 1]} : vector<8x96xf32> to vector<8x32xf32>
    %79 = vector.extract_strided_slice %69 {offsets = [0, 96], sizes = [8, 32], strides = [1, 1]} : vector<8x128xf32> to vector<8x32xf32>
    %80 = math.tanh %79 : vector<8x32xf32>
    %81 = arith.mulf %77, %64 : vector<8x32xf32>
    %82 = arith.mulf %76, %80 : vector<8x32xf32>
    %83 = arith.addf %81, %82 : vector<8x32xf32>
    %84 = math.tanh %83 : vector<8x32xf32>
    %85 = arith.mulf %78, %84 : vector<8x32xf32>
    %86 = vector.extract_strided_slice %6 {offsets = [32, 0], sizes = [8, 128], strides = [1, 1]} : vector<64x128xf32> to vector<8x128xf32>
    %cst_17 = arith.constant dense<0.000000e+00> : vector<8x128xf32>
    %87 = tpu.matmul %85, %7, %cst_17 {dimension_numbers = #tpu.dot_dimension_numbers<[1], [0], [0], [1], [0, 0, 1, 1], [], []>} : vector<8x32xf32>, vector<32x128xf32>, vector<8x128xf32> -> vector<8x128xf32>
    %88 = arith.addf %86, %87 : vector<8x128xf32>
    %89 = vector.extract_strided_slice %88 {offsets = [0, 0], sizes = [8, 96], strides = [1, 1]} : vector<8x128xf32> to vector<8x96xf32>
    %90 = arith.negf %89 : vector<8x96xf32>
    %91 = math.exp %90 : vector<8x96xf32>
    %cst_18 = arith.constant 1.000000e+00 : f32
    %92 = vector.broadcast %cst_18 : f32 to vector<8x96xf32>
    %93 = arith.addf %92, %91 : vector<8x96xf32>
    %94 = arith.divf %92, %93 : vector<8x96xf32>
    %95 = vector.extract_strided_slice %94 {offsets = [0, 0], sizes = [8, 32], strides = [1, 1]} : vector<8x96xf32> to vector<8x32xf32>
    %96 = vector.extract_strided_slice %94 {offsets = [0, 32], sizes = [8, 32], strides = [1, 1]} : vector<8x96xf32> to vector<8x32xf32>
    %97 = vector.extract_strided_slice %94 {offsets = [0, 64], sizes = [8, 32], strides = [1, 1]} : vector<8x96xf32> to vector<8x32xf32>
    %98 = vector.extract_strided_slice %88 {offsets = [0, 96], sizes = [8, 32], strides = [1, 1]} : vector<8x128xf32> to vector<8x32xf32>
    %99 = math.tanh %98 : vector<8x32xf32>
    %100 = arith.mulf %96, %83 : vector<8x32xf32>
    %101 = arith.mulf %95, %99 : vector<8x32xf32>
    %102 = arith.addf %100, %101 : vector<8x32xf32>
    %103 = math.tanh %102 : vector<8x32xf32>
    %104 = arith.mulf %97, %103 : vector<8x32xf32>
    %105 = vector.extract_strided_slice %6 {offsets = [40, 0], sizes = [8, 128], strides = [1, 1]} : vector<64x128xf32> to vector<8x128xf32>
    %cst_19 = arith.constant dense<0.000000e+00> : vector<8x128xf32>
    %106 = tpu.matmul %104, %7, %cst_19 {dimension_numbers = #tpu.dot_dimension_numbers<[1], [0], [0], [1], [0, 0, 1, 1], [], []>} : vector<8x32xf32>, vector<32x128xf32>, vector<8x128xf32> -> vector<8x128xf32>
    %107 = arith.addf %105, %106 : vector<8x128xf32>
    %108 = vector.extract_strided_slice %107 {offsets = [0, 0], sizes = [8, 96], strides = [1, 1]} : vector<8x128xf32> to vector<8x96xf32>
    %109 = arith.negf %108 : vector<8x96xf32>
    %110 = math.exp %109 : vector<8x96xf32>
    %cst_20 = arith.constant 1.000000e+00 : f32
    %111 = vector.broadcast %cst_20 : f32 to vector<8x96xf32>
    %112 = arith.addf %111, %110 : vector<8x96xf32>
    %113 = arith.divf %111, %112 : vector<8x96xf32>
    %114 = vector.extract_strided_slice %113 {offsets = [0, 0], sizes = [8, 32], strides = [1, 1]} : vector<8x96xf32> to vector<8x32xf32>
    %115 = vector.extract_strided_slice %113 {offsets = [0, 32], sizes = [8, 32], strides = [1, 1]} : vector<8x96xf32> to vector<8x32xf32>
    %116 = vector.extract_strided_slice %113 {offsets = [0, 64], sizes = [8, 32], strides = [1, 1]} : vector<8x96xf32> to vector<8x32xf32>
    %117 = vector.extract_strided_slice %107 {offsets = [0, 96], sizes = [8, 32], strides = [1, 1]} : vector<8x128xf32> to vector<8x32xf32>
    %118 = math.tanh %117 : vector<8x32xf32>
    %119 = arith.mulf %115, %102 : vector<8x32xf32>
    %120 = arith.mulf %114, %118 : vector<8x32xf32>
    %121 = arith.addf %119, %120 : vector<8x32xf32>
    %122 = math.tanh %121 : vector<8x32xf32>
    %123 = arith.mulf %116, %122 : vector<8x32xf32>
    %124 = vector.extract_strided_slice %6 {offsets = [48, 0], sizes = [8, 128], strides = [1, 1]} : vector<64x128xf32> to vector<8x128xf32>
    %cst_21 = arith.constant dense<0.000000e+00> : vector<8x128xf32>
    %125 = tpu.matmul %123, %7, %cst_21 {dimension_numbers = #tpu.dot_dimension_numbers<[1], [0], [0], [1], [0, 0, 1, 1], [], []>} : vector<8x32xf32>, vector<32x128xf32>, vector<8x128xf32> -> vector<8x128xf32>
    %126 = arith.addf %124, %125 : vector<8x128xf32>
    %127 = vector.extract_strided_slice %126 {offsets = [0, 0], sizes = [8, 96], strides = [1, 1]} : vector<8x128xf32> to vector<8x96xf32>
    %128 = arith.negf %127 : vector<8x96xf32>
    %129 = math.exp %128 : vector<8x96xf32>
    %cst_22 = arith.constant 1.000000e+00 : f32
    %130 = vector.broadcast %cst_22 : f32 to vector<8x96xf32>
    %131 = arith.addf %130, %129 : vector<8x96xf32>
    %132 = arith.divf %130, %131 : vector<8x96xf32>
    %133 = vector.extract_strided_slice %132 {offsets = [0, 0], sizes = [8, 32], strides = [1, 1]} : vector<8x96xf32> to vector<8x32xf32>
    %134 = vector.extract_strided_slice %132 {offsets = [0, 32], sizes = [8, 32], strides = [1, 1]} : vector<8x96xf32> to vector<8x32xf32>
    %135 = vector.extract_strided_slice %132 {offsets = [0, 64], sizes = [8, 32], strides = [1, 1]} : vector<8x96xf32> to vector<8x32xf32>
    %136 = vector.extract_strided_slice %126 {offsets = [0, 96], sizes = [8, 32], strides = [1, 1]} : vector<8x128xf32> to vector<8x32xf32>
    %137 = math.tanh %136 : vector<8x32xf32>
    %138 = arith.mulf %134, %121 : vector<8x32xf32>
    %139 = arith.mulf %133, %137 : vector<8x32xf32>
    %140 = arith.addf %138, %139 : vector<8x32xf32>
    %141 = math.tanh %140 : vector<8x32xf32>
    %142 = arith.mulf %135, %141 : vector<8x32xf32>
    %143 = vector.extract_strided_slice %6 {offsets = [56, 0], sizes = [8, 128], strides = [1, 1]} : vector<64x128xf32> to vector<8x128xf32>
    %cst_23 = arith.constant dense<0.000000e+00> : vector<8x128xf32>
    %144 = tpu.matmul %142, %7, %cst_23 {dimension_numbers = #tpu.dot_dimension_numbers<[1], [0], [0], [1], [0, 0, 1, 1], [], []>} : vector<8x32xf32>, vector<32x128xf32>, vector<8x128xf32> -> vector<8x128xf32>
    %145 = arith.addf %143, %144 : vector<8x128xf32>
    %146 = vector.extract_strided_slice %145 {offsets = [0, 0], sizes = [8, 96], strides = [1, 1]} : vector<8x128xf32> to vector<8x96xf32>
    %147 = arith.negf %146 : vector<8x96xf32>
    %148 = math.exp %147 : vector<8x96xf32>
    %cst_24 = arith.constant 1.000000e+00 : f32
    %149 = vector.broadcast %cst_24 : f32 to vector<8x96xf32>
    %150 = arith.addf %149, %148 : vector<8x96xf32>
    %151 = arith.divf %149, %150 : vector<8x96xf32>
    %152 = vector.extract_strided_slice %151 {offsets = [0, 0], sizes = [8, 32], strides = [1, 1]} : vector<8x96xf32> to vector<8x32xf32>
    %153 = vector.extract_strided_slice %151 {offsets = [0, 32], sizes = [8, 32], strides = [1, 1]} : vector<8x96xf32> to vector<8x32xf32>
    %154 = vector.extract_strided_slice %151 {offsets = [0, 64], sizes = [8, 32], strides = [1, 1]} : vector<8x96xf32> to vector<8x32xf32>
    %155 = vector.extract_strided_slice %145 {offsets = [0, 96], sizes = [8, 32], strides = [1, 1]} : vector<8x128xf32> to vector<8x32xf32>
    %156 = math.tanh %155 : vector<8x32xf32>
    %157 = arith.mulf %153, %140 : vector<8x32xf32>
    %158 = arith.mulf %152, %156 : vector<8x32xf32>
    %159 = arith.addf %157, %158 : vector<8x32xf32>
    %160 = math.tanh %159 : vector<8x32xf32>
    %161 = arith.mulf %154, %160 : vector<8x32xf32>
    %162 = vector.extract_strided_slice %5 {offsets = [0, 128], sizes = [64, 128], strides = [1, 1]} : vector<64x256xf32> to vector<64x128xf32>
    %c0_25 = arith.constant 0 : index
    %c0_26 = arith.constant 0 : index
    %163 = vector.load %arg3[%c0_25, %c0_26] : memref<32x128xf32, #tpu.memory_space<vmem>>, vector<32x128xf32>
    %cst_27 = arith.constant 0.000000e+00 : f32
    %164 = vector.broadcast %cst_27 : f32 to vector<8x32xf32>
    %cst_28 = arith.constant 0.000000e+00 : f32
    %165 = vector.broadcast %cst_28 : f32 to vector<8x32xf32>
    %166 = vector.extract_strided_slice %162 {offsets = [56, 0], sizes = [8, 128], strides = [1, 1]} : vector<64x128xf32> to vector<8x128xf32>
    %cst_29 = arith.constant dense<0.000000e+00> : vector<8x128xf32>
    %167 = tpu.matmul %164, %163, %cst_29 {dimension_numbers = #tpu.dot_dimension_numbers<[1], [0], [0], [1], [0, 0, 1, 1], [], []>} : vector<8x32xf32>, vector<32x128xf32>, vector<8x128xf32> -> vector<8x128xf32>
    %168 = arith.addf %166, %167 : vector<8x128xf32>
    %169 = vector.extract_strided_slice %168 {offsets = [0, 0], sizes = [8, 96], strides = [1, 1]} : vector<8x128xf32> to vector<8x96xf32>
    %170 = arith.negf %169 : vector<8x96xf32>
    %171 = math.exp %170 : vector<8x96xf32>
    %cst_30 = arith.constant 1.000000e+00 : f32
    %172 = vector.broadcast %cst_30 : f32 to vector<8x96xf32>
    %173 = arith.addf %172, %171 : vector<8x96xf32>
    %174 = arith.divf %172, %173 : vector<8x96xf32>
    %175 = vector.extract_strided_slice %174 {offsets = [0, 0], sizes = [8, 32], strides = [1, 1]} : vector<8x96xf32> to vector<8x32xf32>
    %176 = vector.extract_strided_slice %174 {offsets = [0, 32], sizes = [8, 32], strides = [1, 1]} : vector<8x96xf32> to vector<8x32xf32>
    %177 = vector.extract_strided_slice %174 {offsets = [0, 64], sizes = [8, 32], strides = [1, 1]} : vector<8x96xf32> to vector<8x32xf32>
    %178 = vector.extract_strided_slice %168 {offsets = [0, 96], sizes = [8, 32], strides = [1, 1]} : vector<8x128xf32> to vector<8x32xf32>
    %179 = math.tanh %178 : vector<8x32xf32>
    %180 = arith.mulf %176, %165 : vector<8x32xf32>
    %181 = arith.mulf %175, %179 : vector<8x32xf32>
    %182 = arith.addf %180, %181 : vector<8x32xf32>
    %183 = math.tanh %182 : vector<8x32xf32>
    %184 = arith.mulf %177, %183 : vector<8x32xf32>
    %185 = vector.extract_strided_slice %162 {offsets = [48, 0], sizes = [8, 128], strides = [1, 1]} : vector<64x128xf32> to vector<8x128xf32>
    %cst_31 = arith.constant dense<0.000000e+00> : vector<8x128xf32>
    %186 = tpu.matmul %184, %163, %cst_31 {dimension_numbers = #tpu.dot_dimension_numbers<[1], [0], [0], [1], [0, 0, 1, 1], [], []>} : vector<8x32xf32>, vector<32x128xf32>, vector<8x128xf32> -> vector<8x128xf32>
    %187 = arith.addf %185, %186 : vector<8x128xf32>
    %188 = vector.extract_strided_slice %187 {offsets = [0, 0], sizes = [8, 96], strides = [1, 1]} : vector<8x128xf32> to vector<8x96xf32>
    %189 = arith.negf %188 : vector<8x96xf32>
    %190 = math.exp %189 : vector<8x96xf32>
    %cst_32 = arith.constant 1.000000e+00 : f32
    %191 = vector.broadcast %cst_32 : f32 to vector<8x96xf32>
    %192 = arith.addf %191, %190 : vector<8x96xf32>
    %193 = arith.divf %191, %192 : vector<8x96xf32>
    %194 = vector.extract_strided_slice %193 {offsets = [0, 0], sizes = [8, 32], strides = [1, 1]} : vector<8x96xf32> to vector<8x32xf32>
    %195 = vector.extract_strided_slice %193 {offsets = [0, 32], sizes = [8, 32], strides = [1, 1]} : vector<8x96xf32> to vector<8x32xf32>
    %196 = vector.extract_strided_slice %193 {offsets = [0, 64], sizes = [8, 32], strides = [1, 1]} : vector<8x96xf32> to vector<8x32xf32>
    %197 = vector.extract_strided_slice %187 {offsets = [0, 96], sizes = [8, 32], strides = [1, 1]} : vector<8x128xf32> to vector<8x32xf32>
    %198 = math.tanh %197 : vector<8x32xf32>
    %199 = arith.mulf %195, %182 : vector<8x32xf32>
    %200 = arith.mulf %194, %198 : vector<8x32xf32>
    %201 = arith.addf %199, %200 : vector<8x32xf32>
    %202 = math.tanh %201 : vector<8x32xf32>
    %203 = arith.mulf %196, %202 : vector<8x32xf32>
    %204 = vector.extract_strided_slice %162 {offsets = [40, 0], sizes = [8, 128], strides = [1, 1]} : vector<64x128xf32> to vector<8x128xf32>
    %cst_33 = arith.constant dense<0.000000e+00> : vector<8x128xf32>
    %205 = tpu.matmul %203, %163, %cst_33 {dimension_numbers = #tpu.dot_dimension_numbers<[1], [0], [0], [1], [0, 0, 1, 1], [], []>} : vector<8x32xf32>, vector<32x128xf32>, vector<8x128xf32> -> vector<8x128xf32>
    %206 = arith.addf %204, %205 : vector<8x128xf32>
    %207 = vector.extract_strided_slice %206 {offsets = [0, 0], sizes = [8, 96], strides = [1, 1]} : vector<8x128xf32> to vector<8x96xf32>
    %208 = arith.negf %207 : vector<8x96xf32>
    %209 = math.exp %208 : vector<8x96xf32>
    %cst_34 = arith.constant 1.000000e+00 : f32
    %210 = vector.broadcast %cst_34 : f32 to vector<8x96xf32>
    %211 = arith.addf %210, %209 : vector<8x96xf32>
    %212 = arith.divf %210, %211 : vector<8x96xf32>
    %213 = vector.extract_strided_slice %212 {offsets = [0, 0], sizes = [8, 32], strides = [1, 1]} : vector<8x96xf32> to vector<8x32xf32>
    %214 = vector.extract_strided_slice %212 {offsets = [0, 32], sizes = [8, 32], strides = [1, 1]} : vector<8x96xf32> to vector<8x32xf32>
    %215 = vector.extract_strided_slice %212 {offsets = [0, 64], sizes = [8, 32], strides = [1, 1]} : vector<8x96xf32> to vector<8x32xf32>
    %216 = vector.extract_strided_slice %206 {offsets = [0, 96], sizes = [8, 32], strides = [1, 1]} : vector<8x128xf32> to vector<8x32xf32>
    %217 = math.tanh %216 : vector<8x32xf32>
    %218 = arith.mulf %214, %201 : vector<8x32xf32>
    %219 = arith.mulf %213, %217 : vector<8x32xf32>
    %220 = arith.addf %218, %219 : vector<8x32xf32>
    %221 = math.tanh %220 : vector<8x32xf32>
    %222 = arith.mulf %215, %221 : vector<8x32xf32>
    %223 = vector.extract_strided_slice %162 {offsets = [32, 0], sizes = [8, 128], strides = [1, 1]} : vector<64x128xf32> to vector<8x128xf32>
    %cst_35 = arith.constant dense<0.000000e+00> : vector<8x128xf32>
    %224 = tpu.matmul %222, %163, %cst_35 {dimension_numbers = #tpu.dot_dimension_numbers<[1], [0], [0], [1], [0, 0, 1, 1], [], []>} : vector<8x32xf32>, vector<32x128xf32>, vector<8x128xf32> -> vector<8x128xf32>
    %225 = arith.addf %223, %224 : vector<8x128xf32>
    %226 = vector.extract_strided_slice %225 {offsets = [0, 0], sizes = [8, 96], strides = [1, 1]} : vector<8x128xf32> to vector<8x96xf32>
    %227 = arith.negf %226 : vector<8x96xf32>
    %228 = math.exp %227 : vector<8x96xf32>
    %cst_36 = arith.constant 1.000000e+00 : f32
    %229 = vector.broadcast %cst_36 : f32 to vector<8x96xf32>
    %230 = arith.addf %229, %228 : vector<8x96xf32>
    %231 = arith.divf %229, %230 : vector<8x96xf32>
    %232 = vector.extract_strided_slice %231 {offsets = [0, 0], sizes = [8, 32], strides = [1, 1]} : vector<8x96xf32> to vector<8x32xf32>
    %233 = vector.extract_strided_slice %231 {offsets = [0, 32], sizes = [8, 32], strides = [1, 1]} : vector<8x96xf32> to vector<8x32xf32>
    %234 = vector.extract_strided_slice %231 {offsets = [0, 64], sizes = [8, 32], strides = [1, 1]} : vector<8x96xf32> to vector<8x32xf32>
    %235 = vector.extract_strided_slice %225 {offsets = [0, 96], sizes = [8, 32], strides = [1, 1]} : vector<8x128xf32> to vector<8x32xf32>
    %236 = math.tanh %235 : vector<8x32xf32>
    %237 = arith.mulf %233, %220 : vector<8x32xf32>
    %238 = arith.mulf %232, %236 : vector<8x32xf32>
    %239 = arith.addf %237, %238 : vector<8x32xf32>
    %240 = math.tanh %239 : vector<8x32xf32>
    %241 = arith.mulf %234, %240 : vector<8x32xf32>
    %242 = vector.extract_strided_slice %162 {offsets = [24, 0], sizes = [8, 128], strides = [1, 1]} : vector<64x128xf32> to vector<8x128xf32>
    %cst_37 = arith.constant dense<0.000000e+00> : vector<8x128xf32>
    %243 = tpu.matmul %241, %163, %cst_37 {dimension_numbers = #tpu.dot_dimension_numbers<[1], [0], [0], [1], [0, 0, 1, 1], [], []>} : vector<8x32xf32>, vector<32x128xf32>, vector<8x128xf32> -> vector<8x128xf32>
    %244 = arith.addf %242, %243 : vector<8x128xf32>
    %245 = vector.extract_strided_slice %244 {offsets = [0, 0], sizes = [8, 96], strides = [1, 1]} : vector<8x128xf32> to vector<8x96xf32>
    %246 = arith.negf %245 : vector<8x96xf32>
    %247 = math.exp %246 : vector<8x96xf32>
    %cst_38 = arith.constant 1.000000e+00 : f32
    %248 = vector.broadcast %cst_38 : f32 to vector<8x96xf32>
    %249 = arith.addf %248, %247 : vector<8x96xf32>
    %250 = arith.divf %248, %249 : vector<8x96xf32>
    %251 = vector.extract_strided_slice %250 {offsets = [0, 0], sizes = [8, 32], strides = [1, 1]} : vector<8x96xf32> to vector<8x32xf32>
    %252 = vector.extract_strided_slice %250 {offsets = [0, 32], sizes = [8, 32], strides = [1, 1]} : vector<8x96xf32> to vector<8x32xf32>
    %253 = vector.extract_strided_slice %250 {offsets = [0, 64], sizes = [8, 32], strides = [1, 1]} : vector<8x96xf32> to vector<8x32xf32>
    %254 = vector.extract_strided_slice %244 {offsets = [0, 96], sizes = [8, 32], strides = [1, 1]} : vector<8x128xf32> to vector<8x32xf32>
    %255 = math.tanh %254 : vector<8x32xf32>
    %256 = arith.mulf %252, %239 : vector<8x32xf32>
    %257 = arith.mulf %251, %255 : vector<8x32xf32>
    %258 = arith.addf %256, %257 : vector<8x32xf32>
    %259 = math.tanh %258 : vector<8x32xf32>
    %260 = arith.mulf %253, %259 : vector<8x32xf32>
    %261 = vector.extract_strided_slice %162 {offsets = [16, 0], sizes = [8, 128], strides = [1, 1]} : vector<64x128xf32> to vector<8x128xf32>
    %cst_39 = arith.constant dense<0.000000e+00> : vector<8x128xf32>
    %262 = tpu.matmul %260, %163, %cst_39 {dimension_numbers = #tpu.dot_dimension_numbers<[1], [0], [0], [1], [0, 0, 1, 1], [], []>} : vector<8x32xf32>, vector<32x128xf32>, vector<8x128xf32> -> vector<8x128xf32>
    %263 = arith.addf %261, %262 : vector<8x128xf32>
    %264 = vector.extract_strided_slice %263 {offsets = [0, 0], sizes = [8, 96], strides = [1, 1]} : vector<8x128xf32> to vector<8x96xf32>
    %265 = arith.negf %264 : vector<8x96xf32>
    %266 = math.exp %265 : vector<8x96xf32>
    %cst_40 = arith.constant 1.000000e+00 : f32
    %267 = vector.broadcast %cst_40 : f32 to vector<8x96xf32>
    %268 = arith.addf %267, %266 : vector<8x96xf32>
    %269 = arith.divf %267, %268 : vector<8x96xf32>
    %270 = vector.extract_strided_slice %269 {offsets = [0, 0], sizes = [8, 32], strides = [1, 1]} : vector<8x96xf32> to vector<8x32xf32>
    %271 = vector.extract_strided_slice %269 {offsets = [0, 32], sizes = [8, 32], strides = [1, 1]} : vector<8x96xf32> to vector<8x32xf32>
    %272 = vector.extract_strided_slice %269 {offsets = [0, 64], sizes = [8, 32], strides = [1, 1]} : vector<8x96xf32> to vector<8x32xf32>
    %273 = vector.extract_strided_slice %263 {offsets = [0, 96], sizes = [8, 32], strides = [1, 1]} : vector<8x128xf32> to vector<8x32xf32>
    %274 = math.tanh %273 : vector<8x32xf32>
    %275 = arith.mulf %271, %258 : vector<8x32xf32>
    %276 = arith.mulf %270, %274 : vector<8x32xf32>
    %277 = arith.addf %275, %276 : vector<8x32xf32>
    %278 = math.tanh %277 : vector<8x32xf32>
    %279 = arith.mulf %272, %278 : vector<8x32xf32>
    %280 = vector.extract_strided_slice %162 {offsets = [8, 0], sizes = [8, 128], strides = [1, 1]} : vector<64x128xf32> to vector<8x128xf32>
    %cst_41 = arith.constant dense<0.000000e+00> : vector<8x128xf32>
    %281 = tpu.matmul %279, %163, %cst_41 {dimension_numbers = #tpu.dot_dimension_numbers<[1], [0], [0], [1], [0, 0, 1, 1], [], []>} : vector<8x32xf32>, vector<32x128xf32>, vector<8x128xf32> -> vector<8x128xf32>
    %282 = arith.addf %280, %281 : vector<8x128xf32>
    %283 = vector.extract_strided_slice %282 {offsets = [0, 0], sizes = [8, 96], strides = [1, 1]} : vector<8x128xf32> to vector<8x96xf32>
    %284 = arith.negf %283 : vector<8x96xf32>
    %285 = math.exp %284 : vector<8x96xf32>
    %cst_42 = arith.constant 1.000000e+00 : f32
    %286 = vector.broadcast %cst_42 : f32 to vector<8x96xf32>
    %287 = arith.addf %286, %285 : vector<8x96xf32>
    %288 = arith.divf %286, %287 : vector<8x96xf32>
    %289 = vector.extract_strided_slice %288 {offsets = [0, 0], sizes = [8, 32], strides = [1, 1]} : vector<8x96xf32> to vector<8x32xf32>
    %290 = vector.extract_strided_slice %288 {offsets = [0, 32], sizes = [8, 32], strides = [1, 1]} : vector<8x96xf32> to vector<8x32xf32>
    %291 = vector.extract_strided_slice %288 {offsets = [0, 64], sizes = [8, 32], strides = [1, 1]} : vector<8x96xf32> to vector<8x32xf32>
    %292 = vector.extract_strided_slice %282 {offsets = [0, 96], sizes = [8, 32], strides = [1, 1]} : vector<8x128xf32> to vector<8x32xf32>
    %293 = math.tanh %292 : vector<8x32xf32>
    %294 = arith.mulf %290, %277 : vector<8x32xf32>
    %295 = arith.mulf %289, %293 : vector<8x32xf32>
    %296 = arith.addf %294, %295 : vector<8x32xf32>
    %297 = math.tanh %296 : vector<8x32xf32>
    %298 = arith.mulf %291, %297 : vector<8x32xf32>
    %299 = vector.extract_strided_slice %162 {offsets = [0, 0], sizes = [8, 128], strides = [1, 1]} : vector<64x128xf32> to vector<8x128xf32>
    %cst_43 = arith.constant dense<0.000000e+00> : vector<8x128xf32>
    %300 = tpu.matmul %298, %163, %cst_43 {dimension_numbers = #tpu.dot_dimension_numbers<[1], [0], [0], [1], [0, 0, 1, 1], [], []>} : vector<8x32xf32>, vector<32x128xf32>, vector<8x128xf32> -> vector<8x128xf32>
    %301 = arith.addf %299, %300 : vector<8x128xf32>
    %302 = vector.extract_strided_slice %301 {offsets = [0, 0], sizes = [8, 96], strides = [1, 1]} : vector<8x128xf32> to vector<8x96xf32>
    %303 = arith.negf %302 : vector<8x96xf32>
    %304 = math.exp %303 : vector<8x96xf32>
    %cst_44 = arith.constant 1.000000e+00 : f32
    %305 = vector.broadcast %cst_44 : f32 to vector<8x96xf32>
    %306 = arith.addf %305, %304 : vector<8x96xf32>
    %307 = arith.divf %305, %306 : vector<8x96xf32>
    %308 = vector.extract_strided_slice %307 {offsets = [0, 0], sizes = [8, 32], strides = [1, 1]} : vector<8x96xf32> to vector<8x32xf32>
    %309 = vector.extract_strided_slice %307 {offsets = [0, 32], sizes = [8, 32], strides = [1, 1]} : vector<8x96xf32> to vector<8x32xf32>
    %310 = vector.extract_strided_slice %307 {offsets = [0, 64], sizes = [8, 32], strides = [1, 1]} : vector<8x96xf32> to vector<8x32xf32>
    %311 = vector.extract_strided_slice %301 {offsets = [0, 96], sizes = [8, 32], strides = [1, 1]} : vector<8x128xf32> to vector<8x32xf32>
    %312 = math.tanh %311 : vector<8x32xf32>
    %313 = arith.mulf %309, %296 : vector<8x32xf32>
    %314 = arith.mulf %308, %312 : vector<8x32xf32>
    %315 = arith.addf %313, %314 : vector<8x32xf32>
    %316 = math.tanh %315 : vector<8x32xf32>
    %317 = arith.mulf %310, %316 : vector<8x32xf32>
    %318 = tpu.concatenate %28, %47, %66, %85, %104, %123, %142, %161 in 0 : vector<8x32xf32>, vector<8x32xf32>, vector<8x32xf32>, vector<8x32xf32>, vector<8x32xf32>, vector<8x32xf32>, vector<8x32xf32>, vector<8x32xf32> -> vector<64x32xf32>
    %319 = tpu.concatenate %317, %298, %279, %260, %241, %222, %203, %184 in 0 : vector<8x32xf32>, vector<8x32xf32>, vector<8x32xf32>, vector<8x32xf32>, vector<8x32xf32>, vector<8x32xf32>, vector<8x32xf32>, vector<8x32xf32> -> vector<64x32xf32>
    %c0_45 = arith.constant 0 : index
    %c0_46 = arith.constant 0 : index
    %320 = vector.load %arg5[%c0_45, %c0_46] : memref<64x256xf32, #tpu.memory_space<vmem>>, vector<64x256xf32>
    %321 = vector.extract_strided_slice %320 {offsets = [0, 0], sizes = [32, 256], strides = [1, 1]} : vector<64x256xf32> to vector<32x256xf32>
    %cst_47 = arith.constant dense<0.000000e+00> : vector<64x256xf32>
    %322 = tpu.matmul %318, %321, %cst_47 {dimension_numbers = #tpu.dot_dimension_numbers<[1], [0], [0], [1], [0, 0, 1, 1], [], []>} : vector<64x32xf32>, vector<32x256xf32>, vector<64x256xf32> -> vector<64x256xf32>
    %323 = vector.extract_strided_slice %320 {offsets = [32, 0], sizes = [32, 256], strides = [1, 1]} : vector<64x256xf32> to vector<32x256xf32>
    %cst_48 = arith.constant dense<0.000000e+00> : vector<64x256xf32>
    %324 = tpu.matmul %319, %323, %cst_48 {dimension_numbers = #tpu.dot_dimension_numbers<[1], [0], [0], [1], [0, 0, 1, 1], [], []>} : vector<64x32xf32>, vector<32x256xf32>, vector<64x256xf32> -> vector<64x256xf32>
    %325 = arith.addf %322, %324 : vector<64x256xf32>
    %c0_49 = arith.constant 0 : index
    %c0_50 = arith.constant 0 : index
    %326 = vector.load %arg8[%c0_49, %c0_50] : memref<1x256xf32, #tpu.memory_space<vmem>>, vector<1x256xf32>
    %327 = vector.broadcast %326 : vector<1x256xf32> to vector<64x256xf32>
    %328 = arith.addf %325, %327 : vector<64x256xf32>
    %329 = vector.extract_strided_slice %328 {offsets = [0, 0], sizes = [64, 128], strides = [1, 1]} : vector<64x256xf32> to vector<64x128xf32>
    %c0_51 = arith.constant 0 : index
    %c0_52 = arith.constant 0 : index
    %330 = vector.load %arg6[%c0_51, %c0_52] : memref<32x128xf32, #tpu.memory_space<vmem>>, vector<32x128xf32>
    %cst_53 = arith.constant 0.000000e+00 : f32
    %331 = vector.broadcast %cst_53 : f32 to vector<8x32xf32>
    %cst_54 = arith.constant 0.000000e+00 : f32
    %332 = vector.broadcast %cst_54 : f32 to vector<8x32xf32>
    %333 = vector.extract_strided_slice %329 {offsets = [0, 0], sizes = [8, 128], strides = [1, 1]} : vector<64x128xf32> to vector<8x128xf32>
    %cst_55 = arith.constant dense<0.000000e+00> : vector<8x128xf32>
    %334 = tpu.matmul %331, %330, %cst_55 {dimension_numbers = #tpu.dot_dimension_numbers<[1], [0], [0], [1], [0, 0, 1, 1], [], []>} : vector<8x32xf32>, vector<32x128xf32>, vector<8x128xf32> -> vector<8x128xf32>
    %335 = arith.addf %333, %334 : vector<8x128xf32>
    %336 = vector.extract_strided_slice %335 {offsets = [0, 0], sizes = [8, 96], strides = [1, 1]} : vector<8x128xf32> to vector<8x96xf32>
    %337 = arith.negf %336 : vector<8x96xf32>
    %338 = math.exp %337 : vector<8x96xf32>
    %cst_56 = arith.constant 1.000000e+00 : f32
    %339 = vector.broadcast %cst_56 : f32 to vector<8x96xf32>
    %340 = arith.addf %339, %338 : vector<8x96xf32>
    %341 = arith.divf %339, %340 : vector<8x96xf32>
    %342 = vector.extract_strided_slice %341 {offsets = [0, 0], sizes = [8, 32], strides = [1, 1]} : vector<8x96xf32> to vector<8x32xf32>
    %343 = vector.extract_strided_slice %341 {offsets = [0, 32], sizes = [8, 32], strides = [1, 1]} : vector<8x96xf32> to vector<8x32xf32>
    %344 = vector.extract_strided_slice %341 {offsets = [0, 64], sizes = [8, 32], strides = [1, 1]} : vector<8x96xf32> to vector<8x32xf32>
    %345 = vector.extract_strided_slice %335 {offsets = [0, 96], sizes = [8, 32], strides = [1, 1]} : vector<8x128xf32> to vector<8x32xf32>
    %346 = math.tanh %345 : vector<8x32xf32>
    %347 = arith.mulf %343, %332 : vector<8x32xf32>
    %348 = arith.mulf %342, %346 : vector<8x32xf32>
    %349 = arith.addf %347, %348 : vector<8x32xf32>
    %350 = math.tanh %349 : vector<8x32xf32>
    %351 = arith.mulf %344, %350 : vector<8x32xf32>
    %352 = vector.extract_strided_slice %329 {offsets = [8, 0], sizes = [8, 128], strides = [1, 1]} : vector<64x128xf32> to vector<8x128xf32>
    %cst_57 = arith.constant dense<0.000000e+00> : vector<8x128xf32>
    %353 = tpu.matmul %351, %330, %cst_57 {dimension_numbers = #tpu.dot_dimension_numbers<[1], [0], [0], [1], [0, 0, 1, 1], [], []>} : vector<8x32xf32>, vector<32x128xf32>, vector<8x128xf32> -> vector<8x128xf32>
    %354 = arith.addf %352, %353 : vector<8x128xf32>
    %355 = vector.extract_strided_slice %354 {offsets = [0, 0], sizes = [8, 96], strides = [1, 1]} : vector<8x128xf32> to vector<8x96xf32>
    %356 = arith.negf %355 : vector<8x96xf32>
    %357 = math.exp %356 : vector<8x96xf32>
    %cst_58 = arith.constant 1.000000e+00 : f32
    %358 = vector.broadcast %cst_58 : f32 to vector<8x96xf32>
    %359 = arith.addf %358, %357 : vector<8x96xf32>
    %360 = arith.divf %358, %359 : vector<8x96xf32>
    %361 = vector.extract_strided_slice %360 {offsets = [0, 0], sizes = [8, 32], strides = [1, 1]} : vector<8x96xf32> to vector<8x32xf32>
    %362 = vector.extract_strided_slice %360 {offsets = [0, 32], sizes = [8, 32], strides = [1, 1]} : vector<8x96xf32> to vector<8x32xf32>
    %363 = vector.extract_strided_slice %360 {offsets = [0, 64], sizes = [8, 32], strides = [1, 1]} : vector<8x96xf32> to vector<8x32xf32>
    %364 = vector.extract_strided_slice %354 {offsets = [0, 96], sizes = [8, 32], strides = [1, 1]} : vector<8x128xf32> to vector<8x32xf32>
    %365 = math.tanh %364 : vector<8x32xf32>
    %366 = arith.mulf %362, %349 : vector<8x32xf32>
    %367 = arith.mulf %361, %365 : vector<8x32xf32>
    %368 = arith.addf %366, %367 : vector<8x32xf32>
    %369 = math.tanh %368 : vector<8x32xf32>
    %370 = arith.mulf %363, %369 : vector<8x32xf32>
    %371 = vector.extract_strided_slice %329 {offsets = [16, 0], sizes = [8, 128], strides = [1, 1]} : vector<64x128xf32> to vector<8x128xf32>
    %cst_59 = arith.constant dense<0.000000e+00> : vector<8x128xf32>
    %372 = tpu.matmul %370, %330, %cst_59 {dimension_numbers = #tpu.dot_dimension_numbers<[1], [0], [0], [1], [0, 0, 1, 1], [], []>} : vector<8x32xf32>, vector<32x128xf32>, vector<8x128xf32> -> vector<8x128xf32>
    %373 = arith.addf %371, %372 : vector<8x128xf32>
    %374 = vector.extract_strided_slice %373 {offsets = [0, 0], sizes = [8, 96], strides = [1, 1]} : vector<8x128xf32> to vector<8x96xf32>
    %375 = arith.negf %374 : vector<8x96xf32>
    %376 = math.exp %375 : vector<8x96xf32>
    %cst_60 = arith.constant 1.000000e+00 : f32
    %377 = vector.broadcast %cst_60 : f32 to vector<8x96xf32>
    %378 = arith.addf %377, %376 : vector<8x96xf32>
    %379 = arith.divf %377, %378 : vector<8x96xf32>
    %380 = vector.extract_strided_slice %379 {offsets = [0, 0], sizes = [8, 32], strides = [1, 1]} : vector<8x96xf32> to vector<8x32xf32>
    %381 = vector.extract_strided_slice %379 {offsets = [0, 32], sizes = [8, 32], strides = [1, 1]} : vector<8x96xf32> to vector<8x32xf32>
    %382 = vector.extract_strided_slice %379 {offsets = [0, 64], sizes = [8, 32], strides = [1, 1]} : vector<8x96xf32> to vector<8x32xf32>
    %383 = vector.extract_strided_slice %373 {offsets = [0, 96], sizes = [8, 32], strides = [1, 1]} : vector<8x128xf32> to vector<8x32xf32>
    %384 = math.tanh %383 : vector<8x32xf32>
    %385 = arith.mulf %381, %368 : vector<8x32xf32>
    %386 = arith.mulf %380, %384 : vector<8x32xf32>
    %387 = arith.addf %385, %386 : vector<8x32xf32>
    %388 = math.tanh %387 : vector<8x32xf32>
    %389 = arith.mulf %382, %388 : vector<8x32xf32>
    %390 = vector.extract_strided_slice %329 {offsets = [24, 0], sizes = [8, 128], strides = [1, 1]} : vector<64x128xf32> to vector<8x128xf32>
    %cst_61 = arith.constant dense<0.000000e+00> : vector<8x128xf32>
    %391 = tpu.matmul %389, %330, %cst_61 {dimension_numbers = #tpu.dot_dimension_numbers<[1], [0], [0], [1], [0, 0, 1, 1], [], []>} : vector<8x32xf32>, vector<32x128xf32>, vector<8x128xf32> -> vector<8x128xf32>
    %392 = arith.addf %390, %391 : vector<8x128xf32>
    %393 = vector.extract_strided_slice %392 {offsets = [0, 0], sizes = [8, 96], strides = [1, 1]} : vector<8x128xf32> to vector<8x96xf32>
    %394 = arith.negf %393 : vector<8x96xf32>
    %395 = math.exp %394 : vector<8x96xf32>
    %cst_62 = arith.constant 1.000000e+00 : f32
    %396 = vector.broadcast %cst_62 : f32 to vector<8x96xf32>
    %397 = arith.addf %396, %395 : vector<8x96xf32>
    %398 = arith.divf %396, %397 : vector<8x96xf32>
    %399 = vector.extract_strided_slice %398 {offsets = [0, 0], sizes = [8, 32], strides = [1, 1]} : vector<8x96xf32> to vector<8x32xf32>
    %400 = vector.extract_strided_slice %398 {offsets = [0, 32], sizes = [8, 32], strides = [1, 1]} : vector<8x96xf32> to vector<8x32xf32>
    %401 = vector.extract_strided_slice %398 {offsets = [0, 64], sizes = [8, 32], strides = [1, 1]} : vector<8x96xf32> to vector<8x32xf32>
    %402 = vector.extract_strided_slice %392 {offsets = [0, 96], sizes = [8, 32], strides = [1, 1]} : vector<8x128xf32> to vector<8x32xf32>
    %403 = math.tanh %402 : vector<8x32xf32>
    %404 = arith.mulf %400, %387 : vector<8x32xf32>
    %405 = arith.mulf %399, %403 : vector<8x32xf32>
    %406 = arith.addf %404, %405 : vector<8x32xf32>
    %407 = math.tanh %406 : vector<8x32xf32>
    %408 = arith.mulf %401, %407 : vector<8x32xf32>
    %409 = vector.extract_strided_slice %329 {offsets = [32, 0], sizes = [8, 128], strides = [1, 1]} : vector<64x128xf32> to vector<8x128xf32>
    %cst_63 = arith.constant dense<0.000000e+00> : vector<8x128xf32>
    %410 = tpu.matmul %408, %330, %cst_63 {dimension_numbers = #tpu.dot_dimension_numbers<[1], [0], [0], [1], [0, 0, 1, 1], [], []>} : vector<8x32xf32>, vector<32x128xf32>, vector<8x128xf32> -> vector<8x128xf32>
    %411 = arith.addf %409, %410 : vector<8x128xf32>
    %412 = vector.extract_strided_slice %411 {offsets = [0, 0], sizes = [8, 96], strides = [1, 1]} : vector<8x128xf32> to vector<8x96xf32>
    %413 = arith.negf %412 : vector<8x96xf32>
    %414 = math.exp %413 : vector<8x96xf32>
    %cst_64 = arith.constant 1.000000e+00 : f32
    %415 = vector.broadcast %cst_64 : f32 to vector<8x96xf32>
    %416 = arith.addf %415, %414 : vector<8x96xf32>
    %417 = arith.divf %415, %416 : vector<8x96xf32>
    %418 = vector.extract_strided_slice %417 {offsets = [0, 0], sizes = [8, 32], strides = [1, 1]} : vector<8x96xf32> to vector<8x32xf32>
    %419 = vector.extract_strided_slice %417 {offsets = [0, 32], sizes = [8, 32], strides = [1, 1]} : vector<8x96xf32> to vector<8x32xf32>
    %420 = vector.extract_strided_slice %417 {offsets = [0, 64], sizes = [8, 32], strides = [1, 1]} : vector<8x96xf32> to vector<8x32xf32>
    %421 = vector.extract_strided_slice %411 {offsets = [0, 96], sizes = [8, 32], strides = [1, 1]} : vector<8x128xf32> to vector<8x32xf32>
    %422 = math.tanh %421 : vector<8x32xf32>
    %423 = arith.mulf %419, %406 : vector<8x32xf32>
    %424 = arith.mulf %418, %422 : vector<8x32xf32>
    %425 = arith.addf %423, %424 : vector<8x32xf32>
    %426 = math.tanh %425 : vector<8x32xf32>
    %427 = arith.mulf %420, %426 : vector<8x32xf32>
    %428 = vector.extract_strided_slice %329 {offsets = [40, 0], sizes = [8, 128], strides = [1, 1]} : vector<64x128xf32> to vector<8x128xf32>
    %cst_65 = arith.constant dense<0.000000e+00> : vector<8x128xf32>
    %429 = tpu.matmul %427, %330, %cst_65 {dimension_numbers = #tpu.dot_dimension_numbers<[1], [0], [0], [1], [0, 0, 1, 1], [], []>} : vector<8x32xf32>, vector<32x128xf32>, vector<8x128xf32> -> vector<8x128xf32>
    %430 = arith.addf %428, %429 : vector<8x128xf32>
    %431 = vector.extract_strided_slice %430 {offsets = [0, 0], sizes = [8, 96], strides = [1, 1]} : vector<8x128xf32> to vector<8x96xf32>
    %432 = arith.negf %431 : vector<8x96xf32>
    %433 = math.exp %432 : vector<8x96xf32>
    %cst_66 = arith.constant 1.000000e+00 : f32
    %434 = vector.broadcast %cst_66 : f32 to vector<8x96xf32>
    %435 = arith.addf %434, %433 : vector<8x96xf32>
    %436 = arith.divf %434, %435 : vector<8x96xf32>
    %437 = vector.extract_strided_slice %436 {offsets = [0, 0], sizes = [8, 32], strides = [1, 1]} : vector<8x96xf32> to vector<8x32xf32>
    %438 = vector.extract_strided_slice %436 {offsets = [0, 32], sizes = [8, 32], strides = [1, 1]} : vector<8x96xf32> to vector<8x32xf32>
    %439 = vector.extract_strided_slice %436 {offsets = [0, 64], sizes = [8, 32], strides = [1, 1]} : vector<8x96xf32> to vector<8x32xf32>
    %440 = vector.extract_strided_slice %430 {offsets = [0, 96], sizes = [8, 32], strides = [1, 1]} : vector<8x128xf32> to vector<8x32xf32>
    %441 = math.tanh %440 : vector<8x32xf32>
    %442 = arith.mulf %438, %425 : vector<8x32xf32>
    %443 = arith.mulf %437, %441 : vector<8x32xf32>
    %444 = arith.addf %442, %443 : vector<8x32xf32>
    %445 = math.tanh %444 : vector<8x32xf32>
    %446 = arith.mulf %439, %445 : vector<8x32xf32>
    %447 = vector.extract_strided_slice %329 {offsets = [48, 0], sizes = [8, 128], strides = [1, 1]} : vector<64x128xf32> to vector<8x128xf32>
    %cst_67 = arith.constant dense<0.000000e+00> : vector<8x128xf32>
    %448 = tpu.matmul %446, %330, %cst_67 {dimension_numbers = #tpu.dot_dimension_numbers<[1], [0], [0], [1], [0, 0, 1, 1], [], []>} : vector<8x32xf32>, vector<32x128xf32>, vector<8x128xf32> -> vector<8x128xf32>
    %449 = arith.addf %447, %448 : vector<8x128xf32>
    %450 = vector.extract_strided_slice %449 {offsets = [0, 0], sizes = [8, 96], strides = [1, 1]} : vector<8x128xf32> to vector<8x96xf32>
    %451 = arith.negf %450 : vector<8x96xf32>
    %452 = math.exp %451 : vector<8x96xf32>
    %cst_68 = arith.constant 1.000000e+00 : f32
    %453 = vector.broadcast %cst_68 : f32 to vector<8x96xf32>
    %454 = arith.addf %453, %452 : vector<8x96xf32>
    %455 = arith.divf %453, %454 : vector<8x96xf32>
    %456 = vector.extract_strided_slice %455 {offsets = [0, 0], sizes = [8, 32], strides = [1, 1]} : vector<8x96xf32> to vector<8x32xf32>
    %457 = vector.extract_strided_slice %455 {offsets = [0, 32], sizes = [8, 32], strides = [1, 1]} : vector<8x96xf32> to vector<8x32xf32>
    %458 = vector.extract_strided_slice %455 {offsets = [0, 64], sizes = [8, 32], strides = [1, 1]} : vector<8x96xf32> to vector<8x32xf32>
    %459 = vector.extract_strided_slice %449 {offsets = [0, 96], sizes = [8, 32], strides = [1, 1]} : vector<8x128xf32> to vector<8x32xf32>
    %460 = math.tanh %459 : vector<8x32xf32>
    %461 = arith.mulf %457, %444 : vector<8x32xf32>
    %462 = arith.mulf %456, %460 : vector<8x32xf32>
    %463 = arith.addf %461, %462 : vector<8x32xf32>
    %464 = math.tanh %463 : vector<8x32xf32>
    %465 = arith.mulf %458, %464 : vector<8x32xf32>
    %466 = vector.extract_strided_slice %329 {offsets = [56, 0], sizes = [8, 128], strides = [1, 1]} : vector<64x128xf32> to vector<8x128xf32>
    %cst_69 = arith.constant dense<0.000000e+00> : vector<8x128xf32>
    %467 = tpu.matmul %465, %330, %cst_69 {dimension_numbers = #tpu.dot_dimension_numbers<[1], [0], [0], [1], [0, 0, 1, 1], [], []>} : vector<8x32xf32>, vector<32x128xf32>, vector<8x128xf32> -> vector<8x128xf32>
    %468 = arith.addf %466, %467 : vector<8x128xf32>
    %469 = vector.extract_strided_slice %468 {offsets = [0, 0], sizes = [8, 96], strides = [1, 1]} : vector<8x128xf32> to vector<8x96xf32>
    %470 = arith.negf %469 : vector<8x96xf32>
    %471 = math.exp %470 : vector<8x96xf32>
    %cst_70 = arith.constant 1.000000e+00 : f32
    %472 = vector.broadcast %cst_70 : f32 to vector<8x96xf32>
    %473 = arith.addf %472, %471 : vector<8x96xf32>
    %474 = arith.divf %472, %473 : vector<8x96xf32>
    %475 = vector.extract_strided_slice %474 {offsets = [0, 0], sizes = [8, 32], strides = [1, 1]} : vector<8x96xf32> to vector<8x32xf32>
    %476 = vector.extract_strided_slice %474 {offsets = [0, 32], sizes = [8, 32], strides = [1, 1]} : vector<8x96xf32> to vector<8x32xf32>
    %477 = vector.extract_strided_slice %474 {offsets = [0, 64], sizes = [8, 32], strides = [1, 1]} : vector<8x96xf32> to vector<8x32xf32>
    %478 = vector.extract_strided_slice %468 {offsets = [0, 96], sizes = [8, 32], strides = [1, 1]} : vector<8x128xf32> to vector<8x32xf32>
    %479 = math.tanh %478 : vector<8x32xf32>
    %480 = arith.mulf %476, %463 : vector<8x32xf32>
    %481 = arith.mulf %475, %479 : vector<8x32xf32>
    %482 = arith.addf %480, %481 : vector<8x32xf32>
    %483 = math.tanh %482 : vector<8x32xf32>
    %484 = arith.mulf %477, %483 : vector<8x32xf32>
    %485 = vector.extract_strided_slice %328 {offsets = [0, 128], sizes = [64, 128], strides = [1, 1]} : vector<64x256xf32> to vector<64x128xf32>
    %c0_71 = arith.constant 0 : index
    %c0_72 = arith.constant 0 : index
    %486 = vector.load %arg7[%c0_71, %c0_72] : memref<32x128xf32, #tpu.memory_space<vmem>>, vector<32x128xf32>
    %cst_73 = arith.constant 0.000000e+00 : f32
    %487 = vector.broadcast %cst_73 : f32 to vector<8x32xf32>
    %cst_74 = arith.constant 0.000000e+00 : f32
    %488 = vector.broadcast %cst_74 : f32 to vector<8x32xf32>
    %489 = vector.extract_strided_slice %485 {offsets = [56, 0], sizes = [8, 128], strides = [1, 1]} : vector<64x128xf32> to vector<8x128xf32>
    %cst_75 = arith.constant dense<0.000000e+00> : vector<8x128xf32>
    %490 = tpu.matmul %487, %486, %cst_75 {dimension_numbers = #tpu.dot_dimension_numbers<[1], [0], [0], [1], [0, 0, 1, 1], [], []>} : vector<8x32xf32>, vector<32x128xf32>, vector<8x128xf32> -> vector<8x128xf32>
    %491 = arith.addf %489, %490 : vector<8x128xf32>
    %492 = vector.extract_strided_slice %491 {offsets = [0, 0], sizes = [8, 96], strides = [1, 1]} : vector<8x128xf32> to vector<8x96xf32>
    %493 = arith.negf %492 : vector<8x96xf32>
    %494 = math.exp %493 : vector<8x96xf32>
    %cst_76 = arith.constant 1.000000e+00 : f32
    %495 = vector.broadcast %cst_76 : f32 to vector<8x96xf32>
    %496 = arith.addf %495, %494 : vector<8x96xf32>
    %497 = arith.divf %495, %496 : vector<8x96xf32>
    %498 = vector.extract_strided_slice %497 {offsets = [0, 0], sizes = [8, 32], strides = [1, 1]} : vector<8x96xf32> to vector<8x32xf32>
    %499 = vector.extract_strided_slice %497 {offsets = [0, 32], sizes = [8, 32], strides = [1, 1]} : vector<8x96xf32> to vector<8x32xf32>
    %500 = vector.extract_strided_slice %497 {offsets = [0, 64], sizes = [8, 32], strides = [1, 1]} : vector<8x96xf32> to vector<8x32xf32>
    %501 = vector.extract_strided_slice %491 {offsets = [0, 96], sizes = [8, 32], strides = [1, 1]} : vector<8x128xf32> to vector<8x32xf32>
    %502 = math.tanh %501 : vector<8x32xf32>
    %503 = arith.mulf %499, %488 : vector<8x32xf32>
    %504 = arith.mulf %498, %502 : vector<8x32xf32>
    %505 = arith.addf %503, %504 : vector<8x32xf32>
    %506 = math.tanh %505 : vector<8x32xf32>
    %507 = arith.mulf %500, %506 : vector<8x32xf32>
    %c0_77 = arith.constant 0 : index
    %c0_78 = arith.constant 0 : index
    %508 = vector.load %arg9[%c0_77, %c0_78] : memref<64x10xf32, #tpu.memory_space<vmem>>, vector<64x10xf32>
    %509 = vector.extract_strided_slice %508 {offsets = [0, 0], sizes = [32, 10], strides = [1, 1]} : vector<64x10xf32> to vector<32x10xf32>
    %cst_79 = arith.constant dense<0.000000e+00> : vector<8x10xf32>
    %510 = tpu.matmul %484, %509, %cst_79 {dimension_numbers = #tpu.dot_dimension_numbers<[1], [0], [0], [1], [0, 0, 1, 1], [], []>} : vector<8x32xf32>, vector<32x10xf32>, vector<8x10xf32> -> vector<8x10xf32>
    %511 = vector.extract_strided_slice %508 {offsets = [32, 0], sizes = [32, 10], strides = [1, 1]} : vector<64x10xf32> to vector<32x10xf32>
    %cst_80 = arith.constant dense<0.000000e+00> : vector<8x10xf32>
    %512 = tpu.matmul %507, %511, %cst_80 {dimension_numbers = #tpu.dot_dimension_numbers<[1], [0], [0], [1], [0, 0, 1, 1], [], []>} : vector<8x32xf32>, vector<32x10xf32>, vector<8x10xf32> -> vector<8x10xf32>
    %513 = arith.addf %510, %512 : vector<8x10xf32>
    %c0_81 = arith.constant 0 : index
    %c0_82 = arith.constant 0 : index
    %514 = vector.load %arg10[%c0_81, %c0_82] : memref<1x10xf32, #tpu.memory_space<vmem>>, vector<1x10xf32>
    %515 = vector.broadcast %514 : vector<1x10xf32> to vector<8x10xf32>
    %516 = arith.addf %513, %515 : vector<8x10xf32>
    %c0_83 = arith.constant 0 : index
    %c0_84 = arith.constant 0 : index
    %517 = vector.load %arg11[%c0_83, %c0_84] : memref<8x10xf32, #tpu.memory_space<vmem>>, vector<8x10xf32>
    tpu.vector_store %arg11[%c0_83, %c0_84], %516 {strides = array<i32>} : memref<8x10xf32, #tpu.memory_space<vmem>>, vector<8x10xf32>,
    return
  }
}

</mosaic_0001>

<llo_original>
// kernel: blstm_forward.1
$region0: #{blstm_forward.1}
  #allocation0 [shape = 'u32[]', space=smem, size = 0x4, offset = 0x4, fixed_abs, tag = 'smem constant byte address 0x4 - core index']
  #allocation1 [shape = 'u32[144,128]{1,0:T(1,128)}', space=vmem, size = 0x12000, scoped, tag = 'internal scratch']
  %s0 = inlined_call_operand.vmem [shape: f32[64,28], index: 0, kind: input, shape index: {}]
  %s1 = inlined_call_operand.vmem [shape: f32[28,256], index: 1, kind: input, shape index: {}]
  %s2 = inlined_call_operand.vmem [shape: f32[32,128], index: 2, kind: input, shape index: {}]
  %s3 = inlined_call_operand.hbm [shape: f32[32,128], index: 3, kind: input, shape index: {}]
  %s4 = inlined_call_operand.vmem [shape: f32[1,256], index: 4, kind: input, shape index: {}]
  %s5 = inlined_call_operand.vmem [shape: f32[64,256], index: 5, kind: input, shape index: {}]
  %s6 = inlined_call_operand.hbm [shape: f32[32,128], index: 6, kind: input, shape index: {}]
  %s7 = inlined_call_operand.hbm [shape: f32[32,128], index: 7, kind: input, shape index: {}]
  %s8 = inlined_call_operand.vmem [shape: f32[1,256], index: 8, kind: input, shape index: {}]
  %s9 = inlined_call_operand.vmem [shape: f32[64,10], index: 9, kind: input, shape index: {}]
  %s10 = inlined_call_operand.vmem [shape: f32[1,10], index: 10, kind: input, shape index: {}]
  %s11 = inlined_call_operand.vmem [shape: f32[8,10], index: 11, kind: output, shape index: {}]
  %s12 = sld [smem:[#allocation0]]
  $region66: #{blstm_forward.1} parent=0
    _
  %s14 = ssub.s32 1, %s12
  %s15 = scalar_select 0, %s14, %s12
  $region1: #{blstm_forward.1} parent=0
    #allocation2 [shape = 'u8[16384]{0}', space=vmem, size = 0x4000, scoped, tag = 'input window, operand 3, single buffered']
    #allocation3 [shape = 's32[1]{0}', space=sflag, size = 0x4, scoped, tag = 'scoped memory for blstm_forward.1']
    #allocation4 [shape = 'u8[16384]{0}', space=vmem, size = 0x4000, scoped, tag = 'input window, operand 6, single buffered']
    #allocation5 [shape = 's32[1]{0}', space=sflag, size = 0x4, scoped, tag = 'scoped memory for blstm_forward.1']
    #allocation6 [shape = 'u8[16384]{0}', space=vmem, size = 0x4000, scoped, tag = 'input window, operand 7, single buffered']
    %16 = vsyncpa [#allocation3], 0
    %17 = vsyncpa [#allocation5], 0
    // Predicated region
    $region2: #{blstm_forward.1} parent=1 // pred_check
      _
    $region3: #{blstm_forward.1} parent=1 // pred_check_branch
      %19 = sbr.rel (0) target = $region5
    $region4: #{blstm_forward.1} parent=1 // pred_region
      _
    $region5: #{blstm_forward.1} parent=1 // pred_fallthru
      _
    // Predicated region
    $region6: #{blstm_forward.1} parent=1 // pred_check
      _
    $region7: #{blstm_forward.1} parent=1 // pred_check_branch
      %21 = sbr.rel (0) target = $region9
    $region8: #{blstm_forward.1} parent=1 // pred_region
      _
    $region9: #{blstm_forward.1} parent=1 // pred_fallthru
      _
    // Predicated region
    $region10: #{blstm_forward.1} parent=1 // pred_check
      _
    $region11: #{blstm_forward.1} parent=1 // pred_check_branch
      %23 = sbr.rel (0) target = $region13
    $region12: #{blstm_forward.1} parent=1 // pred_region
      _
    $region13: #{blstm_forward.1} parent=1 // pred_fallthru
      _
    // Predicated region
    $region14: #{blstm_forward.1} parent=1 // pred_check
      _
    $region15: #{blstm_forward.1} parent=1 // pred_check_branch
      %25 = sbr.rel (0) target = $region17
    $region16: #{blstm_forward.1} parent=1 // pred_region
      %s27 = ssub.s32 512, 512
      %28 = vsyncadd [#allocation3], %s27
      %s29 = sshll.u32 [#allocation2], 4
      %s30 = int_to_ptr.vmem [resolvable:$true] %s29
      %35 = dma.hbm_to_vmem [thread:$0]  %s3, 512, %s30, [#allocation3], 128, 128, 8
    $region17: #{blstm_forward.1} parent=1 // pred_fallthru
      _
    // Predicated region
    $region18: #{blstm_forward.1} parent=1 // pred_check
      _
    $region19: #{blstm_forward.1} parent=1 // pred_check_branch
      %37 = sbr.rel (0) target = $region21
    $region20: #{blstm_forward.1} parent=1 // pred_region
      _
    $region21: #{blstm_forward.1} parent=1 // pred_fallthru
      _
    // Predicated region
    $region22: #{blstm_forward.1} parent=1 // pred_check
      _
    $region23: #{blstm_forward.1} parent=1 // pred_check_branch
      %39 = sbr.rel (0) target = $region25
    $region24: #{blstm_forward.1} parent=1 // pred_region
      _
    $region25: #{blstm_forward.1} parent=1 // pred_fallthru
      _
    // Predicated region
    $region26: #{blstm_forward.1} parent=1 // pred_check
      _
    $region27: #{blstm_forward.1} parent=1 // pred_check_branch
      %41 = sbr.rel (0) target = $region29
    $region28: #{blstm_forward.1} parent=1 // pred_region
      %s43 = ssub.s32 512, 512
      %44 = vsyncadd [#allocation5], %s43
      %s45 = sshll.u32 [#allocation4], 4
      %s46 = int_to_ptr.vmem [resolvable:$true] %s45
      %51 = dma.hbm_to_vmem [thread:$0]  %s6, 512, %s46, [#allocation5], 128, 128, 8
    $region29: #{blstm_forward.1} parent=1 // pred_fallthru
      _
    // Predicated region
    $region30: #{blstm_forward.1} parent=1 // pred_check
      _
    $region31: #{blstm_forward.1} parent=1 // pred_check_branch
      %53 = sbr.rel (0) target = $region33
    $region32: #{blstm_forward.1} parent=1 // pred_region
      %s55 = ssub.s32 512, 512
      %56 = vsyncadd [#allocation5], %s55
      %s57 = sshll.u32 [#allocation6], 4
      %s58 = int_to_ptr.vmem [resolvable:$true] %s57
      %63 = dma.hbm_to_vmem [thread:$0]  %s7, 512, %s58, [#allocation5], 128, 128, 8
    $region33: #{blstm_forward.1} parent=1 // pred_fallthru
      _
    // Predicated region
    $region34: #{blstm_forward.1} parent=1 // pred_check
      _
    $region35: #{blstm_forward.1} parent=1 // pred_check_branch
      %65 = sbr.rel (0) target = $region37
    $region36: #{blstm_forward.1} parent=1 // pred_region
      _
    $region37: #{blstm_forward.1} parent=1 // pred_fallthru
      _
    // Predicated region
    $region38: #{blstm_forward.1} parent=1 // pred_check
      _
    $region39: #{blstm_forward.1} parent=1 // pred_check_branch
      %67 = sbr.rel (0) target = $region41
    $region40: #{blstm_forward.1} parent=1 // pred_region
      _
    $region41: #{blstm_forward.1} parent=1 // pred_fallthru
      _
    // Predicated region
    $region42: #{blstm_forward.1} parent=1 // pred_check
      _
    $region43: #{blstm_forward.1} parent=1 // pred_check_branch
      %69 = sbr.rel (0) target = $region45
    $region44: #{blstm_forward.1} parent=1 // pred_region
      _
    $region45: #{blstm_forward.1} parent=1 // pred_fallthru
      _
    // Predicated region
    $region46: #{blstm_forward.1} parent=1 // pred_check
      _
    $region47: #{blstm_forward.1} parent=1 // pred_check_branch
      %71 = sbr.rel (0) target = $region49
    $region48: #{blstm_forward.1} parent=1 // pred_region
      %72 = dma.done [#allocation3], 512
    $region49: #{blstm_forward.1} parent=1 // pred_fallthru
      _
    // Predicated region
    $region50: #{blstm_forward.1} parent=1 // pred_check
      _
    $region51: #{blstm_forward.1} parent=1 // pred_check_branch
      %74 = sbr.rel (0) target = $region53
    $region52: #{blstm_forward.1} parent=1 // pred_region
      %75 = dma.done [#allocation5], 512
    $region53: #{blstm_forward.1} parent=1 // pred_fallthru
      _
    // Predicated region
    $region54: #{blstm_forward.1} parent=1 // pred_check
      _
    $region55: #{blstm_forward.1} parent=1 // pred_check_branch
      %77 = sbr.rel (0) target = $region57
    $region56: #{blstm_forward.1} parent=1 // pred_region
      %78 = dma.done [#allocation5], 512
    $region57: #{blstm_forward.1} parent=1 // pred_fallthru
      _
    %v79 = vld [vmem:[%s0] sm:$0xff]
    %v80 = vld [vmem:[%s0 + $0x8] sm:$0xff]
    %v81 = vld [vmem:[%s0 + $0x10] sm:$0xff]
    %v82 = vld [vmem:[%s0 + $0x18] sm:$0xff]
    %v83 = vld [vmem:[%s0 + $0x20] sm:$0xff]
    %v84 = vld [vmem:[%s0 + $0x28] sm:$0xff]
    %v85 = vld [vmem:[%s0 + $0x30] sm:$0xff]
    %v86 = vld [vmem:[%s0 + $0x38] sm:$0xff]
    %v87 = vld [vmem:[%s1] sm:$0xff]
    %v88 = vld [vmem:[%s1 + $0x8] sm:$0xff]
    %v89 = vld [vmem:[%s1 + $0x10] sm:$0xff]
    %v90 = vld [vmem:[%s1 + $0x18] sm:$0xff]
    %v91 = vld [vmem:[%s1 + $0x20] sm:$0xff]
    %v92 = vld [vmem:[%s1 + $0x28] sm:$0xff]
    %v93 = vld [vmem:[%s1 + $0x30] sm:$0xf]
    %v94 = vld [vmem:[%s1 + $0x38] sm:$0xf]
    %v95 = vld [vmem:[%s4] sm:$0x3]
    %v97 = vlaneseq
    %v98 = vshrl.u32 %v97, 7
    %v99 = vsub.s32 0, %v98
    %v100 = vrot.slane %v95, %v99
    %v101 = vlaneseq
    %v102 = vshrl.u32 %v101, 7
    %v103 = vsub.s32 1, %v102
    %v104 = vrot.slane %v95, %v103
    %vm107 = vcmask 228352
    %v109 = vsel %vm107, %v79, 0
    %v112 = vsel %vm107, %v80, 0
    %v115 = vsel %vm107, %v81, 0
    %v118 = vsel %vm107, %v82, 0
    %v121 = vsel %vm107, %v83, 0
    %v124 = vsel %vm107, %v84, 0
    %v127 = vsel %vm107, %v85, 0
    %v130 = vsel %vm107, %v86, 0
    %vm132 = vcmask 1043456
    %v134 = vsel %vm132, %v93, 0
    %v137 = vsel %vm132, %v94, 0
    %139 = vmatprep.subr.mxu0 %v88
    %140 = vmatpush1.msra.mxu0 %v87
    %141 = vmatprep.subr.mxu0 %v90
    %142 = vmatpush1.msra.mxu0 %v89
    %143 = vmatprep.subr.mxu0 %v92
    %144 = vmatpush1.msra.mxu0 %v91
    %145 = vmatprep.subr.mxu0 %v137
    %146 = vmatpush1.msra.mxu0 %v134
    %147 = vmatprep.subr.mxu0 0.0
    %148 = vmatpush1.msra.mxu0 0.0
    %149 = vmatprep.subr.mxu0 0.0
    %150 = vmatpush1.msra.mxu0 0.0
    %151 = vmatprep.subr.mxu0 0.0
    %152 = vmatpush1.msra.mxu0 0.0
    %153 = vmatprep.subr.mxu0 0.0
    %154 = vmatpush1.msra.mxu0 0.0
    %155 = vmatprep.subr.mxu0 0.0
    %156 = vmatpush1.msra.mxu0 0.0
    %157 = vmatprep.subr.mxu0 0.0
    %158 = vmatpush1.msra.mxu0 0.0
    %159 = vmatprep.subr.mxu0 0.0
    %160 = vmatpush1.msra.mxu0 0.0
    %161 = vmatprep.subr.mxu0 0.0
    %162 = vmatpush1.msra.mxu0 0.0
    %163 = vmatprep.subr.mxu0 0.0
    %164 = vmatpush1.msra.mxu0 0.0
    %165 = vmatprep.subr.mxu0 0.0
    %166 = vmatpush1.msra.mxu0 0.0
    %167 = vmatprep.subr.mxu0 0.0
    %168 = vmatpush1.msra.mxu0 0.0
    %169 = vmatprep.subr.mxu0 0.0
    %170 = vmatpush1.msra.mxu0 0.0
    %171 = vmatprep.subr.mxu0 0.0
    %172 = vmatpush1.msra.mxu0 0.0
    %173 = vmatprep.subr.mxu0 0.0
    %174 = vmatpush1.msra.mxu0 0.0
    %175 = vmatprep.subr.mxu0 0.0
    %176 = vmatpush1.msra.mxu0 0.0
    %177 = vmatprep.subr.mxu0 0.0
    %178 = vmatpush1.msra.mxu0 0.0
    %179 = vmatprep.subr.mxu0 0.0
    %180 = vmatpush1.msra.mxu0 0.0
    %181 = vmatprep.subr.mxu0 0.0
    %182 = vmatpush1.msra.mxu0 0.0
    %183 = vmatprep.subr.mxu0 0.0
    %184 = vmatpush1.msra.mxu0 0.0
    %185 = vmatprep.subr.mxu0 0.0
    %186 = vmatpush1.msra.mxu0 0.0
    %187 = vmatprep.subr.mxu0 0.0
    %188 = vmatpush1.msra.mxu0 0.0
    %189 = vmatprep.subr.mxu0 0.0
    %190 = vmatpush1.msra.mxu0 0.0
    %191 = vmatprep.subr.mxu0 0.0
    %192 = vmatpush1.msra.mxu0 0.0
    %193 = vmatprep.subr.mxu0 0.0
    %194 = vmatpush1.msra.mxu0 0.0
    %195 = vmatprep.subr.mxu0 0.0
    %196 = vmatpush1.msra.mxu0 0.0
    %197 = vmatprep.subr.mxu0 0.0
    %198 = vmatpush1.msra.mxu0 0.0
    %199 = vmatprep.subr.mxu0 0.0
    %200 = vmatpush1.msra.mxu0 0.0
    %201 = vmatprep.subr.mxu0 0.0
    %202 = vmatpush1.msra.mxu0 0.0
    %203 = vmatprep.mubr.f32.mxu0 0.0
    %204 = vmatmul.mubr.f32.gmra.mrb[0].mxu0 %v109
    %v205 = vpop.f32.mrb[0].mxu0
    %v206 = vadd.f32 %v100, %v205
    %v207 = vpop.f32.mrb[0].mxu0
    %v208 = vadd.f32 %v104, %v207
    %209 = vmatprep.mubr.f32.mxu0 0.0
    %210 = vmatmul.mubr.f32.gmra.mrb[0].mxu0 %v112
    %v211 = vpop.f32.mrb[0].mxu0
    %v212 = vadd.f32 %v100, %v211
    %v213 = vpop.f32.mrb[0].mxu0
    %v214 = vadd.f32 %v104, %v213
    %215 = vmatprep.mubr.f32.mxu0 0.0
    %216 = vmatmul.mubr.f32.gmra.mrb[0].mxu0 %v115
    %v217 = vpop.f32.mrb[0].mxu0
    %v218 = vadd.f32 %v100, %v217
    %v219 = vpop.f32.mrb[0].mxu0
    %v220 = vadd.f32 %v104, %v219
    %221 = vmatprep.mubr.f32.mxu0 0.0
    %222 = vmatmul.mubr.f32.gmra.mrb[0].mxu0 %v118
    %v223 = vpop.f32.mrb[0].mxu0
    %v224 = vadd.f32 %v100, %v223
    %v225 = vpop.f32.mrb[0].mxu0
    %v226 = vadd.f32 %v104, %v225
    %227 = vmatprep.mubr.f32.mxu0 0.0
    %228 = vmatmul.mubr.f32.gmra.mrb[0].mxu0 %v121
    %v229 = vpop.f32.mrb[0].mxu0
    %v230 = vadd.f32 %v100, %v229
    %v231 = vpop.f32.mrb[0].mxu0
    %v232 = vadd.f32 %v104, %v231
    %233 = vmatprep.mubr.f32.mxu0 0.0
    %234 = vmatmul.mubr.f32.gmra.mrb[0].mxu0 %v124
    %v235 = vpop.f32.mrb[0].mxu0
    %v236 = vadd.f32 %v100, %v235
    %v237 = vpop.f32.mrb[0].mxu0
    %v238 = vadd.f32 %v104, %v237
    %239 = vmatprep.mubr.f32.mxu0 0.0
    %240 = vmatmul.mubr.f32.gmra.mrb[0].mxu0 %v127
    %v241 = vpop.f32.mrb[0].mxu0
    %v242 = vadd.f32 %v100, %v241
    %v243 = vpop.f32.mrb[0].mxu0
    %v244 = vadd.f32 %v104, %v243
    %245 = vmatprep.mubr.f32.mxu0 0.0
    %246 = vmatmul.mubr.f32.gmra.mrb[0].mxu0 %v130
    %v247 = vpop.f32.mrb[0].mxu0
    %v248 = vadd.f32 %v100, %v247
    %v249 = vpop.f32.mrb[0].mxu0
    %v250 = vadd.f32 %v104, %v249
    %251 = vdwg.mxu0
    %v252 = vld [vmem:[%s2] sm:$0xff]
    %v253 = vld [vmem:[%s2 + $0x8] sm:$0xff]
    %v254 = vld [vmem:[%s2 + $0x10] sm:$0xff]
    %v255 = vld [vmem:[%s2 + $0x18] sm:$0xff]
    %vm256 = vcmask 261120
    %v258 = vsel %vm256, 0.0, 0
    %260 = vmatprep.subr.mxu0 0.0
    %261 = vmatpush1.msra.mxu0 %v252
    %262 = vmatprep.subr.mxu0 0.0
    %263 = vmatpush1.msra.mxu0 %v253
    %264 = vmatprep.subr.mxu0 0.0
    %265 = vmatpush1.msra.mxu0 %v254
    %266 = vmatprep.subr.mxu0 0.0
    %267 = vmatpush1.msra.mxu0 %v255
    %268 = vmatprep.subr.mxu0 0.0
    %269 = vmatpush1.msra.mxu0 0.0
    %270 = vmatprep.subr.mxu0 0.0
    %271 = vmatpush1.msra.mxu0 0.0
    %272 = vmatprep.subr.mxu0 0.0
    %273 = vmatpush1.msra.mxu0 0.0
    %274 = vmatprep.subr.mxu0 0.0
    %275 = vmatpush1.msra.mxu0 0.0
    %276 = vmatprep.subr.mxu0 0.0
    %277 = vmatpush1.msra.mxu0 0.0
    %278 = vmatprep.subr.mxu0 0.0
    %279 = vmatpush1.msra.mxu0 0.0
    %280 = vmatprep.subr.mxu0 0.0
    %281 = vmatpush1.msra.mxu0 0.0
    %282 = vmatprep.subr.mxu0 0.0
    %283 = vmatpush1.msra.mxu0 0.0
    %284 = vmatprep.subr.mxu0 0.0
    %285 = vmatpush1.msra.mxu0 0.0
    %286 = vmatprep.subr.mxu0 0.0
    %287 = vmatpush1.msra.mxu0 0.0
    %288 = vmatprep.subr.mxu0 0.0
    %289 = vmatpush1.msra.mxu0 0.0
    %290 = vmatprep.subr.mxu0 0.0
    %291 = vmatpush1.msra.mxu0 0.0
    %292 = vmatprep.subr.mxu0 0.0
    %293 = vmatpush1.msra.mxu0 0.0
    %294 = vmatprep.subr.mxu0 0.0
    %295 = vmatpush1.msra.mxu0 0.0
    %296 = vmatprep.subr.mxu0 0.0
    %297 = vmatpush1.msra.mxu0 0.0
    %298 = vmatprep.subr.mxu0 0.0
    %299 = vmatpush1.msra.mxu0 0.0
    %300 = vmatprep.subr.mxu0 0.0
    %301 = vmatpush1.msra.mxu0 0.0
    %302 = vmatprep.subr.mxu0 0.0
    %303 = vmatpush1.msra.mxu0 0.0
    %304 = vmatprep.subr.mxu0 0.0
    %305 = vmatpush1.msra.mxu0 0.0
    %306 = vmatprep.subr.mxu0 0.0
    %307 = vmatpush1.msra.mxu0 0.0
    %308 = vmatprep.subr.mxu0 0.0
    %309 = vmatpush1.msra.mxu0 0.0
    %310 = vmatprep.subr.mxu0 0.0
    %311 = vmatpush1.msra.mxu0 0.0
    %312 = vmatprep.subr.mxu0 0.0
    %313 = vmatpush1.msra.mxu0 0.0
    %314 = vmatprep.subr.mxu0 0.0
    %315 = vmatpush1.msra.mxu0 0.0
    %316 = vmatprep.subr.mxu0 0.0
    %317 = vmatpush1.msra.mxu0 0.0
    %318 = vmatprep.subr.mxu0 0.0
    %319 = vmatpush1.msra.mxu0 0.0
    %320 = vmatprep.subr.mxu0 0.0
    %321 = vmatpush1.msra.mxu0 0.0
    %322 = vmatprep.subr.mxu0 0.0
    %323 = vmatpush1.msra.mxu0 0.0
    %324 = vmatprep.mubr.f32.mxu0 0.0
    %325 = vmatmul.mubr.f32.gmra.mrb[0].mxu0 %v258
    %v326 = vpop.f32.mrb[0].mxu0
    %v327 = vadd.f32 0.0, %v326
    %v328 = vpop.f32.mrb[0].mxu0
    %329 = vdwg.mxu0
    %v330 = vadd.f32 %v206, %v327
    %v331 = vxor.u32 %v330, 2147483648
    %v332 = vmul.f32 %v331, 1.442695
    %v333 = vpow.pop %v332
    %v334 = vadd.f32 %v333, 1.0
    %v335 = vrcp.pop %v334
    %v336 = vmul.f32 1.0, %v335
    %v337 = vtanh.pop %v330
    %v338 = vmul.f32 %v336, 0.0
    %340 = vrot.lane.b32.xlu0 %v337, 32
    %v341 = vpop.permute.xlu0 %340
    %v343 = vmul.f32 %v336, %v341
    %345 = vrot.lane.b32.xlu0 %v343, 32
    %v346 = vpop.permute.xlu0 %345
    %v348 = vadd.f32 %v338, %v346
    %v349 = vtanh.pop %v348
    %351 = vrot.lane.b32.xlu0 %v349, 32
    %v352 = vpop.permute.xlu0 %351
    %v354 = vmul.f32 %v336, %v352
    %356 = vrot.lane.b32.xlu0 %v354, 64
    %v357 = vpop.permute.xlu0 %356
    %v358 = vsel %vm256, %v357, 0
    %360 = vmatprep.subr.mxu0 0.0
    %361 = vmatpush1.msra.mxu0 %v252
    %362 = vmatprep.subr.mxu0 0.0
    %363 = vmatpush1.msra.mxu0 %v253
    %364 = vmatprep.subr.mxu0 0.0
    %365 = vmatpush1.msra.mxu0 %v254
    %366 = vmatprep.subr.mxu0 0.0
    %367 = vmatpush1.msra.mxu0 %v255
    %368 = vmatprep.subr.mxu0 0.0
    %369 = vmatpush1.msra.mxu0 0.0
    %370 = vmatprep.subr.mxu0 0.0
    %371 = vmatpush1.msra.mxu0 0.0
    %372 = vmatprep.subr.mxu0 0.0
    %373 = vmatpush1.msra.mxu0 0.0
    %374 = vmatprep.subr.mxu0 0.0
    %375 = vmatpush1.msra.mxu0 0.0
    %376 = vmatprep.subr.mxu0 0.0
    %377 = vmatpush1.msra.mxu0 0.0
    %378 = vmatprep.subr.mxu0 0.0
    %379 = vmatpush1.msra.mxu0 0.0
    %380 = vmatprep.subr.mxu0 0.0
    %381 = vmatpush1.msra.mxu0 0.0
    %382 = vmatprep.subr.mxu0 0.0
    %383 = vmatpush1.msra.mxu0 0.0
    %384 = vmatprep.subr.mxu0 0.0
    %385 = vmatpush1.msra.mxu0 0.0
    %386 = vmatprep.subr.mxu0 0.0
    %387 = vmatpush1.msra.mxu0 0.0
    %388 = vmatprep.subr.mxu0 0.0
    %389 = vmatpush1.msra.mxu0 0.0
    %390 = vmatprep.subr.mxu0 0.0
    %391 = vmatpush1.msra.mxu0 0.0
    %392 = vmatprep.subr.mxu0 0.0
    %393 = vmatpush1.msra.mxu0 0.0
    %394 = vmatprep.subr.mxu0 0.0
    %395 = vmatpush1.msra.mxu0 0.0
    %396 = vmatprep.subr.mxu0 0.0
    %397 = vmatpush1.msra.mxu0 0.0
    %398 = vmatprep.subr.mxu0 0.0
    %399 = vmatpush1.msra.mxu0 0.0
    %400 = vmatprep.subr.mxu0 0.0
    %401 = vmatpush1.msra.mxu0 0.0
    %402 = vmatprep.subr.mxu0 0.0
    %403 = vmatpush1.msra.mxu0 0.0
    %404 = vmatprep.subr.mxu0 0.0
    %405 = vmatpush1.msra.mxu0 0.0
    %406 = vmatprep.subr.mxu0 0.0
    %407 = vmatpush1.msra.mxu0 0.0
    %408 = vmatprep.subr.mxu0 0.0
    %409 = vmatpush1.msra.mxu0 0.0
    %410 = vmatprep.subr.mxu0 0.0
    %411 = vmatpush1.msra.mxu0 0.0
    %412 = vmatprep.subr.mxu0 0.0
    %413 = vmatpush1.msra.mxu0 0.0
    %414 = vmatprep.subr.mxu0 0.0
    %415 = vmatpush1.msra.mxu0 0.0
    %416 = vmatprep.subr.mxu0 0.0
    %417 = vmatpush1.msra.mxu0 0.0
    %418 = vmatprep.subr.mxu0 0.0
    %419 = vmatpush1.msra.mxu0 0.0
    %420 = vmatprep.subr.mxu0 0.0
    %421 = vmatpush1.msra.mxu0 0.0
    %422 = vmatprep.subr.mxu0 0.0
    %423 = vmatpush1.msra.mxu0 0.0
    %424 = vmatprep.mubr.f32.mxu0 0.0
    %425 = vmatmul.mubr.f32.gmra.mrb[0].mxu0 %v358
    %v426 = vpop.f32.mrb[0].mxu0
    %v427 = vadd.f32 0.0, %v426
    %v428 = vpop.f32.mrb[0].mxu0
    %429 = vdwg.mxu0
    %v430 = vadd.f32 %v212, %v427
    %v431 = vxor.u32 %v430, 2147483648
    %v432 = vmul.f32 %v431, 1.442695
    %v433 = vpow.pop %v432
    %v434 = vadd.f32 %v433, 1.0
    %v435 = vrcp.pop %v434
    %v436 = vmul.f32 1.0, %v435
    %v437 = vtanh.pop %v430
    %v438 = vmul.f32 %v436, %v348
    %440 = vrot.lane.b32.xlu0 %v437, 32
    %v441 = vpop.permute.xlu0 %440
    %v443 = vmul.f32 %v436, %v441
    %445 = vrot.lane.b32.xlu0 %v443, 32
    %v446 = vpop.permute.xlu0 %445
    %v448 = vadd.f32 %v438, %v446
    %v449 = vtanh.pop %v448
    %451 = vrot.lane.b32.xlu0 %v449, 32
    %v452 = vpop.permute.xlu0 %451
    %v454 = vmul.f32 %v436, %v452
    %456 = vrot.lane.b32.xlu0 %v454, 64
    %v457 = vpop.permute.xlu0 %456
    %v458 = vsel %vm256, %v457, 0
    %460 = vmatprep.subr.mxu0 0.0
    %461 = vmatpush1.msra.mxu0 %v252
    %462 = vmatprep.subr.mxu0 0.0
    %463 = vmatpush1.msra.mxu0 %v253
    %464 = vmatprep.subr.mxu0 0.0
    %465 = vmatpush1.msra.mxu0 %v254
    %466 = vmatprep.subr.mxu0 0.0
    %467 = vmatpush1.msra.mxu0 %v255
    %468 = vmatprep.subr.mxu0 0.0
    %469 = vmatpush1.msra.mxu0 0.0
    %470 = vmatprep.subr.mxu0 0.0
    %471 = vmatpush1.msra.mxu0 0.0
    %472 = vmatprep.subr.mxu0 0.0
    %473 = vmatpush1.msra.mxu0 0.0
    %474 = vmatprep.subr.mxu0 0.0
    %475 = vmatpush1.msra.mxu0 0.0
    %476 = vmatprep.subr.mxu0 0.0
    %477 = vmatpush1.msra.mxu0 0.0
    %478 = vmatprep.subr.mxu0 0.0
    %479 = vmatpush1.msra.mxu0 0.0
    %480 = vmatprep.subr.mxu0 0.0
    %481 = vmatpush1.msra.mxu0 0.0
    %482 = vmatprep.subr.mxu0 0.0
    %483 = vmatpush1.msra.mxu0 0.0
    %484 = vmatprep.subr.mxu0 0.0
    %485 = vmatpush1.msra.mxu0 0.0
    %486 = vmatprep.subr.mxu0 0.0
    %487 = vmatpush1.msra.mxu0 0.0
    %488 = vmatprep.subr.mxu0 0.0
    %489 = vmatpush1.msra.mxu0 0.0
    %490 = vmatprep.subr.mxu0 0.0
    %491 = vmatpush1.msra.mxu0 0.0
    %492 = vmatprep.subr.mxu0 0.0
    %493 = vmatpush1.msra.mxu0 0.0
    %494 = vmatprep.subr.mxu0 0.0
    %495 = vmatpush1.msra.mxu0 0.0
    %496 = vmatprep.subr.mxu0 0.0
    %497 = vmatpush1.msra.mxu0 0.0
    %498 = vmatprep.subr.mxu0 0.0
    %499 = vmatpush1.msra.mxu0 0.0
    %500 = vmatprep.subr.mxu0 0.0
    %501 = vmatpush1.msra.mxu0 0.0
    %502 = vmatprep.subr.mxu0 0.0
    %503 = vmatpush1.msra.mxu0 0.0
    %504 = vmatprep.subr.mxu0 0.0
    %505 = vmatpush1.msra.mxu0 0.0
    %506 = vmatprep.subr.mxu0 0.0
    %507 = vmatpush1.msra.mxu0 0.0
    %508 = vmatprep.subr.mxu0 0.0
    %509 = vmatpush1.msra.mxu0 0.0
    %510 = vmatprep.subr.mxu0 0.0
    %511 = vmatpush1.msra.mxu0 0.0
    %512 = vmatprep.subr.mxu0 0.0
    %513 = vmatpush1.msra.mxu0 0.0
    %514 = vmatprep.subr.mxu0 0.0
    %515 = vmatpush1.msra.mxu0 0.0
    %516 = vmatprep.subr.mxu0 0.0
    %517 = vmatpush1.msra.mxu0 0.0
    %518 = vmatprep.subr.mxu0 0.0
    %519 = vmatpush1.msra.mxu0 0.0
    %520 = vmatprep.subr.mxu0 0.0
    %521 = vmatpush1.msra.mxu0 0.0
    %522 = vmatprep.subr.mxu0 0.0
    %523 = vmatpush1.msra.mxu0 0.0
    %524 = vmatprep.mubr.f32.mxu0 0.0
    %525 = vmatmul.mubr.f32.gmra.mrb[0].mxu0 %v458
    %v526 = vpop.f32.mrb[0].mxu0
    %v527 = vadd.f32 0.0, %v526
    %v528 = vpop.f32.mrb[0].mxu0
    %529 = vdwg.mxu0
    %v530 = vadd.f32 %v218, %v527
    %v531 = vxor.u32 %v530, 2147483648
    %v532 = vmul.f32 %v531, 1.442695
    %v533 = vpow.pop %v532
    %v534 = vadd.f32 %v533, 1.0
    %v535 = vrcp.pop %v534
    %v536 = vmul.f32 1.0, %v535
    %v537 = vtanh.pop %v530
    %v538 = vmul.f32 %v536, %v448
    %540 = vrot.lane.b32.xlu0 %v537, 32
    %v541 = vpop.permute.xlu0 %540
    %v543 = vmul.f32 %v536, %v541
    %545 = vrot.lane.b32.xlu0 %v543, 32
    %v546 = vpop.permute.xlu0 %545
    %v548 = vadd.f32 %v538, %v546
    %v549 = vtanh.pop %v548
    %551 = vrot.lane.b32.xlu0 %v549, 32
    %v552 = vpop.permute.xlu0 %551
    %v554 = vmul.f32 %v536, %v552
    %556 = vrot.lane.b32.xlu0 %v554, 64
    %v557 = vpop.permute.xlu0 %556
    %v558 = vsel %vm256, %v557, 0
    %560 = vmatprep.subr.mxu0 0.0
    %561 = vmatpush1.msra.mxu0 %v252
    %562 = vmatprep.subr.mxu0 0.0
    %563 = vmatpush1.msra.mxu0 %v253
    %564 = vmatprep.subr.mxu0 0.0
    %565 = vmatpush1.msra.mxu0 %v254
    %566 = vmatprep.subr.mxu0 0.0
    %567 = vmatpush1.msra.mxu0 %v255
    %568 = vmatprep.subr.mxu0 0.0
    %569 = vmatpush1.msra.mxu0 0.0
    %570 = vmatprep.subr.mxu0 0.0
    %571 = vmatpush1.msra.mxu0 0.0
    %572 = vmatprep.subr.mxu0 0.0
    %573 = vmatpush1.msra.mxu0 0.0
    %574 = vmatprep.subr.mxu0 0.0
    %575 = vmatpush1.msra.mxu0 0.0
    %576 = vmatprep.subr.mxu0 0.0
    %577 = vmatpush1.msra.mxu0 0.0
    %578 = vmatprep.subr.mxu0 0.0
    %579 = vmatpush1.msra.mxu0 0.0
    %580 = vmatprep.subr.mxu0 0.0
    %581 = vmatpush1.msra.mxu0 0.0
    %582 = vmatprep.subr.mxu0 0.0
    %583 = vmatpush1.msra.mxu0 0.0
    %584 = vmatprep.subr.mxu0 0.0
    %585 = vmatpush1.msra.mxu0 0.0
    %586 = vmatprep.subr.mxu0 0.0
    %587 = vmatpush1.msra.mxu0 0.0
    %588 = vmatprep.subr.mxu0 0.0
    %589 = vmatpush1.msra.mxu0 0.0
    %590 = vmatprep.subr.mxu0 0.0
    %591 = vmatpush1.msra.mxu0 0.0
    %592 = vmatprep.subr.mxu0 0.0
    %593 = vmatpush1.msra.mxu0 0.0
    %594 = vmatprep.subr.mxu0 0.0
    %595 = vmatpush1.msra.mxu0 0.0
    %596 = vmatprep.subr.mxu0 0.0
    %597 = vmatpush1.msra.mxu0 0.0
    %598 = vmatprep.subr.mxu0 0.0
    %599 = vmatpush1.msra.mxu0 0.0
    %600 = vmatprep.subr.mxu0 0.0
    %601 = vmatpush1.msra.mxu0 0.0
    %602 = vmatprep.subr.mxu0 0.0
    %603 = vmatpush1.msra.mxu0 0.0
    %604 = vmatprep.subr.mxu0 0.0
    %605 = vmatpush1.msra.mxu0 0.0
    %606 = vmatprep.subr.mxu0 0.0
    %607 = vmatpush1.msra.mxu0 0.0
    %608 = vmatprep.subr.mxu0 0.0
    %609 = vmatpush1.msra.mxu0 0.0
    %610 = vmatprep.subr.mxu0 0.0
    %611 = vmatpush1.msra.mxu0 0.0
    %612 = vmatprep.subr.mxu0 0.0
    %613 = vmatpush1.msra.mxu0 0.0
    %614 = vmatprep.subr.mxu0 0.0
    %615 = vmatpush1.msra.mxu0 0.0
    %616 = vmatprep.subr.mxu0 0.0
    %617 = vmatpush1.msra.mxu0 0.0
    %618 = vmatprep.subr.mxu0 0.0
    %619 = vmatpush1.msra.mxu0 0.0
    %620 = vmatprep.subr.mxu0 0.0
    %621 = vmatpush1.msra.mxu0 0.0
    %622 = vmatprep.subr.mxu0 0.0
    %623 = vmatpush1.msra.mxu0 0.0
    %624 = vmatprep.mubr.f32.mxu0 0.0
    %625 = vmatmul.mubr.f32.gmra.mrb[0].mxu0 %v558
    %v626 = vpop.f32.mrb[0].mxu0
    %v627 = vadd.f32 0.0, %v626
    %v628 = vpop.f32.mrb[0].mxu0
    %629 = vdwg.mxu0
    %v630 = vadd.f32 %v224, %v627
    %v631 = vxor.u32 %v630, 2147483648
    %v632 = vmul.f32 %v631, 1.442695
    %v633 = vpow.pop %v632
    %v634 = vadd.f32 %v633, 1.0
    %v635 = vrcp.pop %v634
    %v636 = vmul.f32 1.0, %v635
    %v637 = vtanh.pop %v630
    %v638 = vmul.f32 %v636, %v548
    %640 = vrot.lane.b32.xlu0 %v637, 32
    %v641 = vpop.permute.xlu0 %640
    %v643 = vmul.f32 %v636, %v641
    %645 = vrot.lane.b32.xlu0 %v643, 32
    %v646 = vpop.permute.xlu0 %645
    %v648 = vadd.f32 %v638, %v646
    %v649 = vtanh.pop %v648
    %651 = vrot.lane.b32.xlu0 %v649, 32
    %v652 = vpop.permute.xlu0 %651
    %v654 = vmul.f32 %v636, %v652
    %656 = vrot.lane.b32.xlu0 %v654, 64
    %v657 = vpop.permute.xlu0 %656
    %v658 = vsel %vm256, %v657, 0
    %660 = vmatprep.subr.mxu0 0.0
    %661 = vmatpush1.msra.mxu0 %v252
    %662 = vmatprep.subr.mxu0 0.0
    %663 = vmatpush1.msra.mxu0 %v253
    %664 = vmatprep.subr.mxu0 0.0
    %665 = vmatpush1.msra.mxu0 %v254
    %666 = vmatprep.subr.mxu0 0.0
    %667 = vmatpush1.msra.mxu0 %v255
    %668 = vmatprep.subr.mxu0 0.0
    %669 = vmatpush1.msra.mxu0 0.0
    %670 = vmatprep.subr.mxu0 0.0
    %671 = vmatpush1.msra.mxu0 0.0
    %672 = vmatprep.subr.mxu0 0.0
    %673 = vmatpush1.msra.mxu0 0.0
    %674 = vmatprep.subr.mxu0 0.0
    %675 = vmatpush1.msra.mxu0 0.0
    %676 = vmatprep.subr.mxu0 0.0
    %677 = vmatpush1.msra.mxu0 0.0
    %678 = vmatprep.subr.mxu0 0.0
    %679 = vmatpush1.msra.mxu0 0.0
    %680 = vmatprep.subr.mxu0 0.0
    %681 = vmatpush1.msra.mxu0 0.0
    %682 = vmatprep.subr.mxu0 0.0
    %683 = vmatpush1.msra.mxu0 0.0
    %684 = vmatprep.subr.mxu0 0.0
    %685 = vmatpush1.msra.mxu0 0.0
    %686 = vmatprep.subr.mxu0 0.0
    %687 = vmatpush1.msra.mxu0 0.0
    %688 = vmatprep.subr.mxu0 0.0
    %689 = vmatpush1.msra.mxu0 0.0
    %690 = vmatprep.subr.mxu0 0.0
    %691 = vmatpush1.msra.mxu0 0.0
    %692 = vmatprep.subr.mxu0 0.0
    %693 = vmatpush1.msra.mxu0 0.0
    %694 = vmatprep.subr.mxu0 0.0
    %695 = vmatpush1.msra.mxu0 0.0
    %696 = vmatprep.subr.mxu0 0.0
    %697 = vmatpush1.msra.mxu0 0.0
    %698 = vmatprep.subr.mxu0 0.0
    %699 = vmatpush1.msra.mxu0 0.0
    %700 = vmatprep.subr.mxu0 0.0
    %701 = vmatpush1.msra.mxu0 0.0
    %702 = vmatprep.subr.mxu0 0.0
    %703 = vmatpush1.msra.mxu0 0.0
    %704 = vmatprep.subr.mxu0 0.0
    %705 = vmatpush1.msra.mxu0 0.0
    %706 = vmatprep.subr.mxu0 0.0
    %707 = vmatpush1.msra.mxu0 0.0
    %708 = vmatprep.subr.mxu0 0.0
    %709 = vmatpush1.msra.mxu0 0.0
    %710 = vmatprep.subr.mxu0 0.0
    %711 = vmatpush1.msra.mxu0 0.0
    %712 = vmatprep.subr.mxu0 0.0
    %713 = vmatpush1.msra.mxu0 0.0
    %714 = vmatprep.subr.mxu0 0.0
    %715 = vmatpush1.msra.mxu0 0.0
    %716 = vmatprep.subr.mxu0 0.0
    %717 = vmatpush1.msra.mxu0 0.0
    %718 = vmatprep.subr.mxu0 0.0
    %719 = vmatpush1.msra.mxu0 0.0
    %720 = vmatprep.subr.mxu0 0.0
    %721 = vmatpush1.msra.mxu0 0.0
    %722 = vmatprep.subr.mxu0 0.0
    %723 = vmatpush1.msra.mxu0 0.0
    %724 = vmatprep.mubr.f32.mxu0 0.0
    %725 = vmatmul.mubr.f32.gmra.mrb[0].mxu0 %v658
    %v726 = vpop.f32.mrb[0].mxu0
    %v727 = vadd.f32 0.0, %v726
    %v728 = vpop.f32.mrb[0].mxu0
    %729 = vdwg.mxu0
    %v730 = vadd.f32 %v230, %v727
    %v731 = vxor.u32 %v730, 2147483648
    %v732 = vmul.f32 %v731, 1.442695
    %v733 = vpow.pop %v732
    %v734 = vadd.f32 %v733, 1.0
    %v735 = vrcp.pop %v734
    %v736 = vmul.f32 1.0, %v735
    %v737 = vtanh.pop %v730
    %v738 = vmul.f32 %v736, %v648
    %740 = vrot.lane.b32.xlu0 %v737, 32
    %v741 = vpop.permute.xlu0 %740
    %v743 = vmul.f32 %v736, %v741
    %745 = vrot.lane.b32.xlu0 %v743, 32
    %v746 = vpop.permute.xlu0 %745
    %v748 = vadd.f32 %v738, %v746
    %v749 = vtanh.pop %v748
    %751 = vrot.lane.b32.xlu0 %v749, 32
    %v752 = vpop.permute.xlu0 %751
    %v754 = vmul.f32 %v736, %v752
    %756 = vrot.lane.b32.xlu0 %v754, 64
    %v757 = vpop.permute.xlu0 %756
    %v758 = vsel %vm256, %v757, 0
    %760 = vmatprep.subr.mxu0 0.0
    %761 = vmatpush1.msra.mxu0 %v252
    %762 = vmatprep.subr.mxu0 0.0
    %763 = vmatpush1.msra.mxu0 %v253
    %764 = vmatprep.subr.mxu0 0.0
    %765 = vmatpush1.msra.mxu0 %v254
    %766 = vmatprep.subr.mxu0 0.0
    %767 = vmatpush1.msra.mxu0 %v255
    %768 = vmatprep.subr.mxu0 0.0
    %769 = vmatpush1.msra.mxu0 0.0
    %770 = vmatprep.subr.mxu0 0.0
    %771 = vmatpush1.msra.mxu0 0.0
    %772 = vmatprep.subr.mxu0 0.0
    %773 = vmatpush1.msra.mxu0 0.0
    %774 = vmatprep.subr.mxu0 0.0
    %775 = vmatpush1.msra.mxu0 0.0
    %776 = vmatprep.subr.mxu0 0.0
    %777 = vmatpush1.msra.mxu0 0.0
    %778 = vmatprep.subr.mxu0 0.0
    %779 = vmatpush1.msra.mxu0 0.0
    %780 = vmatprep.subr.mxu0 0.0
    %781 = vmatpush1.msra.mxu0 0.0
    %782 = vmatprep.subr.mxu0 0.0
    %783 = vmatpush1.msra.mxu0 0.0
    %784 = vmatprep.subr.mxu0 0.0
    %785 = vmatpush1.msra.mxu0 0.0
    %786 = vmatprep.subr.mxu0 0.0
    %787 = vmatpush1.msra.mxu0 0.0
    %788 = vmatprep.subr.mxu0 0.0
    %789 = vmatpush1.msra.mxu0 0.0
    %790 = vmatprep.subr.mxu0 0.0
    %791 = vmatpush1.msra.mxu0 0.0
    %792 = vmatprep.subr.mxu0 0.0
    %793 = vmatpush1.msra.mxu0 0.0
    %794 = vmatprep.subr.mxu0 0.0
    %795 = vmatpush1.msra.mxu0 0.0
    %796 = vmatprep.subr.mxu0 0.0
    %797 = vmatpush1.msra.mxu0 0.0
    %798 = vmatprep.subr.mxu0 0.0
    %799 = vmatpush1.msra.mxu0 0.0
    %800 = vmatprep.subr.mxu0 0.0
    %801 = vmatpush1.msra.mxu0 0.0
    %802 = vmatprep.subr.mxu0 0.0
    %803 = vmatpush1.msra.mxu0 0.0
    %804 = vmatprep.subr.mxu0 0.0
    %805 = vmatpush1.msra.mxu0 0.0
    %806 = vmatprep.subr.mxu0 0.0
    %807 = vmatpush1.msra.mxu0 0.0
    %808 = vmatprep.subr.mxu0 0.0
    %809 = vmatpush1.msra.mxu0 0.0
    %810 = vmatprep.subr.mxu0 0.0
    %811 = vmatpush1.msra.mxu0 0.0
    %812 = vmatprep.subr.mxu0 0.0
    %813 = vmatpush1.msra.mxu0 0.0
    %814 = vmatprep.subr.mxu0 0.0
    %815 = vmatpush1.msra.mxu0 0.0
    %816 = vmatprep.subr.mxu0 0.0
    %817 = vmatpush1.msra.mxu0 0.0
    %818 = vmatprep.subr.mxu0 0.0
    %819 = vmatpush1.msra.mxu0 0.0
    %820 = vmatprep.subr.mxu0 0.0
    %821 = vmatpush1.msra.mxu0 0.0
    %822 = vmatprep.subr.mxu0 0.0
    %823 = vmatpush1.msra.mxu0 0.0
    %824 = vmatprep.mubr.f32.mxu0 0.0
    %825 = vmatmul.mubr.f32.gmra.mrb[0].mxu0 %v758
    %v826 = vpop.f32.mrb[0].mxu0
    %v827 = vadd.f32 0.0, %v826
    %v828 = vpop.f32.mrb[0].mxu0
    %829 = vdwg.mxu0
    %v830 = vadd.f32 %v236, %v827
    %v831 = vxor.u32 %v830, 2147483648
    %v832 = vmul.f32 %v831, 1.442695
    %v833 = vpow.pop %v832
    %v834 = vadd.f32 %v833, 1.0
    %v835 = vrcp.pop %v834
    %v836 = vmul.f32 1.0, %v835
    %v837 = vtanh.pop %v830
    %v838 = vmul.f32 %v836, %v748
    %840 = vrot.lane.b32.xlu0 %v837, 32
    %v841 = vpop.permute.xlu0 %840
    %v843 = vmul.f32 %v836, %v841
    %845 = vrot.lane.b32.xlu0 %v843, 32
    %v846 = vpop.permute.xlu0 %845
    %v848 = vadd.f32 %v838, %v846
    %v849 = vtanh.pop %v848
    %851 = vrot.lane.b32.xlu0 %v849, 32
    %v852 = vpop.permute.xlu0 %851
    %v854 = vmul.f32 %v836, %v852
    %856 = vrot.lane.b32.xlu0 %v854, 64
    %v857 = vpop.permute.xlu0 %856
    %v858 = vsel %vm256, %v857, 0
    %860 = vmatprep.subr.mxu0 0.0
    %861 = vmatpush1.msra.mxu0 %v252
    %862 = vmatprep.subr.mxu0 0.0
    %863 = vmatpush1.msra.mxu0 %v253
    %864 = vmatprep.subr.mxu0 0.0
    %865 = vmatpush1.msra.mxu0 %v254
    %866 = vmatprep.subr.mxu0 0.0
    %867 = vmatpush1.msra.mxu0 %v255
    %868 = vmatprep.subr.mxu0 0.0
    %869 = vmatpush1.msra.mxu0 0.0
    %870 = vmatprep.subr.mxu0 0.0
    %871 = vmatpush1.msra.mxu0 0.0
    %872 = vmatprep.subr.mxu0 0.0
    %873 = vmatpush1.msra.mxu0 0.0
    %874 = vmatprep.subr.mxu0 0.0
    %875 = vmatpush1.msra.mxu0 0.0
    %876 = vmatprep.subr.mxu0 0.0
    %877 = vmatpush1.msra.mxu0 0.0
    %878 = vmatprep.subr.mxu0 0.0
    %879 = vmatpush1.msra.mxu0 0.0
    %880 = vmatprep.subr.mxu0 0.0
    %881 = vmatpush1.msra.mxu0 0.0
    %882 = vmatprep.subr.mxu0 0.0
    %883 = vmatpush1.msra.mxu0 0.0
    %884 = vmatprep.subr.mxu0 0.0
    %885 = vmatpush1.msra.mxu0 0.0
    %886 = vmatprep.subr.mxu0 0.0
    %887 = vmatpush1.msra.mxu0 0.0
    %888 = vmatprep.subr.mxu0 0.0
    %889 = vmatpush1.msra.mxu0 0.0
    %890 = vmatprep.subr.mxu0 0.0
    %891 = vmatpush1.msra.mxu0 0.0
    %892 = vmatprep.subr.mxu0 0.0
    %893 = vmatpush1.msra.mxu0 0.0
    %894 = vmatprep.subr.mxu0 0.0
    %895 = vmatpush1.msra.mxu0 0.0
    %896 = vmatprep.subr.mxu0 0.0
    %897 = vmatpush1.msra.mxu0 0.0
    %898 = vmatprep.subr.mxu0 0.0
    %899 = vmatpush1.msra.mxu0 0.0
    %900 = vmatprep.subr.mxu0 0.0
    %901 = vmatpush1.msra.mxu0 0.0
    %902 = vmatprep.subr.mxu0 0.0
    %903 = vmatpush1.msra.mxu0 0.0
    %904 = vmatprep.subr.mxu0 0.0
    %905 = vmatpush1.msra.mxu0 0.0
    %906 = vmatprep.subr.mxu0 0.0
    %907 = vmatpush1.msra.mxu0 0.0
    %908 = vmatprep.subr.mxu0 0.0
    %909 = vmatpush1.msra.mxu0 0.0
    %910 = vmatprep.subr.mxu0 0.0
    %911 = vmatpush1.msra.mxu0 0.0
    %912 = vmatprep.subr.mxu0 0.0
    %913 = vmatpush1.msra.mxu0 0.0
    %914 = vmatprep.subr.mxu0 0.0
    %915 = vmatpush1.msra.mxu0 0.0
    %916 = vmatprep.subr.mxu0 0.0
    %917 = vmatpush1.msra.mxu0 0.0
    %918 = vmatprep.subr.mxu0 0.0
    %919 = vmatpush1.msra.mxu0 0.0
    %920 = vmatprep.subr.mxu0 0.0
    %921 = vmatpush1.msra.mxu0 0.0
    %922 = vmatprep.subr.mxu0 0.0
    %923 = vmatpush1.msra.mxu0 0.0
    %924 = vmatprep.mubr.f32.mxu0 0.0
    %925 = vmatmul.mubr.f32.gmra.mrb[0].mxu0 %v858
    %v926 = vpop.f32.mrb[0].mxu0
    %v927 = vadd.f32 0.0, %v926
    %v928 = vpop.f32.mrb[0].mxu0
    %929 = vdwg.mxu0
    %v930 = vadd.f32 %v242, %v927
    %v931 = vxor.u32 %v930, 2147483648
    %v932 = vmul.f32 %v931, 1.442695
    %v933 = vpow.pop %v932
    %v934 = vadd.f32 %v933, 1.0
    %v935 = vrcp.pop %v934
    %v936 = vmul.f32 1.0, %v935
    %v937 = vtanh.pop %v930
    %v938 = vmul.f32 %v936, %v848
    %940 = vrot.lane.b32.xlu0 %v937, 32
    %v941 = vpop.permute.xlu0 %940
    %v943 = vmul.f32 %v936, %v941
    %945 = vrot.lane.b32.xlu0 %v943, 32
    %v946 = vpop.permute.xlu0 %945
    %v948 = vadd.f32 %v938, %v946
    %v949 = vtanh.pop %v948
    %951 = vrot.lane.b32.xlu0 %v949, 32
    %v952 = vpop.permute.xlu0 %951
    %v954 = vmul.f32 %v936, %v952
    %956 = vrot.lane.b32.xlu0 %v954, 64
    %v957 = vpop.permute.xlu0 %956
    %v958 = vsel %vm256, %v957, 0
    %960 = vmatprep.subr.mxu0 0.0
    %961 = vmatpush1.msra.mxu0 %v252
    %962 = vmatprep.subr.mxu0 0.0
    %963 = vmatpush1.msra.mxu0 %v253
    %964 = vmatprep.subr.mxu0 0.0
    %965 = vmatpush1.msra.mxu0 %v254
    %966 = vmatprep.subr.mxu0 0.0
    %967 = vmatpush1.msra.mxu0 %v255
    %968 = vmatprep.subr.mxu0 0.0
    %969 = vmatpush1.msra.mxu0 0.0
    %970 = vmatprep.subr.mxu0 0.0
    %971 = vmatpush1.msra.mxu0 0.0
    %972 = vmatprep.subr.mxu0 0.0
    %973 = vmatpush1.msra.mxu0 0.0
    %974 = vmatprep.subr.mxu0 0.0
    %975 = vmatpush1.msra.mxu0 0.0
    %976 = vmatprep.subr.mxu0 0.0
    %977 = vmatpush1.msra.mxu0 0.0
    %978 = vmatprep.subr.mxu0 0.0
    %979 = vmatpush1.msra.mxu0 0.0
    %980 = vmatprep.subr.mxu0 0.0
    %981 = vmatpush1.msra.mxu0 0.0
    %982 = vmatprep.subr.mxu0 0.0
    %983 = vmatpush1.msra.mxu0 0.0
    %984 = vmatprep.subr.mxu0 0.0
    %985 = vmatpush1.msra.mxu0 0.0
    %986 = vmatprep.subr.mxu0 0.0
    %987 = vmatpush1.msra.mxu0 0.0
    %988 = vmatprep.subr.mxu0 0.0
    %989 = vmatpush1.msra.mxu0 0.0
    %990 = vmatprep.subr.mxu0 0.0
    %991 = vmatpush1.msra.mxu0 0.0
    %992 = vmatprep.subr.mxu0 0.0
    %993 = vmatpush1.msra.mxu0 0.0
    %994 = vmatprep.subr.mxu0 0.0
    %995 = vmatpush1.msra.mxu0 0.0
    %996 = vmatprep.subr.mxu0 0.0
    %997 = vmatpush1.msra.mxu0 0.0
    %998 = vmatprep.subr.mxu0 0.0
    %999 = vmatpush1.msra.mxu0 0.0
    %1000 = vmatprep.subr.mxu0 0.0
    %1001 = vmatpush1.msra.mxu0 0.0
    %1002 = vmatprep.subr.mxu0 0.0
    %1003 = vmatpush1.msra.mxu0 0.0
    %1004 = vmatprep.subr.mxu0 0.0
    %1005 = vmatpush1.msra.mxu0 0.0
    %1006 = vmatprep.subr.mxu0 0.0
    %1007 = vmatpush1.msra.mxu0 0.0
    %1008 = vmatprep.subr.mxu0 0.0
    %1009 = vmatpush1.msra.mxu0 0.0
    %1010 = vmatprep.subr.mxu0 0.0
    %1011 = vmatpush1.msra.mxu0 0.0
    %1012 = vmatprep.subr.mxu0 0.0
    %1013 = vmatpush1.msra.mxu0 0.0
    %1014 = vmatprep.subr.mxu0 0.0
    %1015 = vmatpush1.msra.mxu0 0.0
    %1016 = vmatprep.subr.mxu0 0.0
    %1017 = vmatpush1.msra.mxu0 0.0
    %1018 = vmatprep.subr.mxu0 0.0
    %1019 = vmatpush1.msra.mxu0 0.0
    %1020 = vmatprep.subr.mxu0 0.0
    %1021 = vmatpush1.msra.mxu0 0.0
    %1022 = vmatprep.subr.mxu0 0.0
    %1023 = vmatpush1.msra.mxu0 0.0
    %1024 = vmatprep.mubr.f32.mxu0 0.0
    %1025 = vmatmul.mubr.f32.gmra.mrb[0].mxu0 %v958
    %v1026 = vpop.f32.mrb[0].mxu0
    %v1027 = vadd.f32 0.0, %v1026
    %v1028 = vpop.f32.mrb[0].mxu0
    %1029 = vdwg.mxu0
    %v1030 = vadd.f32 %v248, %v1027
    %v1031 = vxor.u32 %v1030, 2147483648
    %v1032 = vmul.f32 %v1031, 1.442695
    %v1033 = vpow.pop %v1032
    %v1034 = vadd.f32 %v1033, 1.0
    %v1035 = vrcp.pop %v1034
    %v1036 = vmul.f32 1.0, %v1035
    %v1037 = vtanh.pop %v1030
    %v1038 = vmul.f32 %v1036, %v948
    %1040 = vrot.lane.b32.xlu0 %v1037, 32
    %v1041 = vpop.permute.xlu0 %1040
    %v1043 = vmul.f32 %v1036, %v1041
    %1045 = vrot.lane.b32.xlu0 %v1043, 32
    %v1046 = vpop.permute.xlu0 %1045
    %v1048 = vadd.f32 %v1038, %v1046
    %v1049 = vtanh.pop %v1048
    %1051 = vrot.lane.b32.xlu0 %v1049, 32
    %v1052 = vpop.permute.xlu0 %1051
    %v1054 = vmul.f32 %v1036, %v1052
    %v1055 = vld [vmem:[#allocation2] sm:$0xff]
    %v1056 = vld [vmem:[#allocation2 + $0x8] sm:$0xff]
    %v1057 = vld [vmem:[#allocation2 + $0x10] sm:$0xff]
    %v1058 = vld [vmem:[#allocation2 + $0x18] sm:$0xff]
    %1059 = vmatprep.subr.mxu0 0.0
    %1060 = vmatpush1.msra.mxu0 %v1055
    %1061 = vmatprep.subr.mxu0 0.0
    %1062 = vmatpush1.msra.mxu0 %v1056
    %1063 = vmatprep.subr.mxu0 0.0
    %1064 = vmatpush1.msra.mxu0 %v1057
    %1065 = vmatprep.subr.mxu0 0.0
    %1066 = vmatpush1.msra.mxu0 %v1058
    %1067 = vmatprep.subr.mxu0 0.0
    %1068 = vmatpush1.msra.mxu0 0.0
    %1069 = vmatprep.subr.mxu0 0.0
    %1070 = vmatpush1.msra.mxu0 0.0
    %1071 = vmatprep.subr.mxu0 0.0
    %1072 = vmatpush1.msra.mxu0 0.0
    %1073 = vmatprep.subr.mxu0 0.0
    %1074 = vmatpush1.msra.mxu0 0.0
    %1075 = vmatprep.subr.mxu0 0.0
    %1076 = vmatpush1.msra.mxu0 0.0
    %1077 = vmatprep.subr.mxu0 0.0
    %1078 = vmatpush1.msra.mxu0 0.0
    %1079 = vmatprep.subr.mxu0 0.0
    %1080 = vmatpush1.msra.mxu0 0.0
    %1081 = vmatprep.subr.mxu0 0.0
    %1082 = vmatpush1.msra.mxu0 0.0
    %1083 = vmatprep.subr.mxu0 0.0
    %1084 = vmatpush1.msra.mxu0 0.0
    %1085 = vmatprep.subr.mxu0 0.0
    %1086 = vmatpush1.msra.mxu0 0.0
    %1087 = vmatprep.subr.mxu0 0.0
    %1088 = vmatpush1.msra.mxu0 0.0
    %1089 = vmatprep.subr.mxu0 0.0
    %1090 = vmatpush1.msra.mxu0 0.0
    %1091 = vmatprep.subr.mxu0 0.0
    %1092 = vmatpush1.msra.mxu0 0.0
    %1093 = vmatprep.subr.mxu0 0.0
    %1094 = vmatpush1.msra.mxu0 0.0
    %1095 = vmatprep.subr.mxu0 0.0
    %1096 = vmatpush1.msra.mxu0 0.0
    %1097 = vmatprep.subr.mxu0 0.0
    %1098 = vmatpush1.msra.mxu0 0.0
    %1099 = vmatprep.subr.mxu0 0.0
    %1100 = vmatpush1.msra.mxu0 0.0
    %1101 = vmatprep.subr.mxu0 0.0
    %1102 = vmatpush1.msra.mxu0 0.0
    %1103 = vmatprep.subr.mxu0 0.0
    %1104 = vmatpush1.msra.mxu0 0.0
    %1105 = vmatprep.subr.mxu0 0.0
    %1106 = vmatpush1.msra.mxu0 0.0
    %1107 = vmatprep.subr.mxu0 0.0
    %1108 = vmatpush1.msra.mxu0 0.0
    %1109 = vmatprep.subr.mxu0 0.0
    %1110 = vmatpush1.msra.mxu0 0.0
    %1111 = vmatprep.subr.mxu0 0.0
    %1112 = vmatpush1.msra.mxu0 0.0
    %1113 = vmatprep.subr.mxu0 0.0
    %1114 = vmatpush1.msra.mxu0 0.0
    %1115 = vmatprep.subr.mxu0 0.0
    %1116 = vmatpush1.msra.mxu0 0.0
    %1117 = vmatprep.subr.mxu0 0.0
    %1118 = vmatpush1.msra.mxu0 0.0
    %1119 = vmatprep.subr.mxu0 0.0
    %1120 = vmatpush1.msra.mxu0 0.0
    %1121 = vmatprep.subr.mxu0 0.0
    %1122 = vmatpush1.msra.mxu0 0.0
    %1123 = vmatprep.mubr.f32.mxu0 0.0
    %1124 = vmatmul.mubr.f32.gmra.mrb[0].mxu0 %v258
    %v1125 = vpop.f32.mrb[0].mxu0
    %v1126 = vadd.f32 0.0, %v1125
    %v1127 = vpop.f32.mrb[0].mxu0
    %1128 = vdwg.mxu0
    %v1129 = vadd.f32 %v250, %v1126
    %v1130 = vxor.u32 %v1129, 2147483648
    %v1131 = vmul.f32 %v1130, 1.442695
    %v1132 = vpow.pop %v1131
    %v1133 = vadd.f32 %v1132, 1.0
    %v1134 = vrcp.pop %v1133
    %v1135 = vmul.f32 1.0, %v1134
    %v1136 = vtanh.pop %v1129
    %v1137 = vmul.f32 %v1135, 0.0
    %1139 = vrot.lane.b32.xlu0 %v1136, 32
    %v1140 = vpop.permute.xlu0 %1139
    %v1142 = vmul.f32 %v1135, %v1140
    %1144 = vrot.lane.b32.xlu0 %v1142, 32
    %v1145 = vpop.permute.xlu0 %1144
    %v1147 = vadd.f32 %v1137, %v1145
    %v1148 = vtanh.pop %v1147
    %1150 = vrot.lane.b32.xlu0 %v1148, 32
    %v1151 = vpop.permute.xlu0 %1150
    %v1153 = vmul.f32 %v1135, %v1151
    %1155 = vrot.lane.b32.xlu0 %v1153, 64
    %v1156 = vpop.permute.xlu0 %1155
    %v1157 = vsel %vm256, %v1156, 0
    %1159 = vmatprep.subr.mxu0 0.0
    %1160 = vmatpush1.msra.mxu0 %v1055
    %1161 = vmatprep.subr.mxu0 0.0
    %1162 = vmatpush1.msra.mxu0 %v1056
    %1163 = vmatprep.subr.mxu0 0.0
    %1164 = vmatpush1.msra.mxu0 %v1057
    %1165 = vmatprep.subr.mxu0 0.0
    %1166 = vmatpush1.msra.mxu0 %v1058
    %1167 = vmatprep.subr.mxu0 0.0
    %1168 = vmatpush1.msra.mxu0 0.0
    %1169 = vmatprep.subr.mxu0 0.0
    %1170 = vmatpush1.msra.mxu0 0.0
    %1171 = vmatprep.subr.mxu0 0.0
    %1172 = vmatpush1.msra.mxu0 0.0
    %1173 = vmatprep.subr.mxu0 0.0
    %1174 = vmatpush1.msra.mxu0 0.0
    %1175 = vmatprep.subr.mxu0 0.0
    %1176 = vmatpush1.msra.mxu0 0.0
    %1177 = vmatprep.subr.mxu0 0.0
    %1178 = vmatpush1.msra.mxu0 0.0
    %1179 = vmatprep.subr.mxu0 0.0
    %1180 = vmatpush1.msra.mxu0 0.0
    %1181 = vmatprep.subr.mxu0 0.0
    %1182 = vmatpush1.msra.mxu0 0.0
    %1183 = vmatprep.subr.mxu0 0.0
    %1184 = vmatpush1.msra.mxu0 0.0
    %1185 = vmatprep.subr.mxu0 0.0
    %1186 = vmatpush1.msra.mxu0 0.0
    %1187 = vmatprep.subr.mxu0 0.0
    %1188 = vmatpush1.msra.mxu0 0.0
    %1189 = vmatprep.subr.mxu0 0.0
    %1190 = vmatpush1.msra.mxu0 0.0
    %1191 = vmatprep.subr.mxu0 0.0
    %1192 = vmatpush1.msra.mxu0 0.0
    %1193 = vmatprep.subr.mxu0 0.0
    %1194 = vmatpush1.msra.mxu0 0.0
    %1195 = vmatprep.subr.mxu0 0.0
    %1196 = vmatpush1.msra.mxu0 0.0
    %1197 = vmatprep.subr.mxu0 0.0
    %1198 = vmatpush1.msra.mxu0 0.0
    %1199 = vmatprep.subr.mxu0 0.0
    %1200 = vmatpush1.msra.mxu0 0.0
    %1201 = vmatprep.subr.mxu0 0.0
    %1202 = vmatpush1.msra.mxu0 0.0
    %1203 = vmatprep.subr.mxu0 0.0
    %1204 = vmatpush1.msra.mxu0 0.0
    %1205 = vmatprep.subr.mxu0 0.0
    %1206 = vmatpush1.msra.mxu0 0.0
    %1207 = vmatprep.subr.mxu0 0.0
    %1208 = vmatpush1.msra.mxu0 0.0
    %1209 = vmatprep.subr.mxu0 0.0
    %1210 = vmatpush1.msra.mxu0 0.0
    %1211 = vmatprep.subr.mxu0 0.0
    %1212 = vmatpush1.msra.mxu0 0.0
    %1213 = vmatprep.subr.mxu0 0.0
    %1214 = vmatpush1.msra.mxu0 0.0
    %1215 = vmatprep.subr.mxu0 0.0
    %1216 = vmatpush1.msra.mxu0 0.0
    %1217 = vmatprep.subr.mxu0 0.0
    %1218 = vmatpush1.msra.mxu0 0.0
    %1219 = vmatprep.subr.mxu0 0.0
    %1220 = vmatpush1.msra.mxu0 0.0
    %1221 = vmatprep.subr.mxu0 0.0
    %1222 = vmatpush1.msra.mxu0 0.0
    %1223 = vmatprep.mubr.f32.mxu0 0.0
    %1224 = vmatmul.mubr.f32.gmra.mrb[0].mxu0 %v1157
    %v1225 = vpop.f32.mrb[0].mxu0
    %v1226 = vadd.f32 0.0, %v1225
    %v1227 = vpop.f32.mrb[0].mxu0
    %1228 = vdwg.mxu0
    %v1229 = vadd.f32 %v244, %v1226
    %v1230 = vxor.u32 %v1229, 2147483648
    %v1231 = vmul.f32 %v1230, 1.442695
    %v1232 = vpow.pop %v1231
    %v1233 = vadd.f32 %v1232, 1.0
    %v1234 = vrcp.pop %v1233
    %v1235 = vmul.f32 1.0, %v1234
    %v1236 = vtanh.pop %v1229
    %v1237 = vmul.f32 %v1235, %v1147
    %1239 = vrot.lane.b32.xlu0 %v1236, 32
    %v1240 = vpop.permute.xlu0 %1239
    %v1242 = vmul.f32 %v1235, %v1240
    %1244 = vrot.lane.b32.xlu0 %v1242, 32
    %v1245 = vpop.permute.xlu0 %1244
    %v1247 = vadd.f32 %v1237, %v1245
    %v1248 = vtanh.pop %v1247
    %1250 = vrot.lane.b32.xlu0 %v1248, 32
    %v1251 = vpop.permute.xlu0 %1250
    %v1253 = vmul.f32 %v1235, %v1251
    %1255 = vrot.lane.b32.xlu0 %v1253, 64
    %v1256 = vpop.permute.xlu0 %1255
    %v1257 = vsel %vm256, %v1256, 0
    %1259 = vmatprep.subr.mxu0 0.0
    %1260 = vmatpush1.msra.mxu0 %v1055
    %1261 = vmatprep.subr.mxu0 0.0
    %1262 = vmatpush1.msra.mxu0 %v1056
    %1263 = vmatprep.subr.mxu0 0.0
    %1264 = vmatpush1.msra.mxu0 %v1057
    %1265 = vmatprep.subr.mxu0 0.0
    %1266 = vmatpush1.msra.mxu0 %v1058
    %1267 = vmatprep.subr.mxu0 0.0
    %1268 = vmatpush1.msra.mxu0 0.0
    %1269 = vmatprep.subr.mxu0 0.0
    %1270 = vmatpush1.msra.mxu0 0.0
    %1271 = vmatprep.subr.mxu0 0.0
    %1272 = vmatpush1.msra.mxu0 0.0
    %1273 = vmatprep.subr.mxu0 0.0
    %1274 = vmatpush1.msra.mxu0 0.0
    %1275 = vmatprep.subr.mxu0 0.0
    %1276 = vmatpush1.msra.mxu0 0.0
    %1277 = vmatprep.subr.mxu0 0.0
    %1278 = vmatpush1.msra.mxu0 0.0
    %1279 = vmatprep.subr.mxu0 0.0
    %1280 = vmatpush1.msra.mxu0 0.0
    %1281 = vmatprep.subr.mxu0 0.0
    %1282 = vmatpush1.msra.mxu0 0.0
    %1283 = vmatprep.subr.mxu0 0.0
    %1284 = vmatpush1.msra.mxu0 0.0
    %1285 = vmatprep.subr.mxu0 0.0
    %1286 = vmatpush1.msra.mxu0 0.0
    %1287 = vmatprep.subr.mxu0 0.0
    %1288 = vmatpush1.msra.mxu0 0.0
    %1289 = vmatprep.subr.mxu0 0.0
    %1290 = vmatpush1.msra.mxu0 0.0
    %1291 = vmatprep.subr.mxu0 0.0
    %1292 = vmatpush1.msra.mxu0 0.0
    %1293 = vmatprep.subr.mxu0 0.0
    %1294 = vmatpush1.msra.mxu0 0.0
    %1295 = vmatprep.subr.mxu0 0.0
    %1296 = vmatpush1.msra.mxu0 0.0
    %1297 = vmatprep.subr.mxu0 0.0
    %1298 = vmatpush1.msra.mxu0 0.0
    %1299 = vmatprep.subr.mxu0 0.0
    %1300 = vmatpush1.msra.mxu0 0.0
    %1301 = vmatprep.subr.mxu0 0.0
    %1302 = vmatpush1.msra.mxu0 0.0
    %1303 = vmatprep.subr.mxu0 0.0
    %1304 = vmatpush1.msra.mxu0 0.0
    %1305 = vmatprep.subr.mxu0 0.0
    %1306 = vmatpush1.msra.mxu0 0.0
    %1307 = vmatprep.subr.mxu0 0.0
    %1308 = vmatpush1.msra.mxu0 0.0
    %1309 = vmatprep.subr.mxu0 0.0
    %1310 = vmatpush1.msra.mxu0 0.0
    %1311 = vmatprep.subr.mxu0 0.0
    %1312 = vmatpush1.msra.mxu0 0.0
    %1313 = vmatprep.subr.mxu0 0.0
    %1314 = vmatpush1.msra.mxu0 0.0
    %1315 = vmatprep.subr.mxu0 0.0
    %1316 = vmatpush1.msra.mxu0 0.0
    %1317 = vmatprep.subr.mxu0 0.0
    %1318 = vmatpush1.msra.mxu0 0.0
    %1319 = vmatprep.subr.mxu0 0.0
    %1320 = vmatpush1.msra.mxu0 0.0
    %1321 = vmatprep.subr.mxu0 0.0
    %1322 = vmatpush1.msra.mxu0 0.0
    %1323 = vmatprep.mubr.f32.mxu0 0.0
    %1324 = vmatmul.mubr.f32.gmra.mrb[0].mxu0 %v1257
    %v1325 = vpop.f32.mrb[0].mxu0
    %v1326 = vadd.f32 0.0, %v1325
    %v1327 = vpop.f32.mrb[0].mxu0
    %1328 = vdwg.mxu0
    %v1329 = vadd.f32 %v238, %v1326
    %v1330 = vxor.u32 %v1329, 2147483648
    %v1331 = vmul.f32 %v1330, 1.442695
    %v1332 = vpow.pop %v1331
    %v1333 = vadd.f32 %v1332, 1.0
    %v1334 = vrcp.pop %v1333
    %v1335 = vmul.f32 1.0, %v1334
    %v1336 = vtanh.pop %v1329
    %v1337 = vmul.f32 %v1335, %v1247
    %1339 = vrot.lane.b32.xlu0 %v1336, 32
    %v1340 = vpop.permute.xlu0 %1339
    %v1342 = vmul.f32 %v1335, %v1340
    %1344 = vrot.lane.b32.xlu0 %v1342, 32
    %v1345 = vpop.permute.xlu0 %1344
    %v1347 = vadd.f32 %v1337, %v1345
    %v1348 = vtanh.pop %v1347
    %1350 = vrot.lane.b32.xlu0 %v1348, 32
    %v1351 = vpop.permute.xlu0 %1350
    %v1353 = vmul.f32 %v1335, %v1351
    %1355 = vrot.lane.b32.xlu0 %v1353, 64
    %v1356 = vpop.permute.xlu0 %1355
    %v1357 = vsel %vm256, %v1356, 0
    %1359 = vmatprep.subr.mxu0 0.0
    %1360 = vmatpush1.msra.mxu0 %v1055
    %1361 = vmatprep.subr.mxu0 0.0
    %1362 = vmatpush1.msra.mxu0 %v1056
    %1363 = vmatprep.subr.mxu0 0.0
    %1364 = vmatpush1.msra.mxu0 %v1057
    %1365 = vmatprep.subr.mxu0 0.0
    %1366 = vmatpush1.msra.mxu0 %v1058
    %1367 = vmatprep.subr.mxu0 0.0
    %1368 = vmatpush1.msra.mxu0 0.0
    %1369 = vmatprep.subr.mxu0 0.0
    %1370 = vmatpush1.msra.mxu0 0.0
    %1371 = vmatprep.subr.mxu0 0.0
    %1372 = vmatpush1.msra.mxu0 0.0
    %1373 = vmatprep.subr.mxu0 0.0
    %1374 = vmatpush1.msra.mxu0 0.0
    %1375 = vmatprep.subr.mxu0 0.0
    %1376 = vmatpush1.msra.mxu0 0.0
    %1377 = vmatprep.subr.mxu0 0.0
    %1378 = vmatpush1.msra.mxu0 0.0
    %1379 = vmatprep.subr.mxu0 0.0
    %1380 = vmatpush1.msra.mxu0 0.0
    %1381 = vmatprep.subr.mxu0 0.0
    %1382 = vmatpush1.msra.mxu0 0.0
    %1383 = vmatprep.subr.mxu0 0.0
    %1384 = vmatpush1.msra.mxu0 0.0
    %1385 = vmatprep.subr.mxu0 0.0
    %1386 = vmatpush1.msra.mxu0 0.0
    %1387 = vmatprep.subr.mxu0 0.0
    %1388 = vmatpush1.msra.mxu0 0.0
    %1389 = vmatprep.subr.mxu0 0.0
    %1390 = vmatpush1.msra.mxu0 0.0
    %1391 = vmatprep.subr.mxu0 0.0
    %1392 = vmatpush1.msra.mxu0 0.0
    %1393 = vmatprep.subr.mxu0 0.0
    %1394 = vmatpush1.msra.mxu0 0.0
    %1395 = vmatprep.subr.mxu0 0.0
    %1396 = vmatpush1.msra.mxu0 0.0
    %1397 = vmatprep.subr.mxu0 0.0
    %1398 = vmatpush1.msra.mxu0 0.0
    %1399 = vmatprep.subr.mxu0 0.0
    %1400 = vmatpush1.msra.mxu0 0.0
    %1401 = vmatprep.subr.mxu0 0.0
    %1402 = vmatpush1.msra.mxu0 0.0
    %1403 = vmatprep.subr.mxu0 0.0
    %1404 = vmatpush1.msra.mxu0 0.0
    %1405 = vmatprep.subr.mxu0 0.0
    %1406 = vmatpush1.msra.mxu0 0.0
    %1407 = vmatprep.subr.mxu0 0.0
    %1408 = vmatpush1.msra.mxu0 0.0
    %1409 = vmatprep.subr.mxu0 0.0
    %1410 = vmatpush1.msra.mxu0 0.0
    %1411 = vmatprep.subr.mxu0 0.0
    %1412 = vmatpush1.msra.mxu0 0.0
    %1413 = vmatprep.subr.mxu0 0.0
    %1414 = vmatpush1.msra.mxu0 0.0
    %1415 = vmatprep.subr.mxu0 0.0
    %1416 = vmatpush1.msra.mxu0 0.0
    %1417 = vmatprep.subr.mxu0 0.0
    %1418 = vmatpush1.msra.mxu0 0.0
    %1419 = vmatprep.subr.mxu0 0.0
    %1420 = vmatpush1.msra.mxu0 0.0
    %1421 = vmatprep.subr.mxu0 0.0
    %1422 = vmatpush1.msra.mxu0 0.0
    %1423 = vmatprep.mubr.f32.mxu0 0.0
    %1424 = vmatmul.mubr.f32.gmra.mrb[0].mxu0 %v1357
    %v1425 = vpop.f32.mrb[0].mxu0
    %v1426 = vadd.f32 0.0, %v1425
    %v1427 = vpop.f32.mrb[0].mxu0
    %1428 = vdwg.mxu0
    %v1429 = vadd.f32 %v232, %v1426
    %v1430 = vxor.u32 %v1429, 2147483648
    %v1431 = vmul.f32 %v1430, 1.442695
    %v1432 = vpow.pop %v1431
    %v1433 = vadd.f32 %v1432, 1.0
    %v1434 = vrcp.pop %v1433
    %v1435 = vmul.f32 1.0, %v1434
    %v1436 = vtanh.pop %v1429
    %v1437 = vmul.f32 %v1435, %v1347
    %1439 = vrot.lane.b32.xlu0 %v1436, 32
    %v1440 = vpop.permute.xlu0 %1439
    %v1442 = vmul.f32 %v1435, %v1440
    %1444 = vrot.lane.b32.xlu0 %v1442, 32
    %v1445 = vpop.permute.xlu0 %1444
    %v1447 = vadd.f32 %v1437, %v1445
    %v1448 = vtanh.pop %v1447
    %1450 = vrot.lane.b32.xlu0 %v1448, 32
    %v1451 = vpop.permute.xlu0 %1450
    %v1453 = vmul.f32 %v1435, %v1451
    %1455 = vrot.lane.b32.xlu0 %v1453, 64
    %v1456 = vpop.permute.xlu0 %1455
    %v1457 = vsel %vm256, %v1456, 0
    %1459 = vmatprep.subr.mxu0 0.0
    %1460 = vmatpush1.msra.mxu0 %v1055
    %1461 = vmatprep.subr.mxu0 0.0
    %1462 = vmatpush1.msra.mxu0 %v1056
    %1463 = vmatprep.subr.mxu0 0.0
    %1464 = vmatpush1.msra.mxu0 %v1057
    %1465 = vmatprep.subr.mxu0 0.0
    %1466 = vmatpush1.msra.mxu0 %v1058
    %1467 = vmatprep.subr.mxu0 0.0
    %1468 = vmatpush1.msra.mxu0 0.0
    %1469 = vmatprep.subr.mxu0 0.0
    %1470 = vmatpush1.msra.mxu0 0.0
    %1471 = vmatprep.subr.mxu0 0.0
    %1472 = vmatpush1.msra.mxu0 0.0
    %1473 = vmatprep.subr.mxu0 0.0
    %1474 = vmatpush1.msra.mxu0 0.0
    %1475 = vmatprep.subr.mxu0 0.0
    %1476 = vmatpush1.msra.mxu0 0.0
    %1477 = vmatprep.subr.mxu0 0.0
    %1478 = vmatpush1.msra.mxu0 0.0
    %1479 = vmatprep.subr.mxu0 0.0
    %1480 = vmatpush1.msra.mxu0 0.0
    %1481 = vmatprep.subr.mxu0 0.0
    %1482 = vmatpush1.msra.mxu0 0.0
    %1483 = vmatprep.subr.mxu0 0.0
    %1484 = vmatpush1.msra.mxu0 0.0
    %1485 = vmatprep.subr.mxu0 0.0
    %1486 = vmatpush1.msra.mxu0 0.0
    %1487 = vmatprep.subr.mxu0 0.0
    %1488 = vmatpush1.msra.mxu0 0.0
    %1489 = vmatprep.subr.mxu0 0.0
    %1490 = vmatpush1.msra.mxu0 0.0
    %1491 = vmatprep.subr.mxu0 0.0
    %1492 = vmatpush1.msra.mxu0 0.0
    %1493 = vmatprep.subr.mxu0 0.0
    %1494 = vmatpush1.msra.mxu0 0.0
    %1495 = vmatprep.subr.mxu0 0.0
    %1496 = vmatpush1.msra.mxu0 0.0
    %1497 = vmatprep.subr.mxu0 0.0
    %1498 = vmatpush1.msra.mxu0 0.0
    %1499 = vmatprep.subr.mxu0 0.0
    %1500 = vmatpush1.msra.mxu0 0.0
    %1501 = vmatprep.subr.mxu0 0.0
    %1502 = vmatpush1.msra.mxu0 0.0
    %1503 = vmatprep.subr.mxu0 0.0
    %1504 = vmatpush1.msra.mxu0 0.0
    %1505 = vmatprep.subr.mxu0 0.0
    %1506 = vmatpush1.msra.mxu0 0.0
    %1507 = vmatprep.subr.mxu0 0.0
    %1508 = vmatpush1.msra.mxu0 0.0
    %1509 = vmatprep.subr.mxu0 0.0
    %1510 = vmatpush1.msra.mxu0 0.0
    %1511 = vmatprep.subr.mxu0 0.0
    %1512 = vmatpush1.msra.mxu0 0.0
    %1513 = vmatprep.subr.mxu0 0.0
    %1514 = vmatpush1.msra.mxu0 0.0
    %1515 = vmatprep.subr.mxu0 0.0
    %1516 = vmatpush1.msra.mxu0 0.0
    %1517 = vmatprep.subr.mxu0 0.0
    %1518 = vmatpush1.msra.mxu0 0.0
    %1519 = vmatprep.subr.mxu0 0.0
    %1520 = vmatpush1.msra.mxu0 0.0
    %1521 = vmatprep.subr.mxu0 0.0
    %1522 = vmatpush1.msra.mxu0 0.0
    %1523 = vmatprep.mubr.f32.mxu0 0.0
    %1524 = vmatmul.mubr.f32.gmra.mrb[0].mxu0 %v1457
    %v1525 = vpop.f32.mrb[0].mxu0
    %v1526 = vadd.f32 0.0, %v1525
    %v1527 = vpop.f32.mrb[0].mxu0
    %1528 = vdwg.mxu0
    %v1529 = vadd.f32 %v226, %v1526
    %v1530 = vxor.u32 %v1529, 2147483648
    %v1531 = vmul.f32 %v1530, 1.442695
    %v1532 = vpow.pop %v1531
    %v1533 = vadd.f32 %v1532, 1.0
    %v1534 = vrcp.pop %v1533
    %v1535 = vmul.f32 1.0, %v1534
    %v1536 = vtanh.pop %v1529
    %v1537 = vmul.f32 %v1535, %v1447
    %1539 = vrot.lane.b32.xlu0 %v1536, 32
    %v1540 = vpop.permute.xlu0 %1539
    %v1542 = vmul.f32 %v1535, %v1540
    %1544 = vrot.lane.b32.xlu0 %v1542, 32
    %v1545 = vpop.permute.xlu0 %1544
    %v1547 = vadd.f32 %v1537, %v1545
    %v1548 = vtanh.pop %v1547
    %1550 = vrot.lane.b32.xlu0 %v1548, 32
    %v1551 = vpop.permute.xlu0 %1550
    %v1553 = vmul.f32 %v1535, %v1551
    %1555 = vrot.lane.b32.xlu0 %v1553, 64
    %v1556 = vpop.permute.xlu0 %1555
    %v1557 = vsel %vm256, %v1556, 0
    %1559 = vmatprep.subr.mxu0 0.0
    %1560 = vmatpush1.msra.mxu0 %v1055
    %1561 = vmatprep.subr.mxu0 0.0
    %1562 = vmatpush1.msra.mxu0 %v1056
    %1563 = vmatprep.subr.mxu0 0.0
    %1564 = vmatpush1.msra.mxu0 %v1057
    %1565 = vmatprep.subr.mxu0 0.0
    %1566 = vmatpush1.msra.mxu0 %v1058
    %1567 = vmatprep.subr.mxu0 0.0
    %1568 = vmatpush1.msra.mxu0 0.0
    %1569 = vmatprep.subr.mxu0 0.0
    %1570 = vmatpush1.msra.mxu0 0.0
    %1571 = vmatprep.subr.mxu0 0.0
    %1572 = vmatpush1.msra.mxu0 0.0
    %1573 = vmatprep.subr.mxu0 0.0
    %1574 = vmatpush1.msra.mxu0 0.0
    %1575 = vmatprep.subr.mxu0 0.0
    %1576 = vmatpush1.msra.mxu0 0.0
    %1577 = vmatprep.subr.mxu0 0.0
    %1578 = vmatpush1.msra.mxu0 0.0
    %1579 = vmatprep.subr.mxu0 0.0
    %1580 = vmatpush1.msra.mxu0 0.0
    %1581 = vmatprep.subr.mxu0 0.0
    %1582 = vmatpush1.msra.mxu0 0.0
    %1583 = vmatprep.subr.mxu0 0.0
    %1584 = vmatpush1.msra.mxu0 0.0
    %1585 = vmatprep.subr.mxu0 0.0
    %1586 = vmatpush1.msra.mxu0 0.0
    %1587 = vmatprep.subr.mxu0 0.0
    %1588 = vmatpush1.msra.mxu0 0.0
    %1589 = vmatprep.subr.mxu0 0.0
    %1590 = vmatpush1.msra.mxu0 0.0
    %1591 = vmatprep.subr.mxu0 0.0
    %1592 = vmatpush1.msra.mxu0 0.0
    %1593 = vmatprep.subr.mxu0 0.0
    %1594 = vmatpush1.msra.mxu0 0.0
    %1595 = vmatprep.subr.mxu0 0.0
    %1596 = vmatpush1.msra.mxu0 0.0
    %1597 = vmatprep.subr.mxu0 0.0
    %1598 = vmatpush1.msra.mxu0 0.0
    %1599 = vmatprep.subr.mxu0 0.0
    %1600 = vmatpush1.msra.mxu0 0.0
    %1601 = vmatprep.subr.mxu0 0.0
    %1602 = vmatpush1.msra.mxu0 0.0
    %1603 = vmatprep.subr.mxu0 0.0
    %1604 = vmatpush1.msra.mxu0 0.0
    %1605 = vmatprep.subr.mxu0 0.0
    %1606 = vmatpush1.msra.mxu0 0.0
    %1607 = vmatprep.subr.mxu0 0.0
    %1608 = vmatpush1.msra.mxu0 0.0
    %1609 = vmatprep.subr.mxu0 0.0
    %1610 = vmatpush1.msra.mxu0 0.0
    %1611 = vmatprep.subr.mxu0 0.0
    %1612 = vmatpush1.msra.mxu0 0.0
    %1613 = vmatprep.subr.mxu0 0.0
    %1614 = vmatpush1.msra.mxu0 0.0
    %1615 = vmatprep.subr.mxu0 0.0
    %1616 = vmatpush1.msra.mxu0 0.0
    %1617 = vmatprep.subr.mxu0 0.0
    %1618 = vmatpush1.msra.mxu0 0.0
    %1619 = vmatprep.subr.mxu0 0.0
    %1620 = vmatpush1.msra.mxu0 0.0
    %1621 = vmatprep.subr.mxu0 0.0
    %1622 = vmatpush1.msra.mxu0 0.0
    %1623 = vmatprep.mubr.f32.mxu0 0.0
    %1624 = vmatmul.mubr.f32.gmra.mrb[0].mxu0 %v1557
    %v1625 = vpop.f32.mrb[0].mxu0
    %v1626 = vadd.f32 0.0, %v1625
    %v1627 = vpop.f32.mrb[0].mxu0
    %1628 = vdwg.mxu0
    %v1629 = vadd.f32 %v220, %v1626
    %v1630 = vxor.u32 %v1629, 2147483648
    %v1631 = vmul.f32 %v1630, 1.442695
    %v1632 = vpow.pop %v1631
    %v1633 = vadd.f32 %v1632, 1.0
    %v1634 = vrcp.pop %v1633
    %v1635 = vmul.f32 1.0, %v1634
    %v1636 = vtanh.pop %v1629
    %v1637 = vmul.f32 %v1635, %v1547
    %1639 = vrot.lane.b32.xlu0 %v1636, 32
    %v1640 = vpop.permute.xlu0 %1639
    %v1642 = vmul.f32 %v1635, %v1640
    %1644 = vrot.lane.b32.xlu0 %v1642, 32
    %v1645 = vpop.permute.xlu0 %1644
    %v1647 = vadd.f32 %v1637, %v1645
    %v1648 = vtanh.pop %v1647
    %1650 = vrot.lane.b32.xlu0 %v1648, 32
    %v1651 = vpop.permute.xlu0 %1650
    %v1653 = vmul.f32 %v1635, %v1651
    %1655 = vrot.lane.b32.xlu0 %v1653, 64
    %v1656 = vpop.permute.xlu0 %1655
    %v1657 = vsel %vm256, %v1656, 0
    %1659 = vmatprep.subr.mxu0 0.0
    %1660 = vmatpush1.msra.mxu0 %v1055
    %1661 = vmatprep.subr.mxu0 0.0
    %1662 = vmatpush1.msra.mxu0 %v1056
    %1663 = vmatprep.subr.mxu0 0.0
    %1664 = vmatpush1.msra.mxu0 %v1057
    %1665 = vmatprep.subr.mxu0 0.0
    %1666 = vmatpush1.msra.mxu0 %v1058
    %1667 = vmatprep.subr.mxu0 0.0
    %1668 = vmatpush1.msra.mxu0 0.0
    %1669 = vmatprep.subr.mxu0 0.0
    %1670 = vmatpush1.msra.mxu0 0.0
    %1671 = vmatprep.subr.mxu0 0.0
    %1672 = vmatpush1.msra.mxu0 0.0
    %1673 = vmatprep.subr.mxu0 0.0
    %1674 = vmatpush1.msra.mxu0 0.0
    %1675 = vmatprep.subr.mxu0 0.0
    %1676 = vmatpush1.msra.mxu0 0.0
    %1677 = vmatprep.subr.mxu0 0.0
    %1678 = vmatpush1.msra.mxu0 0.0
    %1679 = vmatprep.subr.mxu0 0.0
    %1680 = vmatpush1.msra.mxu0 0.0
    %1681 = vmatprep.subr.mxu0 0.0
    %1682 = vmatpush1.msra.mxu0 0.0
    %1683 = vmatprep.subr.mxu0 0.0
    %1684 = vmatpush1.msra.mxu0 0.0
    %1685 = vmatprep.subr.mxu0 0.0
    %1686 = vmatpush1.msra.mxu0 0.0
    %1687 = vmatprep.subr.mxu0 0.0
    %1688 = vmatpush1.msra.mxu0 0.0
    %1689 = vmatprep.subr.mxu0 0.0
    %1690 = vmatpush1.msra.mxu0 0.0
    %1691 = vmatprep.subr.mxu0 0.0
    %1692 = vmatpush1.msra.mxu0 0.0
    %1693 = vmatprep.subr.mxu0 0.0
    %1694 = vmatpush1.msra.mxu0 0.0
    %1695 = vmatprep.subr.mxu0 0.0
    %1696 = vmatpush1.msra.mxu0 0.0
    %1697 = vmatprep.subr.mxu0 0.0
    %1698 = vmatpush1.msra.mxu0 0.0
    %1699 = vmatprep.subr.mxu0 0.0
    %1700 = vmatpush1.msra.mxu0 0.0
    %1701 = vmatprep.subr.mxu0 0.0
    %1702 = vmatpush1.msra.mxu0 0.0
    %1703 = vmatprep.subr.mxu0 0.0
    %1704 = vmatpush1.msra.mxu0 0.0
    %1705 = vmatprep.subr.mxu0 0.0
    %1706 = vmatpush1.msra.mxu0 0.0
    %1707 = vmatprep.subr.mxu0 0.0
    %1708 = vmatpush1.msra.mxu0 0.0
    %1709 = vmatprep.subr.mxu0 0.0
    %1710 = vmatpush1.msra.mxu0 0.0
    %1711 = vmatprep.subr.mxu0 0.0
    %1712 = vmatpush1.msra.mxu0 0.0
    %1713 = vmatprep.subr.mxu0 0.0
    %1714 = vmatpush1.msra.mxu0 0.0
    %1715 = vmatprep.subr.mxu0 0.0
    %1716 = vmatpush1.msra.mxu0 0.0
    %1717 = vmatprep.subr.mxu0 0.0
    %1718 = vmatpush1.msra.mxu0 0.0
    %1719 = vmatprep.subr.mxu0 0.0
    %1720 = vmatpush1.msra.mxu0 0.0
    %1721 = vmatprep.subr.mxu0 0.0
    %1722 = vmatpush1.msra.mxu0 0.0
    %1723 = vmatprep.mubr.f32.mxu0 0.0
    %1724 = vmatmul.mubr.f32.gmra.mrb[0].mxu0 %v1657
    %v1725 = vpop.f32.mrb[0].mxu0
    %v1726 = vadd.f32 0.0, %v1725
    %v1727 = vpop.f32.mrb[0].mxu0
    %1728 = vdwg.mxu0
    %v1729 = vadd.f32 %v214, %v1726
    %v1730 = vxor.u32 %v1729, 2147483648
    %v1731 = vmul.f32 %v1730, 1.442695
    %v1732 = vpow.pop %v1731
    %v1733 = vadd.f32 %v1732, 1.0
    %v1734 = vrcp.pop %v1733
    %v1735 = vmul.f32 1.0, %v1734
    %v1736 = vtanh.pop %v1729
    %v1737 = vmul.f32 %v1735, %v1647
    %1739 = vrot.lane.b32.xlu0 %v1736, 32
    %v1740 = vpop.permute.xlu0 %1739
    %v1742 = vmul.f32 %v1735, %v1740
    %1744 = vrot.lane.b32.xlu0 %v1742, 32
    %v1745 = vpop.permute.xlu0 %1744
    %v1747 = vadd.f32 %v1737, %v1745
    %v1748 = vtanh.pop %v1747
    %1750 = vrot.lane.b32.xlu0 %v1748, 32
    %v1751 = vpop.permute.xlu0 %1750
    %v1753 = vmul.f32 %v1735, %v1751
    %1755 = vrot.lane.b32.xlu0 %v1753, 64
    %v1756 = vpop.permute.xlu0 %1755
    %v1757 = vsel %vm256, %v1756, 0
    %1759 = vmatprep.subr.mxu0 0.0
    %1760 = vmatpush1.msra.mxu0 %v1055
    %1761 = vmatprep.subr.mxu0 0.0
    %1762 = vmatpush1.msra.mxu0 %v1056
    %1763 = vmatprep.subr.mxu0 0.0
    %1764 = vmatpush1.msra.mxu0 %v1057
    %1765 = vmatprep.subr.mxu0 0.0
    %1766 = vmatpush1.msra.mxu0 %v1058
    %1767 = vmatprep.subr.mxu0 0.0
    %1768 = vmatpush1.msra.mxu0 0.0
    %1769 = vmatprep.subr.mxu0 0.0
    %1770 = vmatpush1.msra.mxu0 0.0
    %1771 = vmatprep.subr.mxu0 0.0
    %1772 = vmatpush1.msra.mxu0 0.0
    %1773 = vmatprep.subr.mxu0 0.0
    %1774 = vmatpush1.msra.mxu0 0.0
    %1775 = vmatprep.subr.mxu0 0.0
    %1776 = vmatpush1.msra.mxu0 0.0
    %1777 = vmatprep.subr.mxu0 0.0
    %1778 = vmatpush1.msra.mxu0 0.0
    %1779 = vmatprep.subr.mxu0 0.0
    %1780 = vmatpush1.msra.mxu0 0.0
    %1781 = vmatprep.subr.mxu0 0.0
    %1782 = vmatpush1.msra.mxu0 0.0
    %1783 = vmatprep.subr.mxu0 0.0
    %1784 = vmatpush1.msra.mxu0 0.0
    %1785 = vmatprep.subr.mxu0 0.0
    %1786 = vmatpush1.msra.mxu0 0.0
    %1787 = vmatprep.subr.mxu0 0.0
    %1788 = vmatpush1.msra.mxu0 0.0
    %1789 = vmatprep.subr.mxu0 0.0
    %1790 = vmatpush1.msra.mxu0 0.0
    %1791 = vmatprep.subr.mxu0 0.0
    %1792 = vmatpush1.msra.mxu0 0.0
    %1793 = vmatprep.subr.mxu0 0.0
    %1794 = vmatpush1.msra.mxu0 0.0
    %1795 = vmatprep.subr.mxu0 0.0
    %1796 = vmatpush1.msra.mxu0 0.0
    %1797 = vmatprep.subr.mxu0 0.0
    %1798 = vmatpush1.msra.mxu0 0.0
    %1799 = vmatprep.subr.mxu0 0.0
    %1800 = vmatpush1.msra.mxu0 0.0
    %1801 = vmatprep.subr.mxu0 0.0
    %1802 = vmatpush1.msra.mxu0 0.0
    %1803 = vmatprep.subr.mxu0 0.0
    %1804 = vmatpush1.msra.mxu0 0.0
    %1805 = vmatprep.subr.mxu0 0.0
    %1806 = vmatpush1.msra.mxu0 0.0
    %1807 = vmatprep.subr.mxu0 0.0
    %1808 = vmatpush1.msra.mxu0 0.0
    %1809 = vmatprep.subr.mxu0 0.0
    %1810 = vmatpush1.msra.mxu0 0.0
    %1811 = vmatprep.subr.mxu0 0.0
    %1812 = vmatpush1.msra.mxu0 0.0
    %1813 = vmatprep.subr.mxu0 0.0
    %1814 = vmatpush1.msra.mxu0 0.0
    %1815 = vmatprep.subr.mxu0 0.0
    %1816 = vmatpush1.msra.mxu0 0.0
    %1817 = vmatprep.subr.mxu0 0.0
    %1818 = vmatpush1.msra.mxu0 0.0
    %1819 = vmatprep.subr.mxu0 0.0
    %1820 = vmatpush1.msra.mxu0 0.0
    %1821 = vmatprep.subr.mxu0 0.0
    %1822 = vmatpush1.msra.mxu0 0.0
    %1823 = vmatprep.mubr.f32.mxu0 0.0
    %1824 = vmatmul.mubr.f32.gmra.mrb[0].mxu0 %v1757
    %v1825 = vpop.f32.mrb[0].mxu0
    %v1826 = vadd.f32 0.0, %v1825
    %v1827 = vpop.f32.mrb[0].mxu0
    %1828 = vdwg.mxu0
    %v1829 = vadd.f32 %v208, %v1826
    %v1830 = vxor.u32 %v1829, 2147483648
    %v1831 = vmul.f32 %v1830, 1.442695
    %v1832 = vpow.pop %v1831
    %v1833 = vadd.f32 %v1832, 1.0
    %v1834 = vrcp.pop %v1833
    %v1835 = vmul.f32 1.0, %v1834
    %v1836 = vtanh.pop %v1829
    %v1837 = vmul.f32 %v1835, %v1747
    %1839 = vrot.lane.b32.xlu0 %v1836, 32
    %v1840 = vpop.permute.xlu0 %1839
    %v1842 = vmul.f32 %v1835, %v1840
    %1844 = vrot.lane.b32.xlu0 %v1842, 32
    %v1845 = vpop.permute.xlu0 %1844
    %v1847 = vadd.f32 %v1837, %v1845
    %v1848 = vtanh.pop %v1847
    %1850 = vrot.lane.b32.xlu0 %v1848, 32
    %v1851 = vpop.permute.xlu0 %1850
    %v1853 = vmul.f32 %v1835, %v1851
    %v1854 = vld [vmem:[%s5] sm:$0xff]
    %v1855 = vld [vmem:[%s5 + $0x8] sm:$0xff]
    %v1856 = vld [vmem:[%s5 + $0x10] sm:$0xff]
    %v1857 = vld [vmem:[%s5 + $0x18] sm:$0xff]
    %v1858 = vld [vmem:[%s5 + $0x20] sm:$0xff]
    %v1859 = vld [vmem:[%s5 + $0x28] sm:$0xff]
    %v1860 = vld [vmem:[%s5 + $0x30] sm:$0xff]
    %v1861 = vld [vmem:[%s5 + $0x38] sm:$0xff]
    %v1862 = vld [vmem:[%s5 + $0x40] sm:$0xff]
    %v1863 = vld [vmem:[%s5 + $0x48] sm:$0xff]
    %v1864 = vld [vmem:[%s5 + $0x50] sm:$0xff]
    %v1865 = vld [vmem:[%s5 + $0x58] sm:$0xff]
    %v1866 = vld [vmem:[%s5 + $0x60] sm:$0xff]
    %v1867 = vld [vmem:[%s5 + $0x68] sm:$0xff]
    %v1868 = vld [vmem:[%s5 + $0x70] sm:$0xff]
    %v1869 = vld [vmem:[%s5 + $0x78] sm:$0xff]
    %1871 = vrot.lane.b32.xlu0 %v1853, 64
    %v1872 = vpop.permute.xlu0 %1871
    %v1873 = vsel %vm256, %v1872, 0
    %1875 = vmatprep.subr.mxu0 %v1863
    %1876 = vmatpush1.msra.mxu0 %v1862
    %1877 = vmatprep.subr.mxu0 %v1865
    %1878 = vmatpush1.msra.mxu0 %v1864
    %1879 = vmatprep.subr.mxu0 %v1867
    %1880 = vmatpush1.msra.mxu0 %v1866
    %1881 = vmatprep.subr.mxu0 %v1869
    %1882 = vmatpush1.msra.mxu0 %v1868
    %1883 = vmatprep.subr.mxu0 0.0
    %1884 = vmatpush1.msra.mxu0 0.0
    %1885 = vmatprep.subr.mxu0 0.0
    %1886 = vmatpush1.msra.mxu0 0.0
    %1887 = vmatprep.subr.mxu0 0.0
    %1888 = vmatpush1.msra.mxu0 0.0
    %1889 = vmatprep.subr.mxu0 0.0
    %1890 = vmatpush1.msra.mxu0 0.0
    %1891 = vmatprep.subr.mxu0 0.0
    %1892 = vmatpush1.msra.mxu0 0.0
    %1893 = vmatprep.subr.mxu0 0.0
    %1894 = vmatpush1.msra.mxu0 0.0
    %1895 = vmatprep.subr.mxu0 0.0
    %1896 = vmatpush1.msra.mxu0 0.0
    %1897 = vmatprep.subr.mxu0 0.0
    %1898 = vmatpush1.msra.mxu0 0.0
    %1899 = vmatprep.subr.mxu0 0.0
    %1900 = vmatpush1.msra.mxu0 0.0
    %1901 = vmatprep.subr.mxu0 0.0
    %1902 = vmatpush1.msra.mxu0 0.0
    %1903 = vmatprep.subr.mxu0 0.0
    %1904 = vmatpush1.msra.mxu0 0.0
    %1905 = vmatprep.subr.mxu0 0.0
    %1906 = vmatpush1.msra.mxu0 0.0
    %1907 = vmatprep.subr.mxu0 0.0
    %1908 = vmatpush1.msra.mxu0 0.0
    %1909 = vmatprep.subr.mxu0 0.0
    %1910 = vmatpush1.msra.mxu0 0.0
    %1911 = vmatprep.subr.mxu0 0.0
    %1912 = vmatpush1.msra.mxu0 0.0
    %1913 = vmatprep.subr.mxu0 0.0
    %1914 = vmatpush1.msra.mxu0 0.0
    %1915 = vmatprep.subr.mxu0 0.0
    %1916 = vmatpush1.msra.mxu0 0.0
    %1917 = vmatprep.subr.mxu0 0.0
    %1918 = vmatpush1.msra.mxu0 0.0
    %1919 = vmatprep.subr.mxu0 0.0
    %1920 = vmatpush1.msra.mxu0 0.0
    %1921 = vmatprep.subr.mxu0 0.0
    %1922 = vmatpush1.msra.mxu0 0.0
    %1923 = vmatprep.subr.mxu0 0.0
    %1924 = vmatpush1.msra.mxu0 0.0
    %1925 = vmatprep.subr.mxu0 0.0
    %1926 = vmatpush1.msra.mxu0 0.0
    %1927 = vmatprep.subr.mxu0 0.0
    %1928 = vmatpush1.msra.mxu0 0.0
    %1929 = vmatprep.subr.mxu0 0.0
    %1930 = vmatpush1.msra.mxu0 0.0
    %1931 = vmatprep.subr.mxu0 0.0
    %1932 = vmatpush1.msra.mxu0 0.0
    %1933 = vmatprep.subr.mxu0 0.0
    %1934 = vmatpush1.msra.mxu0 0.0
    %1935 = vmatprep.subr.mxu0 0.0
    %1936 = vmatpush1.msra.mxu0 0.0
    %1937 = vmatprep.subr.mxu0 0.0
    %1938 = vmatpush1.msra.mxu0 0.0
    %1939 = vmatprep.mubr.f32.mxu0 0.0
    %1940 = vmatmul.mubr.f32.gmra.mrb[0].mxu0 %v1873
    %v1941 = vpop.f32.mrb[0].mxu0
    %v1942 = vadd.f32 0.0, %v1941
    %v1943 = vpop.f32.mrb[0].mxu0
    %1944 = vmatprep.mubr.f32.mxu0 0.0
    %1945 = vmatmul.mubr.f32.gmra.mrb[0].mxu0 %v1757
    %v1946 = vpop.f32.mrb[0].mxu0
    %v1947 = vadd.f32 0.0, %v1946
    %v1948 = vpop.f32.mrb[0].mxu0
    %1949 = vmatprep.mubr.f32.mxu0 0.0
    %1950 = vmatmul.mubr.f32.gmra.mrb[0].mxu0 %v1657
    %v1951 = vpop.f32.mrb[0].mxu0
    %v1952 = vadd.f32 0.0, %v1951
    %v1953 = vpop.f32.mrb[0].mxu0
    %1954 = vmatprep.mubr.f32.mxu0 0.0
    %1955 = vmatmul.mubr.f32.gmra.mrb[0].mxu0 %v1557
    %v1956 = vpop.f32.mrb[0].mxu0
    %v1957 = vadd.f32 0.0, %v1956
    %v1958 = vpop.f32.mrb[0].mxu0
    %1959 = vmatprep.mubr.f32.mxu0 0.0
    %1960 = vmatmul.mubr.f32.gmra.mrb[0].mxu0 %v1457
    %v1961 = vpop.f32.mrb[0].mxu0
    %v1962 = vadd.f32 0.0, %v1961
    %v1963 = vpop.f32.mrb[0].mxu0
    %1964 = vmatprep.mubr.f32.mxu0 0.0
    %1965 = vmatmul.mubr.f32.gmra.mrb[0].mxu0 %v1357
    %v1966 = vpop.f32.mrb[0].mxu0
    %v1967 = vadd.f32 0.0, %v1966
    %v1968 = vpop.f32.mrb[0].mxu0
    %1969 = vmatprep.mubr.f32.mxu0 0.0
    %1970 = vmatmul.mubr.f32.gmra.mrb[0].mxu0 %v1257
    %v1971 = vpop.f32.mrb[0].mxu0
    %v1972 = vadd.f32 0.0, %v1971
    %v1973 = vpop.f32.mrb[0].mxu0
    %1974 = vmatprep.mubr.f32.mxu0 0.0
    %1975 = vmatmul.mubr.f32.gmra.mrb[0].mxu0 %v1157
    %v1976 = vpop.f32.mrb[0].mxu0
    %v1977 = vadd.f32 0.0, %v1976
    %v1978 = vpop.f32.mrb[0].mxu0
    %v1979 = vadd.f32 0.0, %v1978
    %1980 = vdwg.mxu0
    %1982 = vrot.lane.b32.xlu0 %v1054, 64
    %v1983 = vpop.permute.xlu0 %1982
    %v1984 = vsel %vm256, %v1983, 0
    %1986 = vmatprep.subr.mxu0 %v1855
    %1987 = vmatpush1.msra.mxu0 %v1854
    %1988 = vmatprep.subr.mxu0 %v1857
    %1989 = vmatpush1.msra.mxu0 %v1856
    %1990 = vmatprep.subr.mxu0 %v1859
    %1991 = vmatpush1.msra.mxu0 %v1858
    %1992 = vmatprep.subr.mxu0 %v1861
    %1993 = vmatpush1.msra.mxu0 %v1860
    %1994 = vmatprep.subr.mxu0 0.0
    %1995 = vmatpush1.msra.mxu0 0.0
    %1996 = vmatprep.subr.mxu0 0.0
    %1997 = vmatpush1.msra.mxu0 0.0
    %1998 = vmatprep.subr.mxu0 0.0
    %1999 = vmatpush1.msra.mxu0 0.0
    %2000 = vmatprep.subr.mxu0 0.0
    %2001 = vmatpush1.msra.mxu0 0.0
    %2002 = vmatprep.subr.mxu0 0.0
    %2003 = vmatpush1.msra.mxu0 0.0
    %2004 = vmatprep.subr.mxu0 0.0
    %2005 = vmatpush1.msra.mxu0 0.0
    %2006 = vmatprep.subr.mxu0 0.0
    %2007 = vmatpush1.msra.mxu0 0.0
    %2008 = vmatprep.subr.mxu0 0.0
    %2009 = vmatpush1.msra.mxu0 0.0
    %2010 = vmatprep.subr.mxu0 0.0
    %2011 = vmatpush1.msra.mxu0 0.0
    %2012 = vmatprep.subr.mxu0 0.0
    %2013 = vmatpush1.msra.mxu0 0.0
    %2014 = vmatprep.subr.mxu0 0.0
    %2015 = vmatpush1.msra.mxu0 0.0
    %2016 = vmatprep.subr.mxu0 0.0
    %2017 = vmatpush1.msra.mxu0 0.0
    %2018 = vmatprep.subr.mxu0 0.0
    %2019 = vmatpush1.msra.mxu0 0.0
    %2020 = vmatprep.subr.mxu0 0.0
    %2021 = vmatpush1.msra.mxu0 0.0
    %2022 = vmatprep.subr.mxu0 0.0
    %2023 = vmatpush1.msra.mxu0 0.0
    %2024 = vmatprep.subr.mxu0 0.0
    %2025 = vmatpush1.msra.mxu0 0.0
    %2026 = vmatprep.subr.mxu0 0.0
    %2027 = vmatpush1.msra.mxu0 0.0
    %2028 = vmatprep.subr.mxu0 0.0
    %2029 = vmatpush1.msra.mxu0 0.0
    %2030 = vmatprep.subr.mxu0 0.0
    %2031 = vmatpush1.msra.mxu0 0.0
    %2032 = vmatprep.subr.mxu0 0.0
    %2033 = vmatpush1.msra.mxu0 0.0
    %2034 = vmatprep.subr.mxu0 0.0
    %2035 = vmatpush1.msra.mxu0 0.0
    %2036 = vmatprep.subr.mxu0 0.0
    %2037 = vmatpush1.msra.mxu0 0.0
    %2038 = vmatprep.subr.mxu0 0.0
    %2039 = vmatpush1.msra.mxu0 0.0
    %2040 = vmatprep.subr.mxu0 0.0
    %2041 = vmatpush1.msra.mxu0 0.0
    %2042 = vmatprep.subr.mxu0 0.0
    %2043 = vmatpush1.msra.mxu0 0.0
    %2044 = vmatprep.subr.mxu0 0.0
    %2045 = vmatpush1.msra.mxu0 0.0
    %2046 = vmatprep.subr.mxu0 0.0
    %2047 = vmatpush1.msra.mxu0 0.0
    %2048 = vmatprep.subr.mxu0 0.0
    %2049 = vmatpush1.msra.mxu0 0.0
    %2050 = vmatprep.mubr.f32.mxu0 0.0
    %2051 = vmatmul.mubr.f32.gmra.mrb[0].mxu0 %v358
    %v2052 = vpop.f32.mrb[0].mxu0
    %v2053 = vadd.f32 %v1942, %v2052
    %v2054 = vpop.f32.mrb[0].mxu0
    %2055 = vmatprep.mubr.f32.mxu0 0.0
    %2056 = vmatmul.mubr.f32.gmra.mrb[0].mxu0 %v458
    %v2057 = vpop.f32.mrb[0].mxu0
    %v2058 = vadd.f32 %v1947, %v2057
    %v2059 = vpop.f32.mrb[0].mxu0
    %2060 = vmatprep.mubr.f32.mxu0 0.0
    %2061 = vmatmul.mubr.f32.gmra.mrb[0].mxu0 %v558
    %v2062 = vpop.f32.mrb[0].mxu0
    %v2063 = vadd.f32 %v1952, %v2062
    %v2064 = vpop.f32.mrb[0].mxu0
    %2065 = vmatprep.mubr.f32.mxu0 0.0
    %2066 = vmatmul.mubr.f32.gmra.mrb[0].mxu0 %v658
    %v2067 = vpop.f32.mrb[0].mxu0
    %v2068 = vadd.f32 %v1957, %v2067
    %v2069 = vpop.f32.mrb[0].mxu0
    %2070 = vmatprep.mubr.f32.mxu0 0.0
    %2071 = vmatmul.mubr.f32.gmra.mrb[0].mxu0 %v758
    %v2072 = vpop.f32.mrb[0].mxu0
    %v2073 = vadd.f32 %v1962, %v2072
    %v2074 = vpop.f32.mrb[0].mxu0
    %2075 = vmatprep.mubr.f32.mxu0 0.0
    %2076 = vmatmul.mubr.f32.gmra.mrb[0].mxu0 %v858
    %v2077 = vpop.f32.mrb[0].mxu0
    %v2078 = vadd.f32 %v1967, %v2077
    %v2079 = vpop.f32.mrb[0].mxu0
    %2080 = vmatprep.mubr.f32.mxu0 0.0
    %2081 = vmatmul.mubr.f32.gmra.mrb[0].mxu0 %v958
    %v2082 = vpop.f32.mrb[0].mxu0
    %v2083 = vadd.f32 %v1972, %v2082
    %v2084 = vpop.f32.mrb[0].mxu0
    %2085 = vmatprep.mubr.f32.mxu0 0.0
    %2086 = vmatmul.mubr.f32.gmra.mrb[0].mxu0 %v1984
    %v2087 = vpop.f32.mrb[0].mxu0
    %v2088 = vadd.f32 %v1977, %v2087
    %v2089 = vpop.f32.mrb[0].mxu0
    %v2090 = vadd.f32 %v1979, %v2089
    %2091 = vdwg.mxu0
    %v2092 = vld [vmem:[%s8] sm:$0x3]
    %v2094 = vlaneseq
    %v2095 = vshrl.u32 %v2094, 7
    %v2096 = vsub.s32 0, %v2095
    %v2097 = vrot.slane %v2092, %v2096
    %v2098 = vlaneseq
    %v2099 = vshrl.u32 %v2098, 7
    %v2100 = vsub.s32 1, %v2099
    %v2101 = vrot.slane %v2092, %v2100
    %v2104 = vadd.f32 %v2053, %v2097
    %v2105 = vadd.f32 %v2058, %v2097
    %v2106 = vadd.f32 %v2063, %v2097
    %v2107 = vadd.f32 %v2068, %v2097
    %v2108 = vadd.f32 %v2073, %v2097
    %v2109 = vadd.f32 %v2078, %v2097
    %v2110 = vadd.f32 %v2083, %v2097
    %v2111 = vadd.f32 %v2088, %v2097
    %v2112 = vadd.f32 %v2090, %v2101
    %v2113 = vld [vmem:[#allocation4] sm:$0xff]
    %v2114 = vld [vmem:[#allocation4 + $0x8] sm:$0xff]
    %v2115 = vld [vmem:[#allocation4 + $0x10] sm:$0xff]
    %v2116 = vld [vmem:[#allocation4 + $0x18] sm:$0xff]
    %2117 = vmatprep.subr.mxu0 0.0
    %2118 = vmatpush1.msra.mxu0 %v2113
    %2119 = vmatprep.subr.mxu0 0.0
    %2120 = vmatpush1.msra.mxu0 %v2114
    %2121 = vmatprep.subr.mxu0 0.0
    %2122 = vmatpush1.msra.mxu0 %v2115
    %2123 = vmatprep.subr.mxu0 0.0
    %2124 = vmatpush1.msra.mxu0 %v2116
    %2125 = vmatprep.subr.mxu0 0.0
    %2126 = vmatpush1.msra.mxu0 0.0
    %2127 = vmatprep.subr.mxu0 0.0
    %2128 = vmatpush1.msra.mxu0 0.0
    %2129 = vmatprep.subr.mxu0 0.0
    %2130 = vmatpush1.msra.mxu0 0.0
    %2131 = vmatprep.subr.mxu0 0.0
    %2132 = vmatpush1.msra.mxu0 0.0
    %2133 = vmatprep.subr.mxu0 0.0
    %2134 = vmatpush1.msra.mxu0 0.0
    %2135 = vmatprep.subr.mxu0 0.0
    %2136 = vmatpush1.msra.mxu0 0.0
    %2137 = vmatprep.subr.mxu0 0.0
    %2138 = vmatpush1.msra.mxu0 0.0
    %2139 = vmatprep.subr.mxu0 0.0
    %2140 = vmatpush1.msra.mxu0 0.0
    %2141 = vmatprep.subr.mxu0 0.0
    %2142 = vmatpush1.msra.mxu0 0.0
    %2143 = vmatprep.subr.mxu0 0.0
    %2144 = vmatpush1.msra.mxu0 0.0
    %2145 = vmatprep.subr.mxu0 0.0
    %2146 = vmatpush1.msra.mxu0 0.0
    %2147 = vmatprep.subr.mxu0 0.0
    %2148 = vmatpush1.msra.mxu0 0.0
    %2149 = vmatprep.subr.mxu0 0.0
    %2150 = vmatpush1.msra.mxu0 0.0
    %2151 = vmatprep.subr.mxu0 0.0
    %2152 = vmatpush1.msra.mxu0 0.0
    %2153 = vmatprep.subr.mxu0 0.0
    %2154 = vmatpush1.msra.mxu0 0.0
    %2155 = vmatprep.subr.mxu0 0.0
    %2156 = vmatpush1.msra.mxu0 0.0
    %2157 = vmatprep.subr.mxu0 0.0
    %2158 = vmatpush1.msra.mxu0 0.0
    %2159 = vmatprep.subr.mxu0 0.0
    %2160 = vmatpush1.msra.mxu0 0.0
    %2161 = vmatprep.subr.mxu0 0.0
    %2162 = vmatpush1.msra.mxu0 0.0
    %2163 = vmatprep.subr.mxu0 0.0
    %2164 = vmatpush1.msra.mxu0 0.0
    %2165 = vmatprep.subr.mxu0 0.0
    %2166 = vmatpush1.msra.mxu0 0.0
    %2167 = vmatprep.subr.mxu0 0.0
    %2168 = vmatpush1.msra.mxu0 0.0
    %2169 = vmatprep.subr.mxu0 0.0
    %2170 = vmatpush1.msra.mxu0 0.0
    %2171 = vmatprep.subr.mxu0 0.0
    %2172 = vmatpush1.msra.mxu0 0.0
    %2173 = vmatprep.subr.mxu0 0.0
    %2174 = vmatpush1.msra.mxu0 0.0
    %2175 = vmatprep.subr.mxu0 0.0
    %2176 = vmatpush1.msra.mxu0 0.0
    %2177 = vmatprep.subr.mxu0 0.0
    %2178 = vmatpush1.msra.mxu0 0.0
    %2179 = vmatprep.subr.mxu0 0.0
    %2180 = vmatpush1.msra.mxu0 0.0
    %2181 = vmatprep.mubr.f32.mxu0 0.0
    %2182 = vmatmul.mubr.f32.gmra.mrb[0].mxu0 %v258
    %v2183 = vpop.f32.mrb[0].mxu0
    %v2184 = vadd.f32 0.0, %v2183
    %v2185 = vpop.f32.mrb[0].mxu0
    %2186 = vdwg.mxu0
    %v2187 = vadd.f32 %v2104, %v2184
    %v2188 = vxor.u32 %v2187, 2147483648
    %v2189 = vmul.f32 %v2188, 1.442695
    %v2190 = vpow.pop %v2189
    %v2191 = vadd.f32 %v2190, 1.0
    %v2192 = vrcp.pop %v2191
    %v2193 = vmul.f32 1.0, %v2192
    %v2194 = vtanh.pop %v2187
    %v2195 = vmul.f32 %v2193, 0.0
    %2197 = vrot.lane.b32.xlu0 %v2194, 32
    %v2198 = vpop.permute.xlu0 %2197
    %v2200 = vmul.f32 %v2193, %v2198
    %2202 = vrot.lane.b32.xlu0 %v2200, 32
    %v2203 = vpop.permute.xlu0 %2202
    %v2205 = vadd.f32 %v2195, %v2203
    %v2206 = vtanh.pop %v2205
    %2208 = vrot.lane.b32.xlu0 %v2206, 32
    %v2209 = vpop.permute.xlu0 %2208
    %v2211 = vmul.f32 %v2193, %v2209
    %2213 = vrot.lane.b32.xlu0 %v2211, 64
    %v2214 = vpop.permute.xlu0 %2213
    %v2215 = vsel %vm256, %v2214, 0
    %2217 = vmatprep.subr.mxu0 0.0
    %2218 = vmatpush1.msra.mxu0 %v2113
    %2219 = vmatprep.subr.mxu0 0.0
    %2220 = vmatpush1.msra.mxu0 %v2114
    %2221 = vmatprep.subr.mxu0 0.0
    %2222 = vmatpush1.msra.mxu0 %v2115
    %2223 = vmatprep.subr.mxu0 0.0
    %2224 = vmatpush1.msra.mxu0 %v2116
    %2225 = vmatprep.subr.mxu0 0.0
    %2226 = vmatpush1.msra.mxu0 0.0
    %2227 = vmatprep.subr.mxu0 0.0
    %2228 = vmatpush1.msra.mxu0 0.0
    %2229 = vmatprep.subr.mxu0 0.0
    %2230 = vmatpush1.msra.mxu0 0.0
    %2231 = vmatprep.subr.mxu0 0.0
    %2232 = vmatpush1.msra.mxu0 0.0
    %2233 = vmatprep.subr.mxu0 0.0
    %2234 = vmatpush1.msra.mxu0 0.0
    %2235 = vmatprep.subr.mxu0 0.0
    %2236 = vmatpush1.msra.mxu0 0.0
    %2237 = vmatprep.subr.mxu0 0.0
    %2238 = vmatpush1.msra.mxu0 0.0
    %2239 = vmatprep.subr.mxu0 0.0
    %2240 = vmatpush1.msra.mxu0 0.0
    %2241 = vmatprep.subr.mxu0 0.0
    %2242 = vmatpush1.msra.mxu0 0.0
    %2243 = vmatprep.subr.mxu0 0.0
    %2244 = vmatpush1.msra.mxu0 0.0
    %2245 = vmatprep.subr.mxu0 0.0
    %2246 = vmatpush1.msra.mxu0 0.0
    %2247 = vmatprep.subr.mxu0 0.0
    %2248 = vmatpush1.msra.mxu0 0.0
    %2249 = vmatprep.subr.mxu0 0.0
    %2250 = vmatpush1.msra.mxu0 0.0
    %2251 = vmatprep.subr.mxu0 0.0
    %2252 = vmatpush1.msra.mxu0 0.0
    %2253 = vmatprep.subr.mxu0 0.0
    %2254 = vmatpush1.msra.mxu0 0.0
    %2255 = vmatprep.subr.mxu0 0.0
    %2256 = vmatpush1.msra.mxu0 0.0
    %2257 = vmatprep.subr.mxu0 0.0
    %2258 = vmatpush1.msra.mxu0 0.0
    %2259 = vmatprep.subr.mxu0 0.0
    %2260 = vmatpush1.msra.mxu0 0.0
    %2261 = vmatprep.subr.mxu0 0.0
    %2262 = vmatpush1.msra.mxu0 0.0
    %2263 = vmatprep.subr.mxu0 0.0
    %2264 = vmatpush1.msra.mxu0 0.0
    %2265 = vmatprep.subr.mxu0 0.0
    %2266 = vmatpush1.msra.mxu0 0.0
    %2267 = vmatprep.subr.mxu0 0.0
    %2268 = vmatpush1.msra.mxu0 0.0
    %2269 = vmatprep.subr.mxu0 0.0
    %2270 = vmatpush1.msra.mxu0 0.0
    %2271 = vmatprep.subr.mxu0 0.0
    %2272 = vmatpush1.msra.mxu0 0.0
    %2273 = vmatprep.subr.mxu0 0.0
    %2274 = vmatpush1.msra.mxu0 0.0
    %2275 = vmatprep.subr.mxu0 0.0
    %2276 = vmatpush1.msra.mxu0 0.0
    %2277 = vmatprep.subr.mxu0 0.0
    %2278 = vmatpush1.msra.mxu0 0.0
    %2279 = vmatprep.subr.mxu0 0.0
    %2280 = vmatpush1.msra.mxu0 0.0
    %2281 = vmatprep.mubr.f32.mxu0 0.0
    %2282 = vmatmul.mubr.f32.gmra.mrb[0].mxu0 %v2215
    %v2283 = vpop.f32.mrb[0].mxu0
    %v2284 = vadd.f32 0.0, %v2283
    %v2285 = vpop.f32.mrb[0].mxu0
    %2286 = vdwg.mxu0
    %v2287 = vadd.f32 %v2105, %v2284
    %v2288 = vxor.u32 %v2287, 2147483648
    %v2289 = vmul.f32 %v2288, 1.442695
    %v2290 = vpow.pop %v2289
    %v2291 = vadd.f32 %v2290, 1.0
    %v2292 = vrcp.pop %v2291
    %v2293 = vmul.f32 1.0, %v2292
    %v2294 = vtanh.pop %v2287
    %v2295 = vmul.f32 %v2293, %v2205
    %2297 = vrot.lane.b32.xlu0 %v2294, 32
    %v2298 = vpop.permute.xlu0 %2297
    %v2300 = vmul.f32 %v2293, %v2298
    %2302 = vrot.lane.b32.xlu0 %v2300, 32
    %v2303 = vpop.permute.xlu0 %2302
    %v2305 = vadd.f32 %v2295, %v2303
    %v2306 = vtanh.pop %v2305
    %2308 = vrot.lane.b32.xlu0 %v2306, 32
    %v2309 = vpop.permute.xlu0 %2308
    %v2311 = vmul.f32 %v2293, %v2309
    %2313 = vrot.lane.b32.xlu0 %v2311, 64
    %v2314 = vpop.permute.xlu0 %2313
    %v2315 = vsel %vm256, %v2314, 0
    %2317 = vmatprep.subr.mxu0 0.0
    %2318 = vmatpush1.msra.mxu0 %v2113
    %2319 = vmatprep.subr.mxu0 0.0
    %2320 = vmatpush1.msra.mxu0 %v2114
    %2321 = vmatprep.subr.mxu0 0.0
    %2322 = vmatpush1.msra.mxu0 %v2115
    %2323 = vmatprep.subr.mxu0 0.0
    %2324 = vmatpush1.msra.mxu0 %v2116
    %2325 = vmatprep.subr.mxu0 0.0
    %2326 = vmatpush1.msra.mxu0 0.0
    %2327 = vmatprep.subr.mxu0 0.0
    %2328 = vmatpush1.msra.mxu0 0.0
    %2329 = vmatprep.subr.mxu0 0.0
    %2330 = vmatpush1.msra.mxu0 0.0
    %2331 = vmatprep.subr.mxu0 0.0
    %2332 = vmatpush1.msra.mxu0 0.0
    %2333 = vmatprep.subr.mxu0 0.0
    %2334 = vmatpush1.msra.mxu0 0.0
    %2335 = vmatprep.subr.mxu0 0.0
    %2336 = vmatpush1.msra.mxu0 0.0
    %2337 = vmatprep.subr.mxu0 0.0
    %2338 = vmatpush1.msra.mxu0 0.0
    %2339 = vmatprep.subr.mxu0 0.0
    %2340 = vmatpush1.msra.mxu0 0.0
    %2341 = vmatprep.subr.mxu0 0.0
    %2342 = vmatpush1.msra.mxu0 0.0
    %2343 = vmatprep.subr.mxu0 0.0
    %2344 = vmatpush1.msra.mxu0 0.0
    %2345 = vmatprep.subr.mxu0 0.0
    %2346 = vmatpush1.msra.mxu0 0.0
    %2347 = vmatprep.subr.mxu0 0.0
    %2348 = vmatpush1.msra.mxu0 0.0
    %2349 = vmatprep.subr.mxu0 0.0
    %2350 = vmatpush1.msra.mxu0 0.0
    %2351 = vmatprep.subr.mxu0 0.0
    %2352 = vmatpush1.msra.mxu0 0.0
    %2353 = vmatprep.subr.mxu0 0.0
    %2354 = vmatpush1.msra.mxu0 0.0
    %2355 = vmatprep.subr.mxu0 0.0
    %2356 = vmatpush1.msra.mxu0 0.0
    %2357 = vmatprep.subr.mxu0 0.0
    %2358 = vmatpush1.msra.mxu0 0.0
    %2359 = vmatprep.subr.mxu0 0.0
    %2360 = vmatpush1.msra.mxu0 0.0
    %2361 = vmatprep.subr.mxu0 0.0
    %2362 = vmatpush1.msra.mxu0 0.0
    %2363 = vmatprep.subr.mxu0 0.0
    %2364 = vmatpush1.msra.mxu0 0.0
    %2365 = vmatprep.subr.mxu0 0.0
    %2366 = vmatpush1.msra.mxu0 0.0
    %2367 = vmatprep.subr.mxu0 0.0
    %2368 = vmatpush1.msra.mxu0 0.0
    %2369 = vmatprep.subr.mxu0 0.0
    %2370 = vmatpush1.msra.mxu0 0.0
    %2371 = vmatprep.subr.mxu0 0.0
    %2372 = vmatpush1.msra.mxu0 0.0
    %2373 = vmatprep.subr.mxu0 0.0
    %2374 = vmatpush1.msra.mxu0 0.0
    %2375 = vmatprep.subr.mxu0 0.0
    %2376 = vmatpush1.msra.mxu0 0.0
    %2377 = vmatprep.subr.mxu0 0.0
    %2378 = vmatpush1.msra.mxu0 0.0
    %2379 = vmatprep.subr.mxu0 0.0
    %2380 = vmatpush1.msra.mxu0 0.0
    %2381 = vmatprep.mubr.f32.mxu0 0.0
    %2382 = vmatmul.mubr.f32.gmra.mrb[0].mxu0 %v2315
    %v2383 = vpop.f32.mrb[0].mxu0
    %v2384 = vadd.f32 0.0, %v2383
    %v2385 = vpop.f32.mrb[0].mxu0
    %2386 = vdwg.mxu0
    %v2387 = vadd.f32 %v2106, %v2384
    %v2388 = vxor.u32 %v2387, 2147483648
    %v2389 = vmul.f32 %v2388, 1.442695
    %v2390 = vpow.pop %v2389
    %v2391 = vadd.f32 %v2390, 1.0
    %v2392 = vrcp.pop %v2391
    %v2393 = vmul.f32 1.0, %v2392
    %v2394 = vtanh.pop %v2387
    %v2395 = vmul.f32 %v2393, %v2305
    %2397 = vrot.lane.b32.xlu0 %v2394, 32
    %v2398 = vpop.permute.xlu0 %2397
    %v2400 = vmul.f32 %v2393, %v2398
    %2402 = vrot.lane.b32.xlu0 %v2400, 32
    %v2403 = vpop.permute.xlu0 %2402
    %v2405 = vadd.f32 %v2395, %v2403
    %v2406 = vtanh.pop %v2405
    %2408 = vrot.lane.b32.xlu0 %v2406, 32
    %v2409 = vpop.permute.xlu0 %2408
    %v2411 = vmul.f32 %v2393, %v2409
    %2413 = vrot.lane.b32.xlu0 %v2411, 64
    %v2414 = vpop.permute.xlu0 %2413
    %v2415 = vsel %vm256, %v2414, 0
    %2417 = vmatprep.subr.mxu0 0.0
    %2418 = vmatpush1.msra.mxu0 %v2113
    %2419 = vmatprep.subr.mxu0 0.0
    %2420 = vmatpush1.msra.mxu0 %v2114
    %2421 = vmatprep.subr.mxu0 0.0
    %2422 = vmatpush1.msra.mxu0 %v2115
    %2423 = vmatprep.subr.mxu0 0.0
    %2424 = vmatpush1.msra.mxu0 %v2116
    %2425 = vmatprep.subr.mxu0 0.0
    %2426 = vmatpush1.msra.mxu0 0.0
    %2427 = vmatprep.subr.mxu0 0.0
    %2428 = vmatpush1.msra.mxu0 0.0
    %2429 = vmatprep.subr.mxu0 0.0
    %2430 = vmatpush1.msra.mxu0 0.0
    %2431 = vmatprep.subr.mxu0 0.0
    %2432 = vmatpush1.msra.mxu0 0.0
    %2433 = vmatprep.subr.mxu0 0.0
    %2434 = vmatpush1.msra.mxu0 0.0
    %2435 = vmatprep.subr.mxu0 0.0
    %2436 = vmatpush1.msra.mxu0 0.0
    %2437 = vmatprep.subr.mxu0 0.0
    %2438 = vmatpush1.msra.mxu0 0.0
    %2439 = vmatprep.subr.mxu0 0.0
    %2440 = vmatpush1.msra.mxu0 0.0
    %2441 = vmatprep.subr.mxu0 0.0
    %2442 = vmatpush1.msra.mxu0 0.0
    %2443 = vmatprep.subr.mxu0 0.0
    %2444 = vmatpush1.msra.mxu0 0.0
    %2445 = vmatprep.subr.mxu0 0.0
    %2446 = vmatpush1.msra.mxu0 0.0
    %2447 = vmatprep.subr.mxu0 0.0
    %2448 = vmatpush1.msra.mxu0 0.0
    %2449 = vmatprep.subr.mxu0 0.0
    %2450 = vmatpush1.msra.mxu0 0.0
    %2451 = vmatprep.subr.mxu0 0.0
    %2452 = vmatpush1.msra.mxu0 0.0
    %2453 = vmatprep.subr.mxu0 0.0
    %2454 = vmatpush1.msra.mxu0 0.0
    %2455 = vmatprep.subr.mxu0 0.0
    %2456 = vmatpush1.msra.mxu0 0.0
    %2457 = vmatprep.subr.mxu0 0.0
    %2458 = vmatpush1.msra.mxu0 0.0
    %2459 = vmatprep.subr.mxu0 0.0
    %2460 = vmatpush1.msra.mxu0 0.0
    %2461 = vmatprep.subr.mxu0 0.0
    %2462 = vmatpush1.msra.mxu0 0.0
    %2463 = vmatprep.subr.mxu0 0.0
    %2464 = vmatpush1.msra.mxu0 0.0
    %2465 = vmatprep.subr.mxu0 0.0
    %2466 = vmatpush1.msra.mxu0 0.0
    %2467 = vmatprep.subr.mxu0 0.0
    %2468 = vmatpush1.msra.mxu0 0.0
    %2469 = vmatprep.subr.mxu0 0.0
    %2470 = vmatpush1.msra.mxu0 0.0
    %2471 = vmatprep.subr.mxu0 0.0
    %2472 = vmatpush1.msra.mxu0 0.0
    %2473 = vmatprep.subr.mxu0 0.0
    %2474 = vmatpush1.msra.mxu0 0.0
    %2475 = vmatprep.subr.mxu0 0.0
    %2476 = vmatpush1.msra.mxu0 0.0
    %2477 = vmatprep.subr.mxu0 0.0
    %2478 = vmatpush1.msra.mxu0 0.0
    %2479 = vmatprep.subr.mxu0 0.0
    %2480 = vmatpush1.msra.mxu0 0.0
    %2481 = vmatprep.mubr.f32.mxu0 0.0
    %2482 = vmatmul.mubr.f32.gmra.mrb[0].mxu0 %v2415
    %v2483 = vpop.f32.mrb[0].mxu0
    %v2484 = vadd.f32 0.0, %v2483
    %v2485 = vpop.f32.mrb[0].mxu0
    %2486 = vdwg.mxu0
    %v2487 = vadd.f32 %v2107, %v2484
    %v2488 = vxor.u32 %v2487, 2147483648
    %v2489 = vmul.f32 %v2488, 1.442695
    %v2490 = vpow.pop %v2489
    %v2491 = vadd.f32 %v2490, 1.0
    %v2492 = vrcp.pop %v2491
    %v2493 = vmul.f32 1.0, %v2492
    %v2494 = vtanh.pop %v2487
    %v2495 = vmul.f32 %v2493, %v2405
    %2497 = vrot.lane.b32.xlu0 %v2494, 32
    %v2498 = vpop.permute.xlu0 %2497
    %v2500 = vmul.f32 %v2493, %v2498
    %2502 = vrot.lane.b32.xlu0 %v2500, 32
    %v2503 = vpop.permute.xlu0 %2502
    %v2505 = vadd.f32 %v2495, %v2503
    %v2506 = vtanh.pop %v2505
    %2508 = vrot.lane.b32.xlu0 %v2506, 32
    %v2509 = vpop.permute.xlu0 %2508
    %v2511 = vmul.f32 %v2493, %v2509
    %2513 = vrot.lane.b32.xlu0 %v2511, 64
    %v2514 = vpop.permute.xlu0 %2513
    %v2515 = vsel %vm256, %v2514, 0
    %2517 = vmatprep.subr.mxu0 0.0
    %2518 = vmatpush1.msra.mxu0 %v2113
    %2519 = vmatprep.subr.mxu0 0.0
    %2520 = vmatpush1.msra.mxu0 %v2114
    %2521 = vmatprep.subr.mxu0 0.0
    %2522 = vmatpush1.msra.mxu0 %v2115
    %2523 = vmatprep.subr.mxu0 0.0
    %2524 = vmatpush1.msra.mxu0 %v2116
    %2525 = vmatprep.subr.mxu0 0.0
    %2526 = vmatpush1.msra.mxu0 0.0
    %2527 = vmatprep.subr.mxu0 0.0
    %2528 = vmatpush1.msra.mxu0 0.0
    %2529 = vmatprep.subr.mxu0 0.0
    %2530 = vmatpush1.msra.mxu0 0.0
    %2531 = vmatprep.subr.mxu0 0.0
    %2532 = vmatpush1.msra.mxu0 0.0
    %2533 = vmatprep.subr.mxu0 0.0
    %2534 = vmatpush1.msra.mxu0 0.0
    %2535 = vmatprep.subr.mxu0 0.0
    %2536 = vmatpush1.msra.mxu0 0.0
    %2537 = vmatprep.subr.mxu0 0.0
    %2538 = vmatpush1.msra.mxu0 0.0
    %2539 = vmatprep.subr.mxu0 0.0
    %2540 = vmatpush1.msra.mxu0 0.0
    %2541 = vmatprep.subr.mxu0 0.0
    %2542 = vmatpush1.msra.mxu0 0.0
    %2543 = vmatprep.subr.mxu0 0.0
    %2544 = vmatpush1.msra.mxu0 0.0
    %2545 = vmatprep.subr.mxu0 0.0
    %2546 = vmatpush1.msra.mxu0 0.0
    %2547 = vmatprep.subr.mxu0 0.0
    %2548 = vmatpush1.msra.mxu0 0.0
    %2549 = vmatprep.subr.mxu0 0.0
    %2550 = vmatpush1.msra.mxu0 0.0
    %2551 = vmatprep.subr.mxu0 0.0
    %2552 = vmatpush1.msra.mxu0 0.0
    %2553 = vmatprep.subr.mxu0 0.0
    %2554 = vmatpush1.msra.mxu0 0.0
    %2555 = vmatprep.subr.mxu0 0.0
    %2556 = vmatpush1.msra.mxu0 0.0
    %2557 = vmatprep.subr.mxu0 0.0
    %2558 = vmatpush1.msra.mxu0 0.0
    %2559 = vmatprep.subr.mxu0 0.0
    %2560 = vmatpush1.msra.mxu0 0.0
    %2561 = vmatprep.subr.mxu0 0.0
    %2562 = vmatpush1.msra.mxu0 0.0
    %2563 = vmatprep.subr.mxu0 0.0
    %2564 = vmatpush1.msra.mxu0 0.0
    %2565 = vmatprep.subr.mxu0 0.0
    %2566 = vmatpush1.msra.mxu0 0.0
    %2567 = vmatprep.subr.mxu0 0.0
    %2568 = vmatpush1.msra.mxu0 0.0
    %2569 = vmatprep.subr.mxu0 0.0
    %2570 = vmatpush1.msra.mxu0 0.0
    %2571 = vmatprep.subr.mxu0 0.0
    %2572 = vmatpush1.msra.mxu0 0.0
    %2573 = vmatprep.subr.mxu0 0.0
    %2574 = vmatpush1.msra.mxu0 0.0
    %2575 = vmatprep.subr.mxu0 0.0
    %2576 = vmatpush1.msra.mxu0 0.0
    %2577 = vmatprep.subr.mxu0 0.0
    %2578 = vmatpush1.msra.mxu0 0.0
    %2579 = vmatprep.subr.mxu0 0.0
    %2580 = vmatpush1.msra.mxu0 0.0
    %2581 = vmatprep.mubr.f32.mxu0 0.0
    %2582 = vmatmul.mubr.f32.gmra.mrb[0].mxu0 %v2515
    %v2583 = vpop.f32.mrb[0].mxu0
    %v2584 = vadd.f32 0.0, %v2583
    %v2585 = vpop.f32.mrb[0].mxu0
    %2586 = vdwg.mxu0
    %v2587 = vadd.f32 %v2108, %v2584
    %v2588 = vxor.u32 %v2587, 2147483648
    %v2589 = vmul.f32 %v2588, 1.442695
    %v2590 = vpow.pop %v2589
    %v2591 = vadd.f32 %v2590, 1.0
    %v2592 = vrcp.pop %v2591
    %v2593 = vmul.f32 1.0, %v2592
    %v2594 = vtanh.pop %v2587
    %v2595 = vmul.f32 %v2593, %v2505
    %2597 = vrot.lane.b32.xlu0 %v2594, 32
    %v2598 = vpop.permute.xlu0 %2597
    %v2600 = vmul.f32 %v2593, %v2598
    %2602 = vrot.lane.b32.xlu0 %v2600, 32
    %v2603 = vpop.permute.xlu0 %2602
    %v2605 = vadd.f32 %v2595, %v2603
    %v2606 = vtanh.pop %v2605
    %2608 = vrot.lane.b32.xlu0 %v2606, 32
    %v2609 = vpop.permute.xlu0 %2608
    %v2611 = vmul.f32 %v2593, %v2609
    %2613 = vrot.lane.b32.xlu0 %v2611, 64
    %v2614 = vpop.permute.xlu0 %2613
    %v2615 = vsel %vm256, %v2614, 0
    %2617 = vmatprep.subr.mxu0 0.0
    %2618 = vmatpush1.msra.mxu0 %v2113
    %2619 = vmatprep.subr.mxu0 0.0
    %2620 = vmatpush1.msra.mxu0 %v2114
    %2621 = vmatprep.subr.mxu0 0.0
    %2622 = vmatpush1.msra.mxu0 %v2115
    %2623 = vmatprep.subr.mxu0 0.0
    %2624 = vmatpush1.msra.mxu0 %v2116
    %2625 = vmatprep.subr.mxu0 0.0
    %2626 = vmatpush1.msra.mxu0 0.0
    %2627 = vmatprep.subr.mxu0 0.0
    %2628 = vmatpush1.msra.mxu0 0.0
    %2629 = vmatprep.subr.mxu0 0.0
    %2630 = vmatpush1.msra.mxu0 0.0
    %2631 = vmatprep.subr.mxu0 0.0
    %2632 = vmatpush1.msra.mxu0 0.0
    %2633 = vmatprep.subr.mxu0 0.0
    %2634 = vmatpush1.msra.mxu0 0.0
    %2635 = vmatprep.subr.mxu0 0.0
    %2636 = vmatpush1.msra.mxu0 0.0
    %2637 = vmatprep.subr.mxu0 0.0
    %2638 = vmatpush1.msra.mxu0 0.0
    %2639 = vmatprep.subr.mxu0 0.0
    %2640 = vmatpush1.msra.mxu0 0.0
    %2641 = vmatprep.subr.mxu0 0.0
    %2642 = vmatpush1.msra.mxu0 0.0
    %2643 = vmatprep.subr.mxu0 0.0
    %2644 = vmatpush1.msra.mxu0 0.0
    %2645 = vmatprep.subr.mxu0 0.0
    %2646 = vmatpush1.msra.mxu0 0.0
    %2647 = vmatprep.subr.mxu0 0.0
    %2648 = vmatpush1.msra.mxu0 0.0
    %2649 = vmatprep.subr.mxu0 0.0
    %2650 = vmatpush1.msra.mxu0 0.0
    %2651 = vmatprep.subr.mxu0 0.0
    %2652 = vmatpush1.msra.mxu0 0.0
    %2653 = vmatprep.subr.mxu0 0.0
    %2654 = vmatpush1.msra.mxu0 0.0
    %2655 = vmatprep.subr.mxu0 0.0
    %2656 = vmatpush1.msra.mxu0 0.0
    %2657 = vmatprep.subr.mxu0 0.0
    %2658 = vmatpush1.msra.mxu0 0.0
    %2659 = vmatprep.subr.mxu0 0.0
    %2660 = vmatpush1.msra.mxu0 0.0
    %2661 = vmatprep.subr.mxu0 0.0
    %2662 = vmatpush1.msra.mxu0 0.0
    %2663 = vmatprep.subr.mxu0 0.0
    %2664 = vmatpush1.msra.mxu0 0.0
    %2665 = vmatprep.subr.mxu0 0.0
    %2666 = vmatpush1.msra.mxu0 0.0
    %2667 = vmatprep.subr.mxu0 0.0
    %2668 = vmatpush1.msra.mxu0 0.0
    %2669 = vmatprep.subr.mxu0 0.0
    %2670 = vmatpush1.msra.mxu0 0.0
    %2671 = vmatprep.subr.mxu0 0.0
    %2672 = vmatpush1.msra.mxu0 0.0
    %2673 = vmatprep.subr.mxu0 0.0
    %2674 = vmatpush1.msra.mxu0 0.0
    %2675 = vmatprep.subr.mxu0 0.0
    %2676 = vmatpush1.msra.mxu0 0.0
    %2677 = vmatprep.subr.mxu0 0.0
    %2678 = vmatpush1.msra.mxu0 0.0
    %2679 = vmatprep.subr.mxu0 0.0
    %2680 = vmatpush1.msra.mxu0 0.0
    %2681 = vmatprep.mubr.f32.mxu0 0.0
    %2682 = vmatmul.mubr.f32.gmra.mrb[0].mxu0 %v2615
    %v2683 = vpop.f32.mrb[0].mxu0
    %v2684 = vadd.f32 0.0, %v2683
    %v2685 = vpop.f32.mrb[0].mxu0
    %2686 = vdwg.mxu0
    %v2687 = vadd.f32 %v2109, %v2684
    %v2688 = vxor.u32 %v2687, 2147483648
    %v2689 = vmul.f32 %v2688, 1.442695
    %v2690 = vpow.pop %v2689
    %v2691 = vadd.f32 %v2690, 1.0
    %v2692 = vrcp.pop %v2691
    %v2693 = vmul.f32 1.0, %v2692
    %v2694 = vtanh.pop %v2687
    %v2695 = vmul.f32 %v2693, %v2605
    %2697 = vrot.lane.b32.xlu0 %v2694, 32
    %v2698 = vpop.permute.xlu0 %2697
    %v2700 = vmul.f32 %v2693, %v2698
    %2702 = vrot.lane.b32.xlu0 %v2700, 32
    %v2703 = vpop.permute.xlu0 %2702
    %v2705 = vadd.f32 %v2695, %v2703
    %v2706 = vtanh.pop %v2705
    %2708 = vrot.lane.b32.xlu0 %v2706, 32
    %v2709 = vpop.permute.xlu0 %2708
    %v2711 = vmul.f32 %v2693, %v2709
    %2713 = vrot.lane.b32.xlu0 %v2711, 64
    %v2714 = vpop.permute.xlu0 %2713
    %v2715 = vsel %vm256, %v2714, 0
    %2717 = vmatprep.subr.mxu0 0.0
    %2718 = vmatpush1.msra.mxu0 %v2113
    %2719 = vmatprep.subr.mxu0 0.0
    %2720 = vmatpush1.msra.mxu0 %v2114
    %2721 = vmatprep.subr.mxu0 0.0
    %2722 = vmatpush1.msra.mxu0 %v2115
    %2723 = vmatprep.subr.mxu0 0.0
    %2724 = vmatpush1.msra.mxu0 %v2116
    %2725 = vmatprep.subr.mxu0 0.0
    %2726 = vmatpush1.msra.mxu0 0.0
    %2727 = vmatprep.subr.mxu0 0.0
    %2728 = vmatpush1.msra.mxu0 0.0
    %2729 = vmatprep.subr.mxu0 0.0
    %2730 = vmatpush1.msra.mxu0 0.0
    %2731 = vmatprep.subr.mxu0 0.0
    %2732 = vmatpush1.msra.mxu0 0.0
    %2733 = vmatprep.subr.mxu0 0.0
    %2734 = vmatpush1.msra.mxu0 0.0
    %2735 = vmatprep.subr.mxu0 0.0
    %2736 = vmatpush1.msra.mxu0 0.0
    %2737 = vmatprep.subr.mxu0 0.0
    %2738 = vmatpush1.msra.mxu0 0.0
    %2739 = vmatprep.subr.mxu0 0.0
    %2740 = vmatpush1.msra.mxu0 0.0
    %2741 = vmatprep.subr.mxu0 0.0
    %2742 = vmatpush1.msra.mxu0 0.0
    %2743 = vmatprep.subr.mxu0 0.0
    %2744 = vmatpush1.msra.mxu0 0.0
    %2745 = vmatprep.subr.mxu0 0.0
    %2746 = vmatpush1.msra.mxu0 0.0
    %2747 = vmatprep.subr.mxu0 0.0
    %2748 = vmatpush1.msra.mxu0 0.0
    %2749 = vmatprep.subr.mxu0 0.0
    %2750 = vmatpush1.msra.mxu0 0.0
    %2751 = vmatprep.subr.mxu0 0.0
    %2752 = vmatpush1.msra.mxu0 0.0
    %2753 = vmatprep.subr.mxu0 0.0
    %2754 = vmatpush1.msra.mxu0 0.0
    %2755 = vmatprep.subr.mxu0 0.0
    %2756 = vmatpush1.msra.mxu0 0.0
    %2757 = vmatprep.subr.mxu0 0.0
    %2758 = vmatpush1.msra.mxu0 0.0
    %2759 = vmatprep.subr.mxu0 0.0
    %2760 = vmatpush1.msra.mxu0 0.0
    %2761 = vmatprep.subr.mxu0 0.0
    %2762 = vmatpush1.msra.mxu0 0.0
    %2763 = vmatprep.subr.mxu0 0.0
    %2764 = vmatpush1.msra.mxu0 0.0
    %2765 = vmatprep.subr.mxu0 0.0
    %2766 = vmatpush1.msra.mxu0 0.0
    %2767 = vmatprep.subr.mxu0 0.0
    %2768 = vmatpush1.msra.mxu0 0.0
    %2769 = vmatprep.subr.mxu0 0.0
    %2770 = vmatpush1.msra.mxu0 0.0
    %2771 = vmatprep.subr.mxu0 0.0
    %2772 = vmatpush1.msra.mxu0 0.0
    %2773 = vmatprep.subr.mxu0 0.0
    %2774 = vmatpush1.msra.mxu0 0.0
    %2775 = vmatprep.subr.mxu0 0.0
    %2776 = vmatpush1.msra.mxu0 0.0
    %2777 = vmatprep.subr.mxu0 0.0
    %2778 = vmatpush1.msra.mxu0 0.0
    %2779 = vmatprep.subr.mxu0 0.0
    %2780 = vmatpush1.msra.mxu0 0.0
    %2781 = vmatprep.mubr.f32.mxu0 0.0
    %2782 = vmatmul.mubr.f32.gmra.mrb[0].mxu0 %v2715
    %v2783 = vpop.f32.mrb[0].mxu0
    %v2784 = vadd.f32 0.0, %v2783
    %v2785 = vpop.f32.mrb[0].mxu0
    %2786 = vdwg.mxu0
    %v2787 = vadd.f32 %v2110, %v2784
    %v2788 = vxor.u32 %v2787, 2147483648
    %v2789 = vmul.f32 %v2788, 1.442695
    %v2790 = vpow.pop %v2789
    %v2791 = vadd.f32 %v2790, 1.0
    %v2792 = vrcp.pop %v2791
    %v2793 = vmul.f32 1.0, %v2792
    %v2794 = vtanh.pop %v2787
    %v2795 = vmul.f32 %v2793, %v2705
    %2797 = vrot.lane.b32.xlu0 %v2794, 32
    %v2798 = vpop.permute.xlu0 %2797
    %v2800 = vmul.f32 %v2793, %v2798
    %2802 = vrot.lane.b32.xlu0 %v2800, 32
    %v2803 = vpop.permute.xlu0 %2802
    %v2805 = vadd.f32 %v2795, %v2803
    %v2806 = vtanh.pop %v2805
    %2808 = vrot.lane.b32.xlu0 %v2806, 32
    %v2809 = vpop.permute.xlu0 %2808
    %v2811 = vmul.f32 %v2793, %v2809
    %2813 = vrot.lane.b32.xlu0 %v2811, 64
    %v2814 = vpop.permute.xlu0 %2813
    %v2815 = vsel %vm256, %v2814, 0
    %2817 = vmatprep.subr.mxu0 0.0
    %2818 = vmatpush1.msra.mxu0 %v2113
    %2819 = vmatprep.subr.mxu0 0.0
    %2820 = vmatpush1.msra.mxu0 %v2114
    %2821 = vmatprep.subr.mxu0 0.0
    %2822 = vmatpush1.msra.mxu0 %v2115
    %2823 = vmatprep.subr.mxu0 0.0
    %2824 = vmatpush1.msra.mxu0 %v2116
    %2825 = vmatprep.subr.mxu0 0.0
    %2826 = vmatpush1.msra.mxu0 0.0
    %2827 = vmatprep.subr.mxu0 0.0
    %2828 = vmatpush1.msra.mxu0 0.0
    %2829 = vmatprep.subr.mxu0 0.0
    %2830 = vmatpush1.msra.mxu0 0.0
    %2831 = vmatprep.subr.mxu0 0.0
    %2832 = vmatpush1.msra.mxu0 0.0
    %2833 = vmatprep.subr.mxu0 0.0
    %2834 = vmatpush1.msra.mxu0 0.0
    %2835 = vmatprep.subr.mxu0 0.0
    %2836 = vmatpush1.msra.mxu0 0.0
    %2837 = vmatprep.subr.mxu0 0.0
    %2838 = vmatpush1.msra.mxu0 0.0
    %2839 = vmatprep.subr.mxu0 0.0
    %2840 = vmatpush1.msra.mxu0 0.0
    %2841 = vmatprep.subr.mxu0 0.0
    %2842 = vmatpush1.msra.mxu0 0.0
    %2843 = vmatprep.subr.mxu0 0.0
    %2844 = vmatpush1.msra.mxu0 0.0
    %2845 = vmatprep.subr.mxu0 0.0
    %2846 = vmatpush1.msra.mxu0 0.0
    %2847 = vmatprep.subr.mxu0 0.0
    %2848 = vmatpush1.msra.mxu0 0.0
    %2849 = vmatprep.subr.mxu0 0.0
    %2850 = vmatpush1.msra.mxu0 0.0
    %2851 = vmatprep.subr.mxu0 0.0
    %2852 = vmatpush1.msra.mxu0 0.0
    %2853 = vmatprep.subr.mxu0 0.0
    %2854 = vmatpush1.msra.mxu0 0.0
    %2855 = vmatprep.subr.mxu0 0.0
    %2856 = vmatpush1.msra.mxu0 0.0
    %2857 = vmatprep.subr.mxu0 0.0
    %2858 = vmatpush1.msra.mxu0 0.0
    %2859 = vmatprep.subr.mxu0 0.0
    %2860 = vmatpush1.msra.mxu0 0.0
    %2861 = vmatprep.subr.mxu0 0.0
    %2862 = vmatpush1.msra.mxu0 0.0
    %2863 = vmatprep.subr.mxu0 0.0
    %2864 = vmatpush1.msra.mxu0 0.0
    %2865 = vmatprep.subr.mxu0 0.0
    %2866 = vmatpush1.msra.mxu0 0.0
    %2867 = vmatprep.subr.mxu0 0.0
    %2868 = vmatpush1.msra.mxu0 0.0
    %2869 = vmatprep.subr.mxu0 0.0
    %2870 = vmatpush1.msra.mxu0 0.0
    %2871 = vmatprep.subr.mxu0 0.0
    %2872 = vmatpush1.msra.mxu0 0.0
    %2873 = vmatprep.subr.mxu0 0.0
    %2874 = vmatpush1.msra.mxu0 0.0
    %2875 = vmatprep.subr.mxu0 0.0
    %2876 = vmatpush1.msra.mxu0 0.0
    %2877 = vmatprep.subr.mxu0 0.0
    %2878 = vmatpush1.msra.mxu0 0.0
    %2879 = vmatprep.subr.mxu0 0.0
    %2880 = vmatpush1.msra.mxu0 0.0
    %2881 = vmatprep.mubr.f32.mxu0 0.0
    %2882 = vmatmul.mubr.f32.gmra.mrb[0].mxu0 %v2815
    %v2883 = vpop.f32.mrb[0].mxu0
    %v2884 = vadd.f32 0.0, %v2883
    %v2885 = vpop.f32.mrb[0].mxu0
    %2886 = vdwg.mxu0
    %v2887 = vadd.f32 %v2111, %v2884
    %v2888 = vxor.u32 %v2887, 2147483648
    %v2889 = vmul.f32 %v2888, 1.442695
    %v2890 = vpow.pop %v2889
    %v2891 = vadd.f32 %v2890, 1.0
    %v2892 = vrcp.pop %v2891
    %v2893 = vmul.f32 1.0, %v2892
    %v2894 = vtanh.pop %v2887
    %v2895 = vmul.f32 %v2893, %v2805
    %2897 = vrot.lane.b32.xlu0 %v2894, 32
    %v2898 = vpop.permute.xlu0 %2897
    %v2900 = vmul.f32 %v2893, %v2898
    %2902 = vrot.lane.b32.xlu0 %v2900, 32
    %v2903 = vpop.permute.xlu0 %2902
    %v2905 = vadd.f32 %v2895, %v2903
    %v2906 = vtanh.pop %v2905
    %2908 = vrot.lane.b32.xlu0 %v2906, 32
    %v2909 = vpop.permute.xlu0 %2908
    %v2911 = vmul.f32 %v2893, %v2909
    %v2912 = vld [vmem:[#allocation6] sm:$0xff]
    %v2913 = vld [vmem:[#allocation6 + $0x8] sm:$0xff]
    %v2914 = vld [vmem:[#allocation6 + $0x10] sm:$0xff]
    %v2915 = vld [vmem:[#allocation6 + $0x18] sm:$0xff]
    %2916 = vmatprep.subr.mxu0 0.0
    %2917 = vmatpush1.msra.mxu0 %v2912
    %2918 = vmatprep.subr.mxu0 0.0
    %2919 = vmatpush1.msra.mxu0 %v2913
    %2920 = vmatprep.subr.mxu0 0.0
    %2921 = vmatpush1.msra.mxu0 %v2914
    %2922 = vmatprep.subr.mxu0 0.0
    %2923 = vmatpush1.msra.mxu0 %v2915
    %2924 = vmatprep.subr.mxu0 0.0
    %2925 = vmatpush1.msra.mxu0 0.0
    %2926 = vmatprep.subr.mxu0 0.0
    %2927 = vmatpush1.msra.mxu0 0.0
    %2928 = vmatprep.subr.mxu0 0.0
    %2929 = vmatpush1.msra.mxu0 0.0
    %2930 = vmatprep.subr.mxu0 0.0
    %2931 = vmatpush1.msra.mxu0 0.0
    %2932 = vmatprep.subr.mxu0 0.0
    %2933 = vmatpush1.msra.mxu0 0.0
    %2934 = vmatprep.subr.mxu0 0.0
    %2935 = vmatpush1.msra.mxu0 0.0
    %2936 = vmatprep.subr.mxu0 0.0
    %2937 = vmatpush1.msra.mxu0 0.0
    %2938 = vmatprep.subr.mxu0 0.0
    %2939 = vmatpush1.msra.mxu0 0.0
    %2940 = vmatprep.subr.mxu0 0.0
    %2941 = vmatpush1.msra.mxu0 0.0
    %2942 = vmatprep.subr.mxu0 0.0
    %2943 = vmatpush1.msra.mxu0 0.0
    %2944 = vmatprep.subr.mxu0 0.0
    %2945 = vmatpush1.msra.mxu0 0.0
    %2946 = vmatprep.subr.mxu0 0.0
    %2947 = vmatpush1.msra.mxu0 0.0
    %2948 = vmatprep.subr.mxu0 0.0
    %2949 = vmatpush1.msra.mxu0 0.0
    %2950 = vmatprep.subr.mxu0 0.0
    %2951 = vmatpush1.msra.mxu0 0.0
    %2952 = vmatprep.subr.mxu0 0.0
    %2953 = vmatpush1.msra.mxu0 0.0
    %2954 = vmatprep.subr.mxu0 0.0
    %2955 = vmatpush1.msra.mxu0 0.0
    %2956 = vmatprep.subr.mxu0 0.0
    %2957 = vmatpush1.msra.mxu0 0.0
    %2958 = vmatprep.subr.mxu0 0.0
    %2959 = vmatpush1.msra.mxu0 0.0
    %2960 = vmatprep.subr.mxu0 0.0
    %2961 = vmatpush1.msra.mxu0 0.0
    %2962 = vmatprep.subr.mxu0 0.0
    %2963 = vmatpush1.msra.mxu0 0.0
    %2964 = vmatprep.subr.mxu0 0.0
    %2965 = vmatpush1.msra.mxu0 0.0
    %2966 = vmatprep.subr.mxu0 0.0
    %2967 = vmatpush1.msra.mxu0 0.0
    %2968 = vmatprep.subr.mxu0 0.0
    %2969 = vmatpush1.msra.mxu0 0.0
    %2970 = vmatprep.subr.mxu0 0.0
    %2971 = vmatpush1.msra.mxu0 0.0
    %2972 = vmatprep.subr.mxu0 0.0
    %2973 = vmatpush1.msra.mxu0 0.0
    %2974 = vmatprep.subr.mxu0 0.0
    %2975 = vmatpush1.msra.mxu0 0.0
    %2976 = vmatprep.subr.mxu0 0.0
    %2977 = vmatpush1.msra.mxu0 0.0
    %2978 = vmatprep.subr.mxu0 0.0
    %2979 = vmatpush1.msra.mxu0 0.0
    %2980 = vmatprep.mubr.f32.mxu0 0.0
    %2981 = vmatmul.mubr.f32.gmra.mrb[0].mxu0 %v258
    %v2982 = vpop.f32.mrb[0].mxu0
    %v2983 = vadd.f32 0.0, %v2982
    %v2984 = vpop.f32.mrb[0].mxu0
    %2985 = vdwg.mxu0
    %v2986 = vadd.f32 %v2112, %v2983
    %v2987 = vxor.u32 %v2986, 2147483648
    %v2988 = vmul.f32 %v2987, 1.442695
    %v2989 = vpow.pop %v2988
    %v2990 = vadd.f32 %v2989, 1.0
    %v2991 = vrcp.pop %v2990
    %v2992 = vmul.f32 1.0, %v2991
    %v2993 = vtanh.pop %v2986
    %v2994 = vmul.f32 %v2992, 0.0
    %2996 = vrot.lane.b32.xlu0 %v2993, 32
    %v2997 = vpop.permute.xlu0 %2996
    %v2999 = vmul.f32 %v2992, %v2997
    %3001 = vrot.lane.b32.xlu0 %v2999, 32
    %v3002 = vpop.permute.xlu0 %3001
    %v3004 = vadd.f32 %v2994, %v3002
    %v3005 = vtanh.pop %v3004
    %3007 = vrot.lane.b32.xlu0 %v3005, 32
    %v3008 = vpop.permute.xlu0 %3007
    %v3010 = vmul.f32 %v2992, %v3008
    %v3011 = vld [vmem:[%s9] sm:$0xff]
    %v3012 = vld [vmem:[%s9 + $0x8] sm:$0xff]
    %v3013 = vld [vmem:[%s9 + $0x10] sm:$0xff]
    %v3014 = vld [vmem:[%s9 + $0x18] sm:$0xff]
    %v3015 = vld [vmem:[%s9 + $0x20] sm:$0xff]
    %v3016 = vld [vmem:[%s9 + $0x28] sm:$0xff]
    %v3017 = vld [vmem:[%s9 + $0x30] sm:$0xff]
    %v3018 = vld [vmem:[%s9 + $0x38] sm:$0xff]
    %3020 = vrot.lane.b32.xlu0 %v3010, 64
    %v3021 = vpop.permute.xlu0 %3020
    %v3022 = vsel %vm256, %v3021, 0
    %3024 = vmatprep.subr.mxu0 0.0
    %3025 = vmatpush1.msra.mxu0 %v3015
    %3026 = vmatprep.subr.mxu0 0.0
    %3027 = vmatpush1.msra.mxu0 %v3016
    %3028 = vmatprep.subr.mxu0 0.0
    %3029 = vmatpush1.msra.mxu0 %v3017
    %3030 = vmatprep.subr.mxu0 0.0
    %3031 = vmatpush1.msra.mxu0 %v3018
    %3032 = vmatprep.subr.mxu0 0.0
    %3033 = vmatpush1.msra.mxu0 0.0
    %3034 = vmatprep.subr.mxu0 0.0
    %3035 = vmatpush1.msra.mxu0 0.0
    %3036 = vmatprep.subr.mxu0 0.0
    %3037 = vmatpush1.msra.mxu0 0.0
    %3038 = vmatprep.subr.mxu0 0.0
    %3039 = vmatpush1.msra.mxu0 0.0
    %3040 = vmatprep.subr.mxu0 0.0
    %3041 = vmatpush1.msra.mxu0 0.0
    %3042 = vmatprep.subr.mxu0 0.0
    %3043 = vmatpush1.msra.mxu0 0.0
    %3044 = vmatprep.subr.mxu0 0.0
    %3045 = vmatpush1.msra.mxu0 0.0
    %3046 = vmatprep.subr.mxu0 0.0
    %3047 = vmatpush1.msra.mxu0 0.0
    %3048 = vmatprep.subr.mxu0 0.0
    %3049 = vmatpush1.msra.mxu0 0.0
    %3050 = vmatprep.subr.mxu0 0.0
    %3051 = vmatpush1.msra.mxu0 0.0
    %3052 = vmatprep.subr.mxu0 0.0
    %3053 = vmatpush1.msra.mxu0 0.0
    %3054 = vmatprep.subr.mxu0 0.0
    %3055 = vmatpush1.msra.mxu0 0.0
    %3056 = vmatprep.subr.mxu0 0.0
    %3057 = vmatpush1.msra.mxu0 0.0
    %3058 = vmatprep.subr.mxu0 0.0
    %3059 = vmatpush1.msra.mxu0 0.0
    %3060 = vmatprep.subr.mxu0 0.0
    %3061 = vmatpush1.msra.mxu0 0.0
    %3062 = vmatprep.subr.mxu0 0.0
    %3063 = vmatpush1.msra.mxu0 0.0
    %3064 = vmatprep.subr.mxu0 0.0
    %3065 = vmatpush1.msra.mxu0 0.0
    %3066 = vmatprep.subr.mxu0 0.0
    %3067 = vmatpush1.msra.mxu0 0.0
    %3068 = vmatprep.subr.mxu0 0.0
    %3069 = vmatpush1.msra.mxu0 0.0
    %3070 = vmatprep.subr.mxu0 0.0
    %3071 = vmatpush1.msra.mxu0 0.0
    %3072 = vmatprep.subr.mxu0 0.0
    %3073 = vmatpush1.msra.mxu0 0.0
    %3074 = vmatprep.subr.mxu0 0.0
    %3075 = vmatpush1.msra.mxu0 0.0
    %3076 = vmatprep.subr.mxu0 0.0
    %3077 = vmatpush1.msra.mxu0 0.0
    %3078 = vmatprep.subr.mxu0 0.0
    %3079 = vmatpush1.msra.mxu0 0.0
    %3080 = vmatprep.subr.mxu0 0.0
    %3081 = vmatpush1.msra.mxu0 0.0
    %3082 = vmatprep.subr.mxu0 0.0
    %3083 = vmatpush1.msra.mxu0 0.0
    %3084 = vmatprep.subr.mxu0 0.0
    %3085 = vmatpush1.msra.mxu0 0.0
    %3086 = vmatprep.subr.mxu0 0.0
    %3087 = vmatpush1.msra.mxu0 0.0
    %3088 = vmatprep.mubr.f32.mxu0 0.0
    %3089 = vmatmul.mubr.f32.gmra.mrb[0].mxu0 %v3022
    %v3090 = vpop.f32.mrb[0].mxu0
    %v3091 = vadd.f32 0.0, %v3090
    %v3092 = vpop.f32.mrb[0].mxu0
    %3093 = vdwg.mxu0
    %3095 = vrot.lane.b32.xlu0 %v2911, 64
    %v3096 = vpop.permute.xlu0 %3095
    %v3097 = vsel %vm256, %v3096, 0
    %3099 = vmatprep.subr.mxu0 0.0
    %3100 = vmatpush1.msra.mxu0 %v3011
    %3101 = vmatprep.subr.mxu0 0.0
    %3102 = vmatpush1.msra.mxu0 %v3012
    %3103 = vmatprep.subr.mxu0 0.0
    %3104 = vmatpush1.msra.mxu0 %v3013
    %3105 = vmatprep.subr.mxu0 0.0
    %3106 = vmatpush1.msra.mxu0 %v3014
    %3107 = vmatprep.subr.mxu0 0.0
    %3108 = vmatpush1.msra.mxu0 0.0
    %3109 = vmatprep.subr.mxu0 0.0
    %3110 = vmatpush1.msra.mxu0 0.0
    %3111 = vmatprep.subr.mxu0 0.0
    %3112 = vmatpush1.msra.mxu0 0.0
    %3113 = vmatprep.subr.mxu0 0.0
    %3114 = vmatpush1.msra.mxu0 0.0
    %3115 = vmatprep.subr.mxu0 0.0
    %3116 = vmatpush1.msra.mxu0 0.0
    %3117 = vmatprep.subr.mxu0 0.0
    %3118 = vmatpush1.msra.mxu0 0.0
    %3119 = vmatprep.subr.mxu0 0.0
    %3120 = vmatpush1.msra.mxu0 0.0
    %3121 = vmatprep.subr.mxu0 0.0
    %3122 = vmatpush1.msra.mxu0 0.0
    %3123 = vmatprep.subr.mxu0 0.0
    %3124 = vmatpush1.msra.mxu0 0.0
    %3125 = vmatprep.subr.mxu0 0.0
    %3126 = vmatpush1.msra.mxu0 0.0
    %3127 = vmatprep.subr.mxu0 0.0
    %3128 = vmatpush1.msra.mxu0 0.0
    %3129 = vmatprep.subr.mxu0 0.0
    %3130 = vmatpush1.msra.mxu0 0.0
    %3131 = vmatprep.subr.mxu0 0.0
    %3132 = vmatpush1.msra.mxu0 0.0
    %3133 = vmatprep.subr.mxu0 0.0
    %3134 = vmatpush1.msra.mxu0 0.0
    %3135 = vmatprep.subr.mxu0 0.0
    %3136 = vmatpush1.msra.mxu0 0.0
    %3137 = vmatprep.subr.mxu0 0.0
    %3138 = vmatpush1.msra.mxu0 0.0
    %3139 = vmatprep.subr.mxu0 0.0
    %3140 = vmatpush1.msra.mxu0 0.0
    %3141 = vmatprep.subr.mxu0 0.0
    %3142 = vmatpush1.msra.mxu0 0.0
    %3143 = vmatprep.subr.mxu0 0.0
    %3144 = vmatpush1.msra.mxu0 0.0
    %3145 = vmatprep.subr.mxu0 0.0
    %3146 = vmatpush1.msra.mxu0 0.0
    %3147 = vmatprep.subr.mxu0 0.0
    %3148 = vmatpush1.msra.mxu0 0.0
    %3149 = vmatprep.subr.mxu0 0.0
    %3150 = vmatpush1.msra.mxu0 0.0
    %3151 = vmatprep.subr.mxu0 0.0
    %3152 = vmatpush1.msra.mxu0 0.0
    %3153 = vmatprep.subr.mxu0 0.0
    %3154 = vmatpush1.msra.mxu0 0.0
    %3155 = vmatprep.subr.mxu0 0.0
    %3156 = vmatpush1.msra.mxu0 0.0
    %3157 = vmatprep.subr.mxu0 0.0
    %3158 = vmatpush1.msra.mxu0 0.0
    %3159 = vmatprep.subr.mxu0 0.0
    %3160 = vmatpush1.msra.mxu0 0.0
    %3161 = vmatprep.subr.mxu0 0.0
    %3162 = vmatpush1.msra.mxu0 0.0
    %3163 = vmatprep.mubr.f32.mxu0 0.0
    %3164 = vmatmul.mubr.f32.gmra.mrb[0].mxu0 %v3097
    %v3165 = vpop.f32.mrb[0].mxu0
    %v3166 = vadd.f32 %v3091, %v3165
    %v3167 = vpop.f32.mrb[0].mxu0
    %3168 = vdwg.mxu0
    %v3169 = vld [vmem:[%s10] sm:$0x1]
    %v3171 = vlaneseq
    %v3172 = vshrl.u32 %v3171, 7
    %v3173 = vsub.s32 0, %v3172
    %v3174 = vrot.slane %v3169, %v3173
    %v3176 = vadd.f32 %v3166, %v3174
    %vm3177 = vcmask 80896
    %3178 = vst.msk [vmem:[%s11] sm:$0xff] %vm3177, %v3176
    // Predicated region
    $region58: #{blstm_forward.1} parent=1 // pred_check
      _
    $region59: #{blstm_forward.1} parent=1 // pred_check_branch
      %3180 = sbr.rel (0) target = $region61
    $region60: #{blstm_forward.1} parent=1 // pred_region
      _
    $region61: #{blstm_forward.1} parent=1 // pred_fallthru
      _
    // Predicated region
    $region62: #{blstm_forward.1} parent=1 // pred_check
      _
    $region63: #{blstm_forward.1} parent=1 // pred_check_branch
      %3182 = sbr.rel (0) target = $region65
    $region64: #{blstm_forward.1} parent=1 // pred_region
      _
    $region65: #{blstm_forward.1} parent=1 // pred_fallthru
      _
    %3183 = vsyncpa [#allocation3], 1
    %3184 = vsyncpa [#allocation5], 1

</llo_original>
